<compile_context>
chip_gen: v7x
topology: tpu7x:2x2x1
jax: 0.10.0
libtpu: 0.0.40
codegen_flags: <defaults>
</compile_context>

<pallas_src>
import jax
import jax.numpy as jnp
from jax import lax
from jax.experimental import pallas as pl
from jax.experimental.pallas import tpu as pltpu


def _round_up(x: int, m: int) -> int:
    return ((x + m - 1) // m) * m


# ----------------------------- Pallas kernel --------------------------------

def _make_mlp_phi_kernel(n_layers: int, n_max: int, d_outs, eps: float):
    """Kernel ref order: (W, lens, W_T[0..L-1], packed_params, out).

    All activations live as (features, rows): features on sublanes, the tile_n rows on
    the 128-lane axis, so every elementwise op and the final store are lane-dense.
    """

    def kernel(w_ref, lens_ref, *rest):
        wt_refs = rest[:n_layers]           # each (d_out_l, d_in_l)
        pvec_ref = rest[n_layers]           # (d_max, 3 * n_layers): [b, gamma, beta] per layer
        out_ref = rest[n_layers + 1]        # (D_pe, tile_n)

        lens = lens_ref[...]                # (1, tile_n) int32, lane-major
        pvec = pvec_ref[...]                # (d_max, 3*n_layers) f32

        def mlp(h):                         # h: (M, tile_n) f32
            for l in range(n_layers):
                d_out = d_outs[l]
                wt = wt_refs[l][...]                                   # (d_out, d_in)
                b = pvec[:d_out, 3 * l + 0: 3 * l + 1]                 # (d_out, 1)
                g = pvec[:d_out, 3 * l + 1: 3 * l + 2]
                beta = pvec[:d_out, 3 * l + 2: 3 * l + 3]
                # Linear (features-on-sublanes, rows-on-lanes output), f32 MXU accumulate.
                z = jnp.dot(wt, h, preferred_element_type=jnp.float32) + b
                # LayerNorm over the feature (sublane) axis.
                mu = jnp.mean(z, axis=0, keepdims=True)                # (1, tile_n)
                var = jnp.mean((z - mu) ** 2, axis=0, keepdims=True)
                z = (z - mu) * lax.rsqrt(var + eps)
                z = z * g + beta
                # ReLU; Dropout is identity in eval mode.
                h = jnp.maximum(z, 0.0)
            return h                                                   # (D_pe, tile_n)

        # Per-slot MLP + length mask.  Slots are independent, so the scheduler can
        # overlap slot j+1's matmul with slot j's LayerNorm; only the final sum couples
        # them, and that is a pairwise tree (no length-n_max serial dependency chain).
        outs = []
        for j in range(n_max):
            mj = (lens > j).astype(jnp.float32)     # (1, tile_n): one cheap cmp per slot
            outs.append(mlp(w_ref[j]) * mj)         # w_ref[j]: free static slab index
        while len(outs) > 1:
            nxt = [outs[i] + outs[i + 1] for i in range(0, len(outs) - 1, 2)]
            if len(outs) % 2:
                nxt.append(outs[-1])
            outs = nxt

        out_ref[...] = outs[0].astype(out_ref.dtype)   # lane-dense (D_pe, tile_n) store

    return kernel


# ------------------------------ wrapper --------------------------------------

def mlp_phi_pallas(W_t, lens, params, *, tile_n: int = 256, eps: float = 1e-5,
                   out_dtype=jnp.float32):
    """W_t: [n_max, M, N_sum] (slot-major, feature, row), lens: [N_sum] int32,
    params: list of (W[d_in,d_out], b, gamma, beta)."""
    n_layers = len(params)
    n_max, M, N_sum = W_t.shape
    d_outs = tuple(int(p[0].shape[1]) for p in params)
    D = d_outs[-1]
    d_max = max(d_outs)

    if tile_n % 128 != 0:
        raise ValueError("tile_n must be a multiple of 128")

    # Tile-size policy: keep at least two grid steps when the row count allows (v7x has
    # two TensorCores), never below 128 (lane-dense stores), biggest tile otherwise.
    # With the rows-on-lanes layout the per-step working set is tiny, so 256 is safe on
    # all generations (lower tile_n explicitly on v5e only if a bundle dump shows spills).
    N_pad128 = _round_up(N_sum, 128)
    if N_pad128 >= 256:
        tile_n = min(tile_n, max(128, (N_pad128 // 2) // 128 * 128))
    else:
        tile_n = 128
    N_pad = _round_up(N_sum, tile_n)

    if N_pad != N_sum:
        W_t = jnp.pad(W_t, ((0, 0), (0, 0), (0, N_pad - N_sum)))
        lens = jnp.pad(lens, (0, N_pad - N_sum))       # padded rows: length 0 -> masked out
    W_t = W_t.astype(jnp.float32)
    lens2 = lens.astype(jnp.int32).reshape(1, N_pad)   # lane-major length row

    # Transposed matmul weights (d_out, d_in) and packed per-layer vectors.
    wt_list = [p[0].astype(jnp.float32).T for p in params]
    pvec = jnp.zeros((d_max, 3 * n_layers), jnp.float32)
    for l, (_, b, g, beta) in enumerate(params):
        d = d_outs[l]
        pvec = pvec.at[:d, 3 * l + 0].set(b.astype(jnp.float32))
        pvec = pvec.at[:d, 3 * l + 1].set(g.astype(jnp.float32))
        pvec = pvec.at[:d, 3 * l + 2].set(beta.astype(jnp.float32))

    grid = (N_pad // tile_n,)

    def _full_block(shape):
        nd = len(shape)
        return pl.BlockSpec(shape, lambda i, _nd=nd: (0,) * _nd)

    in_specs = [
        # W, slot-major: per grid step one (n_max, M, tile_n) slab; M=8 = one f32
        # sublane tile, so each slot slab is dense in VMEM (no 16x lane padding).
        pl.BlockSpec((n_max, M, tile_n), lambda i: (0, 0, i)),
        # Per-row graph length, lane-major (8 KiB/buffer instead of 128 KiB).
        pl.BlockSpec((1, tile_n), lambda i: (0, i)),
    ]
    in_specs += [_full_block(w.shape) for w in wt_list]
    in_specs.append(_full_block(pvec.shape))

    # VMEM budget (lane/sublane padded), with headroom; footprint is well under 1 MiB.
    w_block = n_max * M * tile_n * 4
    out_block = _round_up(D, 8) * tile_n * 4
    lens_block = 8 * tile_n * 4
    param_block = (sum(_round_up(w.shape[0], 8) * _round_up(w.shape[1], 128) * 4
                       for w in wt_list)
                   + _round_up(d_max, 8) * _round_up(3 * n_layers, 128) * 4)
    step_bytes = 2 * (w_block + out_block + lens_block + param_block)   # double-buffered
    vmem_limit = int(min(32 << 20, max(8 << 20, 4 * step_bytes)))

    # Cost estimate for the surrounding XLA schedule (matmul + elementwise flops,
    # one rsqrt per (row, slot, layer), and the real HBM traffic).
    mm_flops = 2 * N_pad * n_max * sum(int(w.shape[0]) * int(w.shape[1]) for w in wt_list)
    ew_flops = 10 * N_pad * n_max * sum(d_outs)
    bytes_accessed = int(W_t.size * 4 + lens2.size * 4 + D * N_pad * 4
                         + sum(w.size for w in wt_list) * 4 + pvec.size * 4)
    cost = pl.CostEstimate(flops=int(mm_flops + ew_flops),
                           transcendentals=int(N_pad * n_max * n_layers),
                           bytes_accessed=bytes_accessed)

    out_t = pl.pallas_call(
        _make_mlp_phi_kernel(n_layers, n_max, d_outs, eps),
        out_shape=jax.ShapeDtypeStruct((D, N_pad), out_dtype),
        grid=grid,
        in_specs=in_specs,
        out_specs=pl.BlockSpec((D, tile_n), lambda i: (0, i)),
        compiler_params=pltpu.CompilerParams(
            dimension_semantics=("parallel",),
            vmem_limit_bytes=vmem_limit),
        cost_estimate=cost,
    )(W_t, lens2, *wt_list, pvec)

    return out_t[:, :N_sum].T                          # (N_sum, D_pe)


# ------------------------------ JAX glue -------------------------------------

def mlp_phi_forward(W_list, edge_index, params, *, tile_n: int = 256):
    """Pad + concat into slot-major (n_max, M, N_sum) layout, then run the fused kernel.
    edge_index is unused by this stage (as in the reference)."""
    del edge_index
    n_max = max(int(w.shape[0]) for w in W_list)
    cols, lens = [], []
    for w in W_list:
        n_i = int(w.shape[0])
        w_t = jnp.transpose(w, (1, 2, 0))                           # (slots, M, rows)
        cols.append(jnp.pad(w_t, ((0, n_max - n_i), (0, 0), (0, 0))))
        lens.append(jnp.full((n_i,), n_i, jnp.int32))
    W_t = jnp.concatenate(cols, axis=2)                             # (n_max, M, N_sum)
    lens = jnp.concatenate(lens, axis=0)                            # (N_sum,)
    return mlp_phi_pallas(W_t, lens, params, tile_n=tile_n)


def mlp_phi_reference(W_list, params, *, eps: float = 1e-5):
    """Pure-JAX f32 reference for validation."""
    n_max = max(int(w.shape[0]) for w in W_list)
    hs, masks = [], []
    for w in W_list:
        n_i = int(w.shape[0])
        hs.append(jnp.pad(w, ((0, 0), (0, n_max - n_i), (0, 0))))
        masks.append(jnp.broadcast_to((jnp.arange(n_max) < n_i)[None, :], (n_i, n_max)))
    h = jnp.concatenate(hs, axis=0).astype(jnp.float32)             # (N_sum, n_max, M)
    mask = jnp.concatenate(masks, axis=0).astype(jnp.float32)       # (N_sum, n_max)
    for (Wl, bl, gl, betal) in params:
        z = jnp.einsum("rjm,md->rjd", h, Wl.astype(jnp.float32)) + bl
        mu = jnp.mean(z, axis=-1, keepdims=True)
        var = jnp.mean((z - mu) ** 2, axis=-1, keepdims=True)
        z = (z - mu) * lax.rsqrt(var + eps)
        z = z * gl + betal
        h = jnp.maximum(z, 0.0)
    return jnp.sum(h * mask[..., None], axis=1)


def init_params(key, n_layers, in_dims, hidden_dims, out_dims):
    """PyTorch-like uniform init for Linear; ones/zeros for the norm affine."""
    params = []
    for l in range(n_layers):
        d_in = in_dims if l == 0 else hidden_dims
        d_out = out_dims if l == n_layers - 1 else hidden_dims
        key, k_w, k_b = jax.random.split(key, 3)
        bound = 1.0 / jnp.sqrt(jnp.float32(d_in))
        Wl = jax.random.uniform(k_w, (d_in, d_out), jnp.float32, -bound, bound)
        bl = jax.random.uniform(k_b, (d_out,), jnp.float32, -bound, bound)
        gl = jnp.ones((d_out,), jnp.float32)
        betal = jnp.zeros((d_out,), jnp.float32)
        params.append((Wl, bl, gl, betal))
    return params


# -------------------------------- main ---------------------------------------

if __name__ == "__main__":
    key = jax.random.PRNGKey(0)

    # Hyperparams: n_layers=2, in_dims=M=8 (=k), hidden=32, out_dims=D_pe=16.
    n_layers, M, hidden, D_pe = 2, 8, 32, 16
    key, k_p = jax.random.split(key)
    params = init_params(k_p, n_layers, M, hidden, D_pe)

    # Two graphs: 7 and 9 nodes -> N_sum = 16, n_max = 9.
    sizes = [7, 9]
    W_list = []
    for N_i in sizes:
        key, k_w = jax.random.split(key)
        W_list.append(jax.random.normal(k_w, (N_i, N_i, M), jnp.float32))

    # Dummy COO edge_index (unused by this stage, kept for signature parity).
    E = 20
    key, k_e = jax.random.split(key)
    edge_index = jax.random.randint(k_e, (2, E), 0, sum(sizes), dtype=jnp.int32)

    out = mlp_phi_forward(W_list, edge_index, params, tile_n=256)
    out = jax.block_until_ready(out)

    ref = mlp_phi_reference(W_list, params)
    assert out.shape == (sum(sizes), D_pe), out.shape
    max_err = float(jnp.max(jnp.abs(out - ref)))
    assert jnp.allclose(out, ref, rtol=1e-4, atol=1e-4), max_err

    print("KERNEL_OK")
</pallas_src>

<mosaic_0001>
module attributes {stable_mosaic.version = 11 : i64} {
  func.func @kernel(%arg0: i32, %arg1: memref<9x8x128xf32, #tpu.memory_space<vmem>>, %arg2: memref<1x128xi32, #tpu.memory_space<vmem>>, %arg3: memref<32x8xf32, #tpu.memory_space<vmem>>, %arg4: memref<16x32xf32, #tpu.memory_space<vmem>>, %arg5: memref<32x6xf32, #tpu.memory_space<vmem>>, %arg6: memref<16x128xf32, #tpu.memory_space<vmem>>) attributes {dimension_semantics = [#tpu.dimension_semantics<parallel>], iteration_bounds = array<i64: 1>, scalar_prefetch = 0 : i64, scratch_operands = 0 : i64, tpu.core_type = #tpu.core_type<tc>, window_params = [{transform_indices = @transform_0, window_bounds = array<i64: 9, 8, 128>}, {transform_indices = @transform_1, window_bounds = array<i64: 1, 128>}, {pipeline_mode = #tpu.pipeline_mode<synchronous>, transform_indices = @transform_2, window_bounds = array<i64: 32, 8>}, {pipeline_mode = #tpu.pipeline_mode<synchronous>, transform_indices = @transform_3, window_bounds = array<i64: 16, 32>}, {pipeline_mode = #tpu.pipeline_mode<synchronous>, transform_indices = @transform_4, window_bounds = array<i64: 32, 6>}, {transform_indices = @transform_5, window_bounds = array<i64: 16, 128>}]} {
    %c0 = arith.constant 0 : index
    %c0_0 = arith.constant 0 : index
    %0 = vector.load %arg2[%c0, %c0_0] : memref<1x128xi32, #tpu.memory_space<vmem>>, vector<1x128xi32>
    %c0_1 = arith.constant 0 : index
    %c0_2 = arith.constant 0 : index
    %1 = vector.load %arg5[%c0_1, %c0_2] : memref<32x6xf32, #tpu.memory_space<vmem>>, vector<32x6xf32>
    %c0_i32 = arith.constant 0 : i32
    %2 = vector.broadcast %c0_i32 : i32 to vector<1x128xi32>
    %3 = arith.cmpi sgt, %0, %2 : vector<1x128xi32>
    %4 = arith.extui %3 : vector<1x128xi1> to vector<1x128xi32>
    %5 = arith.sitofp %4 : vector<1x128xi32> to vector<1x128xf32>
    %c0_3 = arith.constant 0 : index
    %c0_4 = arith.constant 0 : index
    %c0_5 = arith.constant 0 : index
    %6 = vector.load %arg1[%c0_3, %c0_4, %c0_5] : memref<9x8x128xf32, #tpu.memory_space<vmem>>, vector<1x8x128xf32>
    %7 = vector.shape_cast %6 : vector<1x8x128xf32> to vector<8x128xf32>
    %c0_6 = arith.constant 0 : index
    %c0_7 = arith.constant 0 : index
    %8 = vector.load %arg3[%c0_6, %c0_7] : memref<32x8xf32, #tpu.memory_space<vmem>>, vector<32x8xf32>
    %9 = vector.extract_strided_slice %1 {offsets = [0, 0], sizes = [32, 1], strides = [1, 1]} : vector<32x6xf32> to vector<32x1xf32>
    %10 = vector.extract_strided_slice %1 {offsets = [0, 1], sizes = [32, 1], strides = [1, 1]} : vector<32x6xf32> to vector<32x1xf32>
    %11 = vector.extract_strided_slice %1 {offsets = [0, 2], sizes = [32, 1], strides = [1, 1]} : vector<32x6xf32> to vector<32x1xf32>
    %cst = arith.constant dense<0.000000e+00> : vector<32x128xf32>
    %12 = tpu.matmul %8, %7, %cst {dimension_numbers = #tpu.dot_dimension_numbers<[1], [0], [0], [1], [0, 0, 1, 1], [], []>} : vector<32x8xf32>, vector<8x128xf32>, vector<32x128xf32> -> vector<32x128xf32>
    %13 = vector.broadcast %9 : vector<32x1xf32> to vector<32x128xf32>
    %14 = arith.addf %12, %13 : vector<32x128xf32>
    %cst_8 = arith.constant dense<0.000000e+00> : vector<128xf32>
    %15 = vector.multi_reduction <add>, %14, %cst_8 [0] : vector<32x128xf32> to vector<128xf32>
    %16 = vector.shape_cast %15 : vector<128xf32> to vector<1x128xf32>
    %cst_9 = arith.constant 3.200000e+01 : f32
    %17 = vector.broadcast %cst_9 : f32 to vector<1x128xf32>
    %18 = arith.divf %16, %17 : vector<1x128xf32>
    %19 = vector.broadcast %18 : vector<1x128xf32> to vector<32x128xf32>
    %20 = arith.subf %14, %19 : vector<32x128xf32>
    %21 = arith.mulf %20, %20 : vector<32x128xf32>
    %cst_10 = arith.constant dense<0.000000e+00> : vector<128xf32>
    %22 = vector.multi_reduction <add>, %21, %cst_10 [0] : vector<32x128xf32> to vector<128xf32>
    %23 = vector.shape_cast %22 : vector<128xf32> to vector<1x128xf32>
    %cst_11 = arith.constant 3.200000e+01 : f32
    %24 = vector.broadcast %cst_11 : f32 to vector<1x128xf32>
    %25 = arith.divf %23, %24 : vector<1x128xf32>
    %26 = vector.broadcast %18 : vector<1x128xf32> to vector<32x128xf32>
    %27 = arith.subf %14, %26 : vector<32x128xf32>
    %cst_12 = arith.constant 9.99999974E-6 : f32
    %28 = vector.broadcast %cst_12 : f32 to vector<1x128xf32>
    %29 = arith.addf %25, %28 : vector<1x128xf32>
    %30 = math.rsqrt %29 : vector<1x128xf32>
    %31 = vector.broadcast %30 : vector<1x128xf32> to vector<32x128xf32>
    %32 = arith.mulf %27, %31 : vector<32x128xf32>
    %33 = vector.broadcast %10 : vector<32x1xf32> to vector<32x128xf32>
    %34 = arith.mulf %32, %33 : vector<32x128xf32>
    %35 = vector.broadcast %11 : vector<32x1xf32> to vector<32x128xf32>
    %36 = arith.addf %34, %35 : vector<32x128xf32>
    %cst_13 = arith.constant 0.000000e+00 : f32
    %37 = vector.broadcast %cst_13 : f32 to vector<32x128xf32>
    %38 = arith.maximumf %36, %37 : vector<32x128xf32>
    %c0_14 = arith.constant 0 : index
    %c0_15 = arith.constant 0 : index
    %39 = vector.load %arg4[%c0_14, %c0_15] : memref<16x32xf32, #tpu.memory_space<vmem>>, vector<16x32xf32>
    %40 = vector.extract_strided_slice %1 {offsets = [0, 3], sizes = [16, 1], strides = [1, 1]} : vector<32x6xf32> to vector<16x1xf32>
    %41 = vector.extract_strided_slice %1 {offsets = [0, 4], sizes = [16, 1], strides = [1, 1]} : vector<32x6xf32> to vector<16x1xf32>
    %42 = vector.extract_strided_slice %1 {offsets = [0, 5], sizes = [16, 1], strides = [1, 1]} : vector<32x6xf32> to vector<16x1xf32>
    %cst_16 = arith.constant dense<0.000000e+00> : vector<16x128xf32>
    %43 = tpu.matmul %39, %38, %cst_16 {dimension_numbers = #tpu.dot_dimension_numbers<[1], [0], [0], [1], [0, 0, 1, 1], [], []>} : vector<16x32xf32>, vector<32x128xf32>, vector<16x128xf32> -> vector<16x128xf32>
    %44 = vector.broadcast %40 : vector<16x1xf32> to vector<16x128xf32>
    %45 = arith.addf %43, %44 : vector<16x128xf32>
    %cst_17 = arith.constant dense<0.000000e+00> : vector<128xf32>
    %46 = vector.multi_reduction <add>, %45, %cst_17 [0] : vector<16x128xf32> to vector<128xf32>
    %47 = vector.shape_cast %46 : vector<128xf32> to vector<1x128xf32>
    %cst_18 = arith.constant 1.600000e+01 : f32
    %48 = vector.broadcast %cst_18 : f32 to vector<1x128xf32>
    %49 = arith.divf %47, %48 : vector<1x128xf32>
    %50 = vector.broadcast %49 : vector<1x128xf32> to vector<16x128xf32>
    %51 = arith.subf %45, %50 : vector<16x128xf32>
    %52 = arith.mulf %51, %51 : vector<16x128xf32>
    %cst_19 = arith.constant dense<0.000000e+00> : vector<128xf32>
    %53 = vector.multi_reduction <add>, %52, %cst_19 [0] : vector<16x128xf32> to vector<128xf32>
    %54 = vector.shape_cast %53 : vector<128xf32> to vector<1x128xf32>
    %cst_20 = arith.constant 1.600000e+01 : f32
    %55 = vector.broadcast %cst_20 : f32 to vector<1x128xf32>
    %56 = arith.divf %54, %55 : vector<1x128xf32>
    %57 = vector.broadcast %49 : vector<1x128xf32> to vector<16x128xf32>
    %58 = arith.subf %45, %57 : vector<16x128xf32>
    %cst_21 = arith.constant 9.99999974E-6 : f32
    %59 = vector.broadcast %cst_21 : f32 to vector<1x128xf32>
    %60 = arith.addf %56, %59 : vector<1x128xf32>
    %61 = math.rsqrt %60 : vector<1x128xf32>
    %62 = vector.broadcast %61 : vector<1x128xf32> to vector<16x128xf32>
    %63 = arith.mulf %58, %62 : vector<16x128xf32>
    %64 = vector.broadcast %41 : vector<16x1xf32> to vector<16x128xf32>
    %65 = arith.mulf %63, %64 : vector<16x128xf32>
    %66 = vector.broadcast %42 : vector<16x1xf32> to vector<16x128xf32>
    %67 = arith.addf %65, %66 : vector<16x128xf32>
    %cst_22 = arith.constant 0.000000e+00 : f32
    %68 = vector.broadcast %cst_22 : f32 to vector<16x128xf32>
    %69 = arith.maximumf %67, %68 : vector<16x128xf32>
    %70 = vector.broadcast %5 : vector<1x128xf32> to vector<16x128xf32>
    %71 = arith.mulf %69, %70 : vector<16x128xf32>
    %c1_i32 = arith.constant 1 : i32
    %72 = vector.broadcast %c1_i32 : i32 to vector<1x128xi32>
    %73 = arith.cmpi sgt, %0, %72 : vector<1x128xi32>
    %74 = arith.extui %73 : vector<1x128xi1> to vector<1x128xi32>
    %75 = arith.sitofp %74 : vector<1x128xi32> to vector<1x128xf32>
    %c1 = arith.constant 1 : index
    %c0_23 = arith.constant 0 : index
    %c0_24 = arith.constant 0 : index
    %76 = vector.load %arg1[%c1, %c0_23, %c0_24] : memref<9x8x128xf32, #tpu.memory_space<vmem>>, vector<1x8x128xf32>
    %77 = vector.shape_cast %76 : vector<1x8x128xf32> to vector<8x128xf32>
    %c0_25 = arith.constant 0 : index
    %c0_26 = arith.constant 0 : index
    %78 = vector.load %arg3[%c0_25, %c0_26] : memref<32x8xf32, #tpu.memory_space<vmem>>, vector<32x8xf32>
    %79 = vector.extract_strided_slice %1 {offsets = [0, 0], sizes = [32, 1], strides = [1, 1]} : vector<32x6xf32> to vector<32x1xf32>
    %80 = vector.extract_strided_slice %1 {offsets = [0, 1], sizes = [32, 1], strides = [1, 1]} : vector<32x6xf32> to vector<32x1xf32>
    %81 = vector.extract_strided_slice %1 {offsets = [0, 2], sizes = [32, 1], strides = [1, 1]} : vector<32x6xf32> to vector<32x1xf32>
    %cst_27 = arith.constant dense<0.000000e+00> : vector<32x128xf32>
    %82 = tpu.matmul %78, %77, %cst_27 {dimension_numbers = #tpu.dot_dimension_numbers<[1], [0], [0], [1], [0, 0, 1, 1], [], []>} : vector<32x8xf32>, vector<8x128xf32>, vector<32x128xf32> -> vector<32x128xf32>
    %83 = vector.broadcast %79 : vector<32x1xf32> to vector<32x128xf32>
    %84 = arith.addf %82, %83 : vector<32x128xf32>
    %cst_28 = arith.constant dense<0.000000e+00> : vector<128xf32>
    %85 = vector.multi_reduction <add>, %84, %cst_28 [0] : vector<32x128xf32> to vector<128xf32>
    %86 = vector.shape_cast %85 : vector<128xf32> to vector<1x128xf32>
    %cst_29 = arith.constant 3.200000e+01 : f32
    %87 = vector.broadcast %cst_29 : f32 to vector<1x128xf32>
    %88 = arith.divf %86, %87 : vector<1x128xf32>
    %89 = vector.broadcast %88 : vector<1x128xf32> to vector<32x128xf32>
    %90 = arith.subf %84, %89 : vector<32x128xf32>
    %91 = arith.mulf %90, %90 : vector<32x128xf32>
    %cst_30 = arith.constant dense<0.000000e+00> : vector<128xf32>
    %92 = vector.multi_reduction <add>, %91, %cst_30 [0] : vector<32x128xf32> to vector<128xf32>
    %93 = vector.shape_cast %92 : vector<128xf32> to vector<1x128xf32>
    %cst_31 = arith.constant 3.200000e+01 : f32
    %94 = vector.broadcast %cst_31 : f32 to vector<1x128xf32>
    %95 = arith.divf %93, %94 : vector<1x128xf32>
    %96 = vector.broadcast %88 : vector<1x128xf32> to vector<32x128xf32>
    %97 = arith.subf %84, %96 : vector<32x128xf32>
    %cst_32 = arith.constant 9.99999974E-6 : f32
    %98 = vector.broadcast %cst_32 : f32 to vector<1x128xf32>
    %99 = arith.addf %95, %98 : vector<1x128xf32>
    %100 = math.rsqrt %99 : vector<1x128xf32>
    %101 = vector.broadcast %100 : vector<1x128xf32> to vector<32x128xf32>
    %102 = arith.mulf %97, %101 : vector<32x128xf32>
    %103 = vector.broadcast %80 : vector<32x1xf32> to vector<32x128xf32>
    %104 = arith.mulf %102, %103 : vector<32x128xf32>
    %105 = vector.broadcast %81 : vector<32x1xf32> to vector<32x128xf32>
    %106 = arith.addf %104, %105 : vector<32x128xf32>
    %cst_33 = arith.constant 0.000000e+00 : f32
    %107 = vector.broadcast %cst_33 : f32 to vector<32x128xf32>
    %108 = arith.maximumf %106, %107 : vector<32x128xf32>
    %c0_34 = arith.constant 0 : index
    %c0_35 = arith.constant 0 : index
    %109 = vector.load %arg4[%c0_34, %c0_35] : memref<16x32xf32, #tpu.memory_space<vmem>>, vector<16x32xf32>
    %110 = vector.extract_strided_slice %1 {offsets = [0, 3], sizes = [16, 1], strides = [1, 1]} : vector<32x6xf32> to vector<16x1xf32>
    %111 = vector.extract_strided_slice %1 {offsets = [0, 4], sizes = [16, 1], strides = [1, 1]} : vector<32x6xf32> to vector<16x1xf32>
    %112 = vector.extract_strided_slice %1 {offsets = [0, 5], sizes = [16, 1], strides = [1, 1]} : vector<32x6xf32> to vector<16x1xf32>
    %cst_36 = arith.constant dense<0.000000e+00> : vector<16x128xf32>
    %113 = tpu.matmul %109, %108, %cst_36 {dimension_numbers = #tpu.dot_dimension_numbers<[1], [0], [0], [1], [0, 0, 1, 1], [], []>} : vector<16x32xf32>, vector<32x128xf32>, vector<16x128xf32> -> vector<16x128xf32>
    %114 = vector.broadcast %110 : vector<16x1xf32> to vector<16x128xf32>
    %115 = arith.addf %113, %114 : vector<16x128xf32>
    %cst_37 = arith.constant dense<0.000000e+00> : vector<128xf32>
    %116 = vector.multi_reduction <add>, %115, %cst_37 [0] : vector<16x128xf32> to vector<128xf32>
    %117 = vector.shape_cast %116 : vector<128xf32> to vector<1x128xf32>
    %cst_38 = arith.constant 1.600000e+01 : f32
    %118 = vector.broadcast %cst_38 : f32 to vector<1x128xf32>
    %119 = arith.divf %117, %118 : vector<1x128xf32>
    %120 = vector.broadcast %119 : vector<1x128xf32> to vector<16x128xf32>
    %121 = arith.subf %115, %120 : vector<16x128xf32>
    %122 = arith.mulf %121, %121 : vector<16x128xf32>
    %cst_39 = arith.constant dense<0.000000e+00> : vector<128xf32>
    %123 = vector.multi_reduction <add>, %122, %cst_39 [0] : vector<16x128xf32> to vector<128xf32>
    %124 = vector.shape_cast %123 : vector<128xf32> to vector<1x128xf32>
    %cst_40 = arith.constant 1.600000e+01 : f32
    %125 = vector.broadcast %cst_40 : f32 to vector<1x128xf32>
    %126 = arith.divf %124, %125 : vector<1x128xf32>
    %127 = vector.broadcast %119 : vector<1x128xf32> to vector<16x128xf32>
    %128 = arith.subf %115, %127 : vector<16x128xf32>
    %cst_41 = arith.constant 9.99999974E-6 : f32
    %129 = vector.broadcast %cst_41 : f32 to vector<1x128xf32>
    %130 = arith.addf %126, %129 : vector<1x128xf32>
    %131 = math.rsqrt %130 : vector<1x128xf32>
    %132 = vector.broadcast %131 : vector<1x128xf32> to vector<16x128xf32>
    %133 = arith.mulf %128, %132 : vector<16x128xf32>
    %134 = vector.broadcast %111 : vector<16x1xf32> to vector<16x128xf32>
    %135 = arith.mulf %133, %134 : vector<16x128xf32>
    %136 = vector.broadcast %112 : vector<16x1xf32> to vector<16x128xf32>
    %137 = arith.addf %135, %136 : vector<16x128xf32>
    %cst_42 = arith.constant 0.000000e+00 : f32
    %138 = vector.broadcast %cst_42 : f32 to vector<16x128xf32>
    %139 = arith.maximumf %137, %138 : vector<16x128xf32>
    %140 = vector.broadcast %75 : vector<1x128xf32> to vector<16x128xf32>
    %141 = arith.mulf %139, %140 : vector<16x128xf32>
    %c2_i32 = arith.constant 2 : i32
    %142 = vector.broadcast %c2_i32 : i32 to vector<1x128xi32>
    %143 = arith.cmpi sgt, %0, %142 : vector<1x128xi32>
    %144 = arith.extui %143 : vector<1x128xi1> to vector<1x128xi32>
    %145 = arith.sitofp %144 : vector<1x128xi32> to vector<1x128xf32>
    %c2 = arith.constant 2 : index
    %c0_43 = arith.constant 0 : index
    %c0_44 = arith.constant 0 : index
    %146 = vector.load %arg1[%c2, %c0_43, %c0_44] : memref<9x8x128xf32, #tpu.memory_space<vmem>>, vector<1x8x128xf32>
    %147 = vector.shape_cast %146 : vector<1x8x128xf32> to vector<8x128xf32>
    %c0_45 = arith.constant 0 : index
    %c0_46 = arith.constant 0 : index
    %148 = vector.load %arg3[%c0_45, %c0_46] : memref<32x8xf32, #tpu.memory_space<vmem>>, vector<32x8xf32>
    %149 = vector.extract_strided_slice %1 {offsets = [0, 0], sizes = [32, 1], strides = [1, 1]} : vector<32x6xf32> to vector<32x1xf32>
    %150 = vector.extract_strided_slice %1 {offsets = [0, 1], sizes = [32, 1], strides = [1, 1]} : vector<32x6xf32> to vector<32x1xf32>
    %151 = vector.extract_strided_slice %1 {offsets = [0, 2], sizes = [32, 1], strides = [1, 1]} : vector<32x6xf32> to vector<32x1xf32>
    %cst_47 = arith.constant dense<0.000000e+00> : vector<32x128xf32>
    %152 = tpu.matmul %148, %147, %cst_47 {dimension_numbers = #tpu.dot_dimension_numbers<[1], [0], [0], [1], [0, 0, 1, 1], [], []>} : vector<32x8xf32>, vector<8x128xf32>, vector<32x128xf32> -> vector<32x128xf32>
    %153 = vector.broadcast %149 : vector<32x1xf32> to vector<32x128xf32>
    %154 = arith.addf %152, %153 : vector<32x128xf32>
    %cst_48 = arith.constant dense<0.000000e+00> : vector<128xf32>
    %155 = vector.multi_reduction <add>, %154, %cst_48 [0] : vector<32x128xf32> to vector<128xf32>
    %156 = vector.shape_cast %155 : vector<128xf32> to vector<1x128xf32>
    %cst_49 = arith.constant 3.200000e+01 : f32
    %157 = vector.broadcast %cst_49 : f32 to vector<1x128xf32>
    %158 = arith.divf %156, %157 : vector<1x128xf32>
    %159 = vector.broadcast %158 : vector<1x128xf32> to vector<32x128xf32>
    %160 = arith.subf %154, %159 : vector<32x128xf32>
    %161 = arith.mulf %160, %160 : vector<32x128xf32>
    %cst_50 = arith.constant dense<0.000000e+00> : vector<128xf32>
    %162 = vector.multi_reduction <add>, %161, %cst_50 [0] : vector<32x128xf32> to vector<128xf32>
    %163 = vector.shape_cast %162 : vector<128xf32> to vector<1x128xf32>
    %cst_51 = arith.constant 3.200000e+01 : f32
    %164 = vector.broadcast %cst_51 : f32 to vector<1x128xf32>
    %165 = arith.divf %163, %164 : vector<1x128xf32>
    %166 = vector.broadcast %158 : vector<1x128xf32> to vector<32x128xf32>
    %167 = arith.subf %154, %166 : vector<32x128xf32>
    %cst_52 = arith.constant 9.99999974E-6 : f32
    %168 = vector.broadcast %cst_52 : f32 to vector<1x128xf32>
    %169 = arith.addf %165, %168 : vector<1x128xf32>
    %170 = math.rsqrt %169 : vector<1x128xf32>
    %171 = vector.broadcast %170 : vector<1x128xf32> to vector<32x128xf32>
    %172 = arith.mulf %167, %171 : vector<32x128xf32>
    %173 = vector.broadcast %150 : vector<32x1xf32> to vector<32x128xf32>
    %174 = arith.mulf %172, %173 : vector<32x128xf32>
    %175 = vector.broadcast %151 : vector<32x1xf32> to vector<32x128xf32>
    %176 = arith.addf %174, %175 : vector<32x128xf32>
    %cst_53 = arith.constant 0.000000e+00 : f32
    %177 = vector.broadcast %cst_53 : f32 to vector<32x128xf32>
    %178 = arith.maximumf %176, %177 : vector<32x128xf32>
    %c0_54 = arith.constant 0 : index
    %c0_55 = arith.constant 0 : index
    %179 = vector.load %arg4[%c0_54, %c0_55] : memref<16x32xf32, #tpu.memory_space<vmem>>, vector<16x32xf32>
    %180 = vector.extract_strided_slice %1 {offsets = [0, 3], sizes = [16, 1], strides = [1, 1]} : vector<32x6xf32> to vector<16x1xf32>
    %181 = vector.extract_strided_slice %1 {offsets = [0, 4], sizes = [16, 1], strides = [1, 1]} : vector<32x6xf32> to vector<16x1xf32>
    %182 = vector.extract_strided_slice %1 {offsets = [0, 5], sizes = [16, 1], strides = [1, 1]} : vector<32x6xf32> to vector<16x1xf32>
    %cst_56 = arith.constant dense<0.000000e+00> : vector<16x128xf32>
    %183 = tpu.matmul %179, %178, %cst_56 {dimension_numbers = #tpu.dot_dimension_numbers<[1], [0], [0], [1], [0, 0, 1, 1], [], []>} : vector<16x32xf32>, vector<32x128xf32>, vector<16x128xf32> -> vector<16x128xf32>
    %184 = vector.broadcast %180 : vector<16x1xf32> to vector<16x128xf32>
    %185 = arith.addf %183, %184 : vector<16x128xf32>
    %cst_57 = arith.constant dense<0.000000e+00> : vector<128xf32>
    %186 = vector.multi_reduction <add>, %185, %cst_57 [0] : vector<16x128xf32> to vector<128xf32>
    %187 = vector.shape_cast %186 : vector<128xf32> to vector<1x128xf32>
    %cst_58 = arith.constant 1.600000e+01 : f32
    %188 = vector.broadcast %cst_58 : f32 to vector<1x128xf32>
    %189 = arith.divf %187, %188 : vector<1x128xf32>
    %190 = vector.broadcast %189 : vector<1x128xf32> to vector<16x128xf32>
    %191 = arith.subf %185, %190 : vector<16x128xf32>
    %192 = arith.mulf %191, %191 : vector<16x128xf32>
    %cst_59 = arith.constant dense<0.000000e+00> : vector<128xf32>
    %193 = vector.multi_reduction <add>, %192, %cst_59 [0] : vector<16x128xf32> to vector<128xf32>
    %194 = vector.shape_cast %193 : vector<128xf32> to vector<1x128xf32>
    %cst_60 = arith.constant 1.600000e+01 : f32
    %195 = vector.broadcast %cst_60 : f32 to vector<1x128xf32>
    %196 = arith.divf %194, %195 : vector<1x128xf32>
    %197 = vector.broadcast %189 : vector<1x128xf32> to vector<16x128xf32>
    %198 = arith.subf %185, %197 : vector<16x128xf32>
    %cst_61 = arith.constant 9.99999974E-6 : f32
    %199 = vector.broadcast %cst_61 : f32 to vector<1x128xf32>
    %200 = arith.addf %196, %199 : vector<1x128xf32>
    %201 = math.rsqrt %200 : vector<1x128xf32>
    %202 = vector.broadcast %201 : vector<1x128xf32> to vector<16x128xf32>
    %203 = arith.mulf %198, %202 : vector<16x128xf32>
    %204 = vector.broadcast %181 : vector<16x1xf32> to vector<16x128xf32>
    %205 = arith.mulf %203, %204 : vector<16x128xf32>
    %206 = vector.broadcast %182 : vector<16x1xf32> to vector<16x128xf32>
    %207 = arith.addf %205, %206 : vector<16x128xf32>
    %cst_62 = arith.constant 0.000000e+00 : f32
    %208 = vector.broadcast %cst_62 : f32 to vector<16x128xf32>
    %209 = arith.maximumf %207, %208 : vector<16x128xf32>
    %210 = vector.broadcast %145 : vector<1x128xf32> to vector<16x128xf32>
    %211 = arith.mulf %209, %210 : vector<16x128xf32>
    %c3_i32 = arith.constant 3 : i32
    %212 = vector.broadcast %c3_i32 : i32 to vector<1x128xi32>
    %213 = arith.cmpi sgt, %0, %212 : vector<1x128xi32>
    %214 = arith.extui %213 : vector<1x128xi1> to vector<1x128xi32>
    %215 = arith.sitofp %214 : vector<1x128xi32> to vector<1x128xf32>
    %c3 = arith.constant 3 : index
    %c0_63 = arith.constant 0 : index
    %c0_64 = arith.constant 0 : index
    %216 = vector.load %arg1[%c3, %c0_63, %c0_64] : memref<9x8x128xf32, #tpu.memory_space<vmem>>, vector<1x8x128xf32>
    %217 = vector.shape_cast %216 : vector<1x8x128xf32> to vector<8x128xf32>
    %c0_65 = arith.constant 0 : index
    %c0_66 = arith.constant 0 : index
    %218 = vector.load %arg3[%c0_65, %c0_66] : memref<32x8xf32, #tpu.memory_space<vmem>>, vector<32x8xf32>
    %219 = vector.extract_strided_slice %1 {offsets = [0, 0], sizes = [32, 1], strides = [1, 1]} : vector<32x6xf32> to vector<32x1xf32>
    %220 = vector.extract_strided_slice %1 {offsets = [0, 1], sizes = [32, 1], strides = [1, 1]} : vector<32x6xf32> to vector<32x1xf32>
    %221 = vector.extract_strided_slice %1 {offsets = [0, 2], sizes = [32, 1], strides = [1, 1]} : vector<32x6xf32> to vector<32x1xf32>
    %cst_67 = arith.constant dense<0.000000e+00> : vector<32x128xf32>
    %222 = tpu.matmul %218, %217, %cst_67 {dimension_numbers = #tpu.dot_dimension_numbers<[1], [0], [0], [1], [0, 0, 1, 1], [], []>} : vector<32x8xf32>, vector<8x128xf32>, vector<32x128xf32> -> vector<32x128xf32>
    %223 = vector.broadcast %219 : vector<32x1xf32> to vector<32x128xf32>
    %224 = arith.addf %222, %223 : vector<32x128xf32>
    %cst_68 = arith.constant dense<0.000000e+00> : vector<128xf32>
    %225 = vector.multi_reduction <add>, %224, %cst_68 [0] : vector<32x128xf32> to vector<128xf32>
    %226 = vector.shape_cast %225 : vector<128xf32> to vector<1x128xf32>
    %cst_69 = arith.constant 3.200000e+01 : f32
    %227 = vector.broadcast %cst_69 : f32 to vector<1x128xf32>
    %228 = arith.divf %226, %227 : vector<1x128xf32>
    %229 = vector.broadcast %228 : vector<1x128xf32> to vector<32x128xf32>
    %230 = arith.subf %224, %229 : vector<32x128xf32>
    %231 = arith.mulf %230, %230 : vector<32x128xf32>
    %cst_70 = arith.constant dense<0.000000e+00> : vector<128xf32>
    %232 = vector.multi_reduction <add>, %231, %cst_70 [0] : vector<32x128xf32> to vector<128xf32>
    %233 = vector.shape_cast %232 : vector<128xf32> to vector<1x128xf32>
    %cst_71 = arith.constant 3.200000e+01 : f32
    %234 = vector.broadcast %cst_71 : f32 to vector<1x128xf32>
    %235 = arith.divf %233, %234 : vector<1x128xf32>
    %236 = vector.broadcast %228 : vector<1x128xf32> to vector<32x128xf32>
    %237 = arith.subf %224, %236 : vector<32x128xf32>
    %cst_72 = arith.constant 9.99999974E-6 : f32
    %238 = vector.broadcast %cst_72 : f32 to vector<1x128xf32>
    %239 = arith.addf %235, %238 : vector<1x128xf32>
    %240 = math.rsqrt %239 : vector<1x128xf32>
    %241 = vector.broadcast %240 : vector<1x128xf32> to vector<32x128xf32>
    %242 = arith.mulf %237, %241 : vector<32x128xf32>
    %243 = vector.broadcast %220 : vector<32x1xf32> to vector<32x128xf32>
    %244 = arith.mulf %242, %243 : vector<32x128xf32>
    %245 = vector.broadcast %221 : vector<32x1xf32> to vector<32x128xf32>
    %246 = arith.addf %244, %245 : vector<32x128xf32>
    %cst_73 = arith.constant 0.000000e+00 : f32
    %247 = vector.broadcast %cst_73 : f32 to vector<32x128xf32>
    %248 = arith.maximumf %246, %247 : vector<32x128xf32>
    %c0_74 = arith.constant 0 : index
    %c0_75 = arith.constant 0 : index
    %249 = vector.load %arg4[%c0_74, %c0_75] : memref<16x32xf32, #tpu.memory_space<vmem>>, vector<16x32xf32>
    %250 = vector.extract_strided_slice %1 {offsets = [0, 3], sizes = [16, 1], strides = [1, 1]} : vector<32x6xf32> to vector<16x1xf32>
    %251 = vector.extract_strided_slice %1 {offsets = [0, 4], sizes = [16, 1], strides = [1, 1]} : vector<32x6xf32> to vector<16x1xf32>
    %252 = vector.extract_strided_slice %1 {offsets = [0, 5], sizes = [16, 1], strides = [1, 1]} : vector<32x6xf32> to vector<16x1xf32>
    %cst_76 = arith.constant dense<0.000000e+00> : vector<16x128xf32>
    %253 = tpu.matmul %249, %248, %cst_76 {dimension_numbers = #tpu.dot_dimension_numbers<[1], [0], [0], [1], [0, 0, 1, 1], [], []>} : vector<16x32xf32>, vector<32x128xf32>, vector<16x128xf32> -> vector<16x128xf32>
    %254 = vector.broadcast %250 : vector<16x1xf32> to vector<16x128xf32>
    %255 = arith.addf %253, %254 : vector<16x128xf32>
    %cst_77 = arith.constant dense<0.000000e+00> : vector<128xf32>
    %256 = vector.multi_reduction <add>, %255, %cst_77 [0] : vector<16x128xf32> to vector<128xf32>
    %257 = vector.shape_cast %256 : vector<128xf32> to vector<1x128xf32>
    %cst_78 = arith.constant 1.600000e+01 : f32
    %258 = vector.broadcast %cst_78 : f32 to vector<1x128xf32>
    %259 = arith.divf %257, %258 : vector<1x128xf32>
    %260 = vector.broadcast %259 : vector<1x128xf32> to vector<16x128xf32>
    %261 = arith.subf %255, %260 : vector<16x128xf32>
    %262 = arith.mulf %261, %261 : vector<16x128xf32>
    %cst_79 = arith.constant dense<0.000000e+00> : vector<128xf32>
    %263 = vector.multi_reduction <add>, %262, %cst_79 [0] : vector<16x128xf32> to vector<128xf32>
    %264 = vector.shape_cast %263 : vector<128xf32> to vector<1x128xf32>
    %cst_80 = arith.constant 1.600000e+01 : f32
    %265 = vector.broadcast %cst_80 : f32 to vector<1x128xf32>
    %266 = arith.divf %264, %265 : vector<1x128xf32>
    %267 = vector.broadcast %259 : vector<1x128xf32> to vector<16x128xf32>
    %268 = arith.subf %255, %267 : vector<16x128xf32>
    %cst_81 = arith.constant 9.99999974E-6 : f32
    %269 = vector.broadcast %cst_81 : f32 to vector<1x128xf32>
    %270 = arith.addf %266, %269 : vector<1x128xf32>
    %271 = math.rsqrt %270 : vector<1x128xf32>
    %272 = vector.broadcast %271 : vector<1x128xf32> to vector<16x128xf32>
    %273 = arith.mulf %268, %272 : vector<16x128xf32>
    %274 = vector.broadcast %251 : vector<16x1xf32> to vector<16x128xf32>
    %275 = arith.mulf %273, %274 : vector<16x128xf32>
    %276 = vector.broadcast %252 : vector<16x1xf32> to vector<16x128xf32>
    %277 = arith.addf %275, %276 : vector<16x128xf32>
    %cst_82 = arith.constant 0.000000e+00 : f32
    %278 = vector.broadcast %cst_82 : f32 to vector<16x128xf32>
    %279 = arith.maximumf %277, %278 : vector<16x128xf32>
    %280 = vector.broadcast %215 : vector<1x128xf32> to vector<16x128xf32>
    %281 = arith.mulf %279, %280 : vector<16x128xf32>
    %c4_i32 = arith.constant 4 : i32
    %282 = vector.broadcast %c4_i32 : i32 to vector<1x128xi32>
    %283 = arith.cmpi sgt, %0, %282 : vector<1x128xi32>
    %284 = arith.extui %283 : vector<1x128xi1> to vector<1x128xi32>
    %285 = arith.sitofp %284 : vector<1x128xi32> to vector<1x128xf32>
    %c4 = arith.constant 4 : index
    %c0_83 = arith.constant 0 : index
    %c0_84 = arith.constant 0 : index
    %286 = vector.load %arg1[%c4, %c0_83, %c0_84] : memref<9x8x128xf32, #tpu.memory_space<vmem>>, vector<1x8x128xf32>
    %287 = vector.shape_cast %286 : vector<1x8x128xf32> to vector<8x128xf32>
    %c0_85 = arith.constant 0 : index
    %c0_86 = arith.constant 0 : index
    %288 = vector.load %arg3[%c0_85, %c0_86] : memref<32x8xf32, #tpu.memory_space<vmem>>, vector<32x8xf32>
    %289 = vector.extract_strided_slice %1 {offsets = [0, 0], sizes = [32, 1], strides = [1, 1]} : vector<32x6xf32> to vector<32x1xf32>
    %290 = vector.extract_strided_slice %1 {offsets = [0, 1], sizes = [32, 1], strides = [1, 1]} : vector<32x6xf32> to vector<32x1xf32>
    %291 = vector.extract_strided_slice %1 {offsets = [0, 2], sizes = [32, 1], strides = [1, 1]} : vector<32x6xf32> to vector<32x1xf32>
    %cst_87 = arith.constant dense<0.000000e+00> : vector<32x128xf32>
    %292 = tpu.matmul %288, %287, %cst_87 {dimension_numbers = #tpu.dot_dimension_numbers<[1], [0], [0], [1], [0, 0, 1, 1], [], []>} : vector<32x8xf32>, vector<8x128xf32>, vector<32x128xf32> -> vector<32x128xf32>
    %293 = vector.broadcast %289 : vector<32x1xf32> to vector<32x128xf32>
    %294 = arith.addf %292, %293 : vector<32x128xf32>
    %cst_88 = arith.constant dense<0.000000e+00> : vector<128xf32>
    %295 = vector.multi_reduction <add>, %294, %cst_88 [0] : vector<32x128xf32> to vector<128xf32>
    %296 = vector.shape_cast %295 : vector<128xf32> to vector<1x128xf32>
    %cst_89 = arith.constant 3.200000e+01 : f32
    %297 = vector.broadcast %cst_89 : f32 to vector<1x128xf32>
    %298 = arith.divf %296, %297 : vector<1x128xf32>
    %299 = vector.broadcast %298 : vector<1x128xf32> to vector<32x128xf32>
    %300 = arith.subf %294, %299 : vector<32x128xf32>
    %301 = arith.mulf %300, %300 : vector<32x128xf32>
    %cst_90 = arith.constant dense<0.000000e+00> : vector<128xf32>
    %302 = vector.multi_reduction <add>, %301, %cst_90 [0] : vector<32x128xf32> to vector<128xf32>
    %303 = vector.shape_cast %302 : vector<128xf32> to vector<1x128xf32>
    %cst_91 = arith.constant 3.200000e+01 : f32
    %304 = vector.broadcast %cst_91 : f32 to vector<1x128xf32>
    %305 = arith.divf %303, %304 : vector<1x128xf32>
    %306 = vector.broadcast %298 : vector<1x128xf32> to vector<32x128xf32>
    %307 = arith.subf %294, %306 : vector<32x128xf32>
    %cst_92 = arith.constant 9.99999974E-6 : f32
    %308 = vector.broadcast %cst_92 : f32 to vector<1x128xf32>
    %309 = arith.addf %305, %308 : vector<1x128xf32>
    %310 = math.rsqrt %309 : vector<1x128xf32>
    %311 = vector.broadcast %310 : vector<1x128xf32> to vector<32x128xf32>
    %312 = arith.mulf %307, %311 : vector<32x128xf32>
    %313 = vector.broadcast %290 : vector<32x1xf32> to vector<32x128xf32>
    %314 = arith.mulf %312, %313 : vector<32x128xf32>
    %315 = vector.broadcast %291 : vector<32x1xf32> to vector<32x128xf32>
    %316 = arith.addf %314, %315 : vector<32x128xf32>
    %cst_93 = arith.constant 0.000000e+00 : f32
    %317 = vector.broadcast %cst_93 : f32 to vector<32x128xf32>
    %318 = arith.maximumf %316, %317 : vector<32x128xf32>
    %c0_94 = arith.constant 0 : index
    %c0_95 = arith.constant 0 : index
    %319 = vector.load %arg4[%c0_94, %c0_95] : memref<16x32xf32, #tpu.memory_space<vmem>>, vector<16x32xf32>
    %320 = vector.extract_strided_slice %1 {offsets = [0, 3], sizes = [16, 1], strides = [1, 1]} : vector<32x6xf32> to vector<16x1xf32>
    %321 = vector.extract_strided_slice %1 {offsets = [0, 4], sizes = [16, 1], strides = [1, 1]} : vector<32x6xf32> to vector<16x1xf32>
    %322 = vector.extract_strided_slice %1 {offsets = [0, 5], sizes = [16, 1], strides = [1, 1]} : vector<32x6xf32> to vector<16x1xf32>
    %cst_96 = arith.constant dense<0.000000e+00> : vector<16x128xf32>
    %323 = tpu.matmul %319, %318, %cst_96 {dimension_numbers = #tpu.dot_dimension_numbers<[1], [0], [0], [1], [0, 0, 1, 1], [], []>} : vector<16x32xf32>, vector<32x128xf32>, vector<16x128xf32> -> vector<16x128xf32>
    %324 = vector.broadcast %320 : vector<16x1xf32> to vector<16x128xf32>
    %325 = arith.addf %323, %324 : vector<16x128xf32>
    %cst_97 = arith.constant dense<0.000000e+00> : vector<128xf32>
    %326 = vector.multi_reduction <add>, %325, %cst_97 [0] : vector<16x128xf32> to vector<128xf32>
    %327 = vector.shape_cast %326 : vector<128xf32> to vector<1x128xf32>
    %cst_98 = arith.constant 1.600000e+01 : f32
    %328 = vector.broadcast %cst_98 : f32 to vector<1x128xf32>
    %329 = arith.divf %327, %328 : vector<1x128xf32>
    %330 = vector.broadcast %329 : vector<1x128xf32> to vector<16x128xf32>
    %331 = arith.subf %325, %330 : vector<16x128xf32>
    %332 = arith.mulf %331, %331 : vector<16x128xf32>
    %cst_99 = arith.constant dense<0.000000e+00> : vector<128xf32>
    %333 = vector.multi_reduction <add>, %332, %cst_99 [0] : vector<16x128xf32> to vector<128xf32>
    %334 = vector.shape_cast %333 : vector<128xf32> to vector<1x128xf32>
    %cst_100 = arith.constant 1.600000e+01 : f32
    %335 = vector.broadcast %cst_100 : f32 to vector<1x128xf32>
    %336 = arith.divf %334, %335 : vector<1x128xf32>
    %337 = vector.broadcast %329 : vector<1x128xf32> to vector<16x128xf32>
    %338 = arith.subf %325, %337 : vector<16x128xf32>
    %cst_101 = arith.constant 9.99999974E-6 : f32
    %339 = vector.broadcast %cst_101 : f32 to vector<1x128xf32>
    %340 = arith.addf %336, %339 : vector<1x128xf32>
    %341 = math.rsqrt %340 : vector<1x128xf32>
    %342 = vector.broadcast %341 : vector<1x128xf32> to vector<16x128xf32>
    %343 = arith.mulf %338, %342 : vector<16x128xf32>
    %344 = vector.broadcast %321 : vector<16x1xf32> to vector<16x128xf32>
    %345 = arith.mulf %343, %344 : vector<16x128xf32>
    %346 = vector.broadcast %322 : vector<16x1xf32> to vector<16x128xf32>
    %347 = arith.addf %345, %346 : vector<16x128xf32>
    %cst_102 = arith.constant 0.000000e+00 : f32
    %348 = vector.broadcast %cst_102 : f32 to vector<16x128xf32>
    %349 = arith.maximumf %347, %348 : vector<16x128xf32>
    %350 = vector.broadcast %285 : vector<1x128xf32> to vector<16x128xf32>
    %351 = arith.mulf %349, %350 : vector<16x128xf32>
    %c5_i32 = arith.constant 5 : i32
    %352 = vector.broadcast %c5_i32 : i32 to vector<1x128xi32>
    %353 = arith.cmpi sgt, %0, %352 : vector<1x128xi32>
    %354 = arith.extui %353 : vector<1x128xi1> to vector<1x128xi32>
    %355 = arith.sitofp %354 : vector<1x128xi32> to vector<1x128xf32>
    %c5 = arith.constant 5 : index
    %c0_103 = arith.constant 0 : index
    %c0_104 = arith.constant 0 : index
    %356 = vector.load %arg1[%c5, %c0_103, %c0_104] : memref<9x8x128xf32, #tpu.memory_space<vmem>>, vector<1x8x128xf32>
    %357 = vector.shape_cast %356 : vector<1x8x128xf32> to vector<8x128xf32>
    %c0_105 = arith.constant 0 : index
    %c0_106 = arith.constant 0 : index
    %358 = vector.load %arg3[%c0_105, %c0_106] : memref<32x8xf32, #tpu.memory_space<vmem>>, vector<32x8xf32>
    %359 = vector.extract_strided_slice %1 {offsets = [0, 0], sizes = [32, 1], strides = [1, 1]} : vector<32x6xf32> to vector<32x1xf32>
    %360 = vector.extract_strided_slice %1 {offsets = [0, 1], sizes = [32, 1], strides = [1, 1]} : vector<32x6xf32> to vector<32x1xf32>
    %361 = vector.extract_strided_slice %1 {offsets = [0, 2], sizes = [32, 1], strides = [1, 1]} : vector<32x6xf32> to vector<32x1xf32>
    %cst_107 = arith.constant dense<0.000000e+00> : vector<32x128xf32>
    %362 = tpu.matmul %358, %357, %cst_107 {dimension_numbers = #tpu.dot_dimension_numbers<[1], [0], [0], [1], [0, 0, 1, 1], [], []>} : vector<32x8xf32>, vector<8x128xf32>, vector<32x128xf32> -> vector<32x128xf32>
    %363 = vector.broadcast %359 : vector<32x1xf32> to vector<32x128xf32>
    %364 = arith.addf %362, %363 : vector<32x128xf32>
    %cst_108 = arith.constant dense<0.000000e+00> : vector<128xf32>
    %365 = vector.multi_reduction <add>, %364, %cst_108 [0] : vector<32x128xf32> to vector<128xf32>
    %366 = vector.shape_cast %365 : vector<128xf32> to vector<1x128xf32>
    %cst_109 = arith.constant 3.200000e+01 : f32
    %367 = vector.broadcast %cst_109 : f32 to vector<1x128xf32>
    %368 = arith.divf %366, %367 : vector<1x128xf32>
    %369 = vector.broadcast %368 : vector<1x128xf32> to vector<32x128xf32>
    %370 = arith.subf %364, %369 : vector<32x128xf32>
    %371 = arith.mulf %370, %370 : vector<32x128xf32>
    %cst_110 = arith.constant dense<0.000000e+00> : vector<128xf32>
    %372 = vector.multi_reduction <add>, %371, %cst_110 [0] : vector<32x128xf32> to vector<128xf32>
    %373 = vector.shape_cast %372 : vector<128xf32> to vector<1x128xf32>
    %cst_111 = arith.constant 3.200000e+01 : f32
    %374 = vector.broadcast %cst_111 : f32 to vector<1x128xf32>
    %375 = arith.divf %373, %374 : vector<1x128xf32>
    %376 = vector.broadcast %368 : vector<1x128xf32> to vector<32x128xf32>
    %377 = arith.subf %364, %376 : vector<32x128xf32>
    %cst_112 = arith.constant 9.99999974E-6 : f32
    %378 = vector.broadcast %cst_112 : f32 to vector<1x128xf32>
    %379 = arith.addf %375, %378 : vector<1x128xf32>
    %380 = math.rsqrt %379 : vector<1x128xf32>
    %381 = vector.broadcast %380 : vector<1x128xf32> to vector<32x128xf32>
    %382 = arith.mulf %377, %381 : vector<32x128xf32>
    %383 = vector.broadcast %360 : vector<32x1xf32> to vector<32x128xf32>
    %384 = arith.mulf %382, %383 : vector<32x128xf32>
    %385 = vector.broadcast %361 : vector<32x1xf32> to vector<32x128xf32>
    %386 = arith.addf %384, %385 : vector<32x128xf32>
    %cst_113 = arith.constant 0.000000e+00 : f32
    %387 = vector.broadcast %cst_113 : f32 to vector<32x128xf32>
    %388 = arith.maximumf %386, %387 : vector<32x128xf32>
    %c0_114 = arith.constant 0 : index
    %c0_115 = arith.constant 0 : index
    %389 = vector.load %arg4[%c0_114, %c0_115] : memref<16x32xf32, #tpu.memory_space<vmem>>, vector<16x32xf32>
    %390 = vector.extract_strided_slice %1 {offsets = [0, 3], sizes = [16, 1], strides = [1, 1]} : vector<32x6xf32> to vector<16x1xf32>
    %391 = vector.extract_strided_slice %1 {offsets = [0, 4], sizes = [16, 1], strides = [1, 1]} : vector<32x6xf32> to vector<16x1xf32>
    %392 = vector.extract_strided_slice %1 {offsets = [0, 5], sizes = [16, 1], strides = [1, 1]} : vector<32x6xf32> to vector<16x1xf32>
    %cst_116 = arith.constant dense<0.000000e+00> : vector<16x128xf32>
    %393 = tpu.matmul %389, %388, %cst_116 {dimension_numbers = #tpu.dot_dimension_numbers<[1], [0], [0], [1], [0, 0, 1, 1], [], []>} : vector<16x32xf32>, vector<32x128xf32>, vector<16x128xf32> -> vector<16x128xf32>
    %394 = vector.broadcast %390 : vector<16x1xf32> to vector<16x128xf32>
    %395 = arith.addf %393, %394 : vector<16x128xf32>
    %cst_117 = arith.constant dense<0.000000e+00> : vector<128xf32>
    %396 = vector.multi_reduction <add>, %395, %cst_117 [0] : vector<16x128xf32> to vector<128xf32>
    %397 = vector.shape_cast %396 : vector<128xf32> to vector<1x128xf32>
    %cst_118 = arith.constant 1.600000e+01 : f32
    %398 = vector.broadcast %cst_118 : f32 to vector<1x128xf32>
    %399 = arith.divf %397, %398 : vector<1x128xf32>
    %400 = vector.broadcast %399 : vector<1x128xf32> to vector<16x128xf32>
    %401 = arith.subf %395, %400 : vector<16x128xf32>
    %402 = arith.mulf %401, %401 : vector<16x128xf32>
    %cst_119 = arith.constant dense<0.000000e+00> : vector<128xf32>
    %403 = vector.multi_reduction <add>, %402, %cst_119 [0] : vector<16x128xf32> to vector<128xf32>
    %404 = vector.shape_cast %403 : vector<128xf32> to vector<1x128xf32>
    %cst_120 = arith.constant 1.600000e+01 : f32
    %405 = vector.broadcast %cst_120 : f32 to vector<1x128xf32>
    %406 = arith.divf %404, %405 : vector<1x128xf32>
    %407 = vector.broadcast %399 : vector<1x128xf32> to vector<16x128xf32>
    %408 = arith.subf %395, %407 : vector<16x128xf32>
    %cst_121 = arith.constant 9.99999974E-6 : f32
    %409 = vector.broadcast %cst_121 : f32 to vector<1x128xf32>
    %410 = arith.addf %406, %409 : vector<1x128xf32>
    %411 = math.rsqrt %410 : vector<1x128xf32>
    %412 = vector.broadcast %411 : vector<1x128xf32> to vector<16x128xf32>
    %413 = arith.mulf %408, %412 : vector<16x128xf32>
    %414 = vector.broadcast %391 : vector<16x1xf32> to vector<16x128xf32>
    %415 = arith.mulf %413, %414 : vector<16x128xf32>
    %416 = vector.broadcast %392 : vector<16x1xf32> to vector<16x128xf32>
    %417 = arith.addf %415, %416 : vector<16x128xf32>
    %cst_122 = arith.constant 0.000000e+00 : f32
    %418 = vector.broadcast %cst_122 : f32 to vector<16x128xf32>
    %419 = arith.maximumf %417, %418 : vector<16x128xf32>
    %420 = vector.broadcast %355 : vector<1x128xf32> to vector<16x128xf32>
    %421 = arith.mulf %419, %420 : vector<16x128xf32>
    %c6_i32 = arith.constant 6 : i32
    %422 = vector.broadcast %c6_i32 : i32 to vector<1x128xi32>
    %423 = arith.cmpi sgt, %0, %422 : vector<1x128xi32>
    %424 = arith.extui %423 : vector<1x128xi1> to vector<1x128xi32>
    %425 = arith.sitofp %424 : vector<1x128xi32> to vector<1x128xf32>
    %c6 = arith.constant 6 : index
    %c0_123 = arith.constant 0 : index
    %c0_124 = arith.constant 0 : index
    %426 = vector.load %arg1[%c6, %c0_123, %c0_124] : memref<9x8x128xf32, #tpu.memory_space<vmem>>, vector<1x8x128xf32>
    %427 = vector.shape_cast %426 : vector<1x8x128xf32> to vector<8x128xf32>
    %c0_125 = arith.constant 0 : index
    %c0_126 = arith.constant 0 : index
    %428 = vector.load %arg3[%c0_125, %c0_126] : memref<32x8xf32, #tpu.memory_space<vmem>>, vector<32x8xf32>
    %429 = vector.extract_strided_slice %1 {offsets = [0, 0], sizes = [32, 1], strides = [1, 1]} : vector<32x6xf32> to vector<32x1xf32>
    %430 = vector.extract_strided_slice %1 {offsets = [0, 1], sizes = [32, 1], strides = [1, 1]} : vector<32x6xf32> to vector<32x1xf32>
    %431 = vector.extract_strided_slice %1 {offsets = [0, 2], sizes = [32, 1], strides = [1, 1]} : vector<32x6xf32> to vector<32x1xf32>
    %cst_127 = arith.constant dense<0.000000e+00> : vector<32x128xf32>
    %432 = tpu.matmul %428, %427, %cst_127 {dimension_numbers = #tpu.dot_dimension_numbers<[1], [0], [0], [1], [0, 0, 1, 1], [], []>} : vector<32x8xf32>, vector<8x128xf32>, vector<32x128xf32> -> vector<32x128xf32>
    %433 = vector.broadcast %429 : vector<32x1xf32> to vector<32x128xf32>
    %434 = arith.addf %432, %433 : vector<32x128xf32>
    %cst_128 = arith.constant dense<0.000000e+00> : vector<128xf32>
    %435 = vector.multi_reduction <add>, %434, %cst_128 [0] : vector<32x128xf32> to vector<128xf32>
    %436 = vector.shape_cast %435 : vector<128xf32> to vector<1x128xf32>
    %cst_129 = arith.constant 3.200000e+01 : f32
    %437 = vector.broadcast %cst_129 : f32 to vector<1x128xf32>
    %438 = arith.divf %436, %437 : vector<1x128xf32>
    %439 = vector.broadcast %438 : vector<1x128xf32> to vector<32x128xf32>
    %440 = arith.subf %434, %439 : vector<32x128xf32>
    %441 = arith.mulf %440, %440 : vector<32x128xf32>
    %cst_130 = arith.constant dense<0.000000e+00> : vector<128xf32>
    %442 = vector.multi_reduction <add>, %441, %cst_130 [0] : vector<32x128xf32> to vector<128xf32>
    %443 = vector.shape_cast %442 : vector<128xf32> to vector<1x128xf32>
    %cst_131 = arith.constant 3.200000e+01 : f32
    %444 = vector.broadcast %cst_131 : f32 to vector<1x128xf32>
    %445 = arith.divf %443, %444 : vector<1x128xf32>
    %446 = vector.broadcast %438 : vector<1x128xf32> to vector<32x128xf32>
    %447 = arith.subf %434, %446 : vector<32x128xf32>
    %cst_132 = arith.constant 9.99999974E-6 : f32
    %448 = vector.broadcast %cst_132 : f32 to vector<1x128xf32>
    %449 = arith.addf %445, %448 : vector<1x128xf32>
    %450 = math.rsqrt %449 : vector<1x128xf32>
    %451 = vector.broadcast %450 : vector<1x128xf32> to vector<32x128xf32>
    %452 = arith.mulf %447, %451 : vector<32x128xf32>
    %453 = vector.broadcast %430 : vector<32x1xf32> to vector<32x128xf32>
    %454 = arith.mulf %452, %453 : vector<32x128xf32>
    %455 = vector.broadcast %431 : vector<32x1xf32> to vector<32x128xf32>
    %456 = arith.addf %454, %455 : vector<32x128xf32>
    %cst_133 = arith.constant 0.000000e+00 : f32
    %457 = vector.broadcast %cst_133 : f32 to vector<32x128xf32>
    %458 = arith.maximumf %456, %457 : vector<32x128xf32>
    %c0_134 = arith.constant 0 : index
    %c0_135 = arith.constant 0 : index
    %459 = vector.load %arg4[%c0_134, %c0_135] : memref<16x32xf32, #tpu.memory_space<vmem>>, vector<16x32xf32>
    %460 = vector.extract_strided_slice %1 {offsets = [0, 3], sizes = [16, 1], strides = [1, 1]} : vector<32x6xf32> to vector<16x1xf32>
    %461 = vector.extract_strided_slice %1 {offsets = [0, 4], sizes = [16, 1], strides = [1, 1]} : vector<32x6xf32> to vector<16x1xf32>
    %462 = vector.extract_strided_slice %1 {offsets = [0, 5], sizes = [16, 1], strides = [1, 1]} : vector<32x6xf32> to vector<16x1xf32>
    %cst_136 = arith.constant dense<0.000000e+00> : vector<16x128xf32>
    %463 = tpu.matmul %459, %458, %cst_136 {dimension_numbers = #tpu.dot_dimension_numbers<[1], [0], [0], [1], [0, 0, 1, 1], [], []>} : vector<16x32xf32>, vector<32x128xf32>, vector<16x128xf32> -> vector<16x128xf32>
    %464 = vector.broadcast %460 : vector<16x1xf32> to vector<16x128xf32>
    %465 = arith.addf %463, %464 : vector<16x128xf32>
    %cst_137 = arith.constant dense<0.000000e+00> : vector<128xf32>
    %466 = vector.multi_reduction <add>, %465, %cst_137 [0] : vector<16x128xf32> to vector<128xf32>
    %467 = vector.shape_cast %466 : vector<128xf32> to vector<1x128xf32>
    %cst_138 = arith.constant 1.600000e+01 : f32
    %468 = vector.broadcast %cst_138 : f32 to vector<1x128xf32>
    %469 = arith.divf %467, %468 : vector<1x128xf32>
    %470 = vector.broadcast %469 : vector<1x128xf32> to vector<16x128xf32>
    %471 = arith.subf %465, %470 : vector<16x128xf32>
    %472 = arith.mulf %471, %471 : vector<16x128xf32>
    %cst_139 = arith.constant dense<0.000000e+00> : vector<128xf32>
    %473 = vector.multi_reduction <add>, %472, %cst_139 [0] : vector<16x128xf32> to vector<128xf32>
    %474 = vector.shape_cast %473 : vector<128xf32> to vector<1x128xf32>
    %cst_140 = arith.constant 1.600000e+01 : f32
    %475 = vector.broadcast %cst_140 : f32 to vector<1x128xf32>
    %476 = arith.divf %474, %475 : vector<1x128xf32>
    %477 = vector.broadcast %469 : vector<1x128xf32> to vector<16x128xf32>
    %478 = arith.subf %465, %477 : vector<16x128xf32>
    %cst_141 = arith.constant 9.99999974E-6 : f32
    %479 = vector.broadcast %cst_141 : f32 to vector<1x128xf32>
    %480 = arith.addf %476, %479 : vector<1x128xf32>
    %481 = math.rsqrt %480 : vector<1x128xf32>
    %482 = vector.broadcast %481 : vector<1x128xf32> to vector<16x128xf32>
    %483 = arith.mulf %478, %482 : vector<16x128xf32>
    %484 = vector.broadcast %461 : vector<16x1xf32> to vector<16x128xf32>
    %485 = arith.mulf %483, %484 : vector<16x128xf32>
    %486 = vector.broadcast %462 : vector<16x1xf32> to vector<16x128xf32>
    %487 = arith.addf %485, %486 : vector<16x128xf32>
    %cst_142 = arith.constant 0.000000e+00 : f32
    %488 = vector.broadcast %cst_142 : f32 to vector<16x128xf32>
    %489 = arith.maximumf %487, %488 : vector<16x128xf32>
    %490 = vector.broadcast %425 : vector<1x128xf32> to vector<16x128xf32>
    %491 = arith.mulf %489, %490 : vector<16x128xf32>
    %c7_i32 = arith.constant 7 : i32
    %492 = vector.broadcast %c7_i32 : i32 to vector<1x128xi32>
    %493 = arith.cmpi sgt, %0, %492 : vector<1x128xi32>
    %494 = arith.extui %493 : vector<1x128xi1> to vector<1x128xi32>
    %495 = arith.sitofp %494 : vector<1x128xi32> to vector<1x128xf32>
    %c7 = arith.constant 7 : index
    %c0_143 = arith.constant 0 : index
    %c0_144 = arith.constant 0 : index
    %496 = vector.load %arg1[%c7, %c0_143, %c0_144] : memref<9x8x128xf32, #tpu.memory_space<vmem>>, vector<1x8x128xf32>
    %497 = vector.shape_cast %496 : vector<1x8x128xf32> to vector<8x128xf32>
    %c0_145 = arith.constant 0 : index
    %c0_146 = arith.constant 0 : index
    %498 = vector.load %arg3[%c0_145, %c0_146] : memref<32x8xf32, #tpu.memory_space<vmem>>, vector<32x8xf32>
    %499 = vector.extract_strided_slice %1 {offsets = [0, 0], sizes = [32, 1], strides = [1, 1]} : vector<32x6xf32> to vector<32x1xf32>
    %500 = vector.extract_strided_slice %1 {offsets = [0, 1], sizes = [32, 1], strides = [1, 1]} : vector<32x6xf32> to vector<32x1xf32>
    %501 = vector.extract_strided_slice %1 {offsets = [0, 2], sizes = [32, 1], strides = [1, 1]} : vector<32x6xf32> to vector<32x1xf32>
    %cst_147 = arith.constant dense<0.000000e+00> : vector<32x128xf32>
    %502 = tpu.matmul %498, %497, %cst_147 {dimension_numbers = #tpu.dot_dimension_numbers<[1], [0], [0], [1], [0, 0, 1, 1], [], []>} : vector<32x8xf32>, vector<8x128xf32>, vector<32x128xf32> -> vector<32x128xf32>
    %503 = vector.broadcast %499 : vector<32x1xf32> to vector<32x128xf32>
    %504 = arith.addf %502, %503 : vector<32x128xf32>
    %cst_148 = arith.constant dense<0.000000e+00> : vector<128xf32>
    %505 = vector.multi_reduction <add>, %504, %cst_148 [0] : vector<32x128xf32> to vector<128xf32>
    %506 = vector.shape_cast %505 : vector<128xf32> to vector<1x128xf32>
    %cst_149 = arith.constant 3.200000e+01 : f32
    %507 = vector.broadcast %cst_149 : f32 to vector<1x128xf32>
    %508 = arith.divf %506, %507 : vector<1x128xf32>
    %509 = vector.broadcast %508 : vector<1x128xf32> to vector<32x128xf32>
    %510 = arith.subf %504, %509 : vector<32x128xf32>
    %511 = arith.mulf %510, %510 : vector<32x128xf32>
    %cst_150 = arith.constant dense<0.000000e+00> : vector<128xf32>
    %512 = vector.multi_reduction <add>, %511, %cst_150 [0] : vector<32x128xf32> to vector<128xf32>
    %513 = vector.shape_cast %512 : vector<128xf32> to vector<1x128xf32>
    %cst_151 = arith.constant 3.200000e+01 : f32
    %514 = vector.broadcast %cst_151 : f32 to vector<1x128xf32>
    %515 = arith.divf %513, %514 : vector<1x128xf32>
    %516 = vector.broadcast %508 : vector<1x128xf32> to vector<32x128xf32>
    %517 = arith.subf %504, %516 : vector<32x128xf32>
    %cst_152 = arith.constant 9.99999974E-6 : f32
    %518 = vector.broadcast %cst_152 : f32 to vector<1x128xf32>
    %519 = arith.addf %515, %518 : vector<1x128xf32>
    %520 = math.rsqrt %519 : vector<1x128xf32>
    %521 = vector.broadcast %520 : vector<1x128xf32> to vector<32x128xf32>
    %522 = arith.mulf %517, %521 : vector<32x128xf32>
    %523 = vector.broadcast %500 : vector<32x1xf32> to vector<32x128xf32>
    %524 = arith.mulf %522, %523 : vector<32x128xf32>
    %525 = vector.broadcast %501 : vector<32x1xf32> to vector<32x128xf32>
    %526 = arith.addf %524, %525 : vector<32x128xf32>
    %cst_153 = arith.constant 0.000000e+00 : f32
    %527 = vector.broadcast %cst_153 : f32 to vector<32x128xf32>
    %528 = arith.maximumf %526, %527 : vector<32x128xf32>
    %c0_154 = arith.constant 0 : index
    %c0_155 = arith.constant 0 : index
    %529 = vector.load %arg4[%c0_154, %c0_155] : memref<16x32xf32, #tpu.memory_space<vmem>>, vector<16x32xf32>
    %530 = vector.extract_strided_slice %1 {offsets = [0, 3], sizes = [16, 1], strides = [1, 1]} : vector<32x6xf32> to vector<16x1xf32>
    %531 = vector.extract_strided_slice %1 {offsets = [0, 4], sizes = [16, 1], strides = [1, 1]} : vector<32x6xf32> to vector<16x1xf32>
    %532 = vector.extract_strided_slice %1 {offsets = [0, 5], sizes = [16, 1], strides = [1, 1]} : vector<32x6xf32> to vector<16x1xf32>
    %cst_156 = arith.constant dense<0.000000e+00> : vector<16x128xf32>
    %533 = tpu.matmul %529, %528, %cst_156 {dimension_numbers = #tpu.dot_dimension_numbers<[1], [0], [0], [1], [0, 0, 1, 1], [], []>} : vector<16x32xf32>, vector<32x128xf32>, vector<16x128xf32> -> vector<16x128xf32>
    %534 = vector.broadcast %530 : vector<16x1xf32> to vector<16x128xf32>
    %535 = arith.addf %533, %534 : vector<16x128xf32>
    %cst_157 = arith.constant dense<0.000000e+00> : vector<128xf32>
    %536 = vector.multi_reduction <add>, %535, %cst_157 [0] : vector<16x128xf32> to vector<128xf32>
    %537 = vector.shape_cast %536 : vector<128xf32> to vector<1x128xf32>
    %cst_158 = arith.constant 1.600000e+01 : f32
    %538 = vector.broadcast %cst_158 : f32 to vector<1x128xf32>
    %539 = arith.divf %537, %538 : vector<1x128xf32>
    %540 = vector.broadcast %539 : vector<1x128xf32> to vector<16x128xf32>
    %541 = arith.subf %535, %540 : vector<16x128xf32>
    %542 = arith.mulf %541, %541 : vector<16x128xf32>
    %cst_159 = arith.constant dense<0.000000e+00> : vector<128xf32>
    %543 = vector.multi_reduction <add>, %542, %cst_159 [0] : vector<16x128xf32> to vector<128xf32>
    %544 = vector.shape_cast %543 : vector<128xf32> to vector<1x128xf32>
    %cst_160 = arith.constant 1.600000e+01 : f32
    %545 = vector.broadcast %cst_160 : f32 to vector<1x128xf32>
    %546 = arith.divf %544, %545 : vector<1x128xf32>
    %547 = vector.broadcast %539 : vector<1x128xf32> to vector<16x128xf32>
    %548 = arith.subf %535, %547 : vector<16x128xf32>
    %cst_161 = arith.constant 9.99999974E-6 : f32
    %549 = vector.broadcast %cst_161 : f32 to vector<1x128xf32>
    %550 = arith.addf %546, %549 : vector<1x128xf32>
    %551 = math.rsqrt %550 : vector<1x128xf32>
    %552 = vector.broadcast %551 : vector<1x128xf32> to vector<16x128xf32>
    %553 = arith.mulf %548, %552 : vector<16x128xf32>
    %554 = vector.broadcast %531 : vector<16x1xf32> to vector<16x128xf32>
    %555 = arith.mulf %553, %554 : vector<16x128xf32>
    %556 = vector.broadcast %532 : vector<16x1xf32> to vector<16x128xf32>
    %557 = arith.addf %555, %556 : vector<16x128xf32>
    %cst_162 = arith.constant 0.000000e+00 : f32
    %558 = vector.broadcast %cst_162 : f32 to vector<16x128xf32>
    %559 = arith.maximumf %557, %558 : vector<16x128xf32>
    %560 = vector.broadcast %495 : vector<1x128xf32> to vector<16x128xf32>
    %561 = arith.mulf %559, %560 : vector<16x128xf32>
    %c8_i32 = arith.constant 8 : i32
    %562 = vector.broadcast %c8_i32 : i32 to vector<1x128xi32>
    %563 = arith.cmpi sgt, %0, %562 : vector<1x128xi32>
    %564 = arith.extui %563 : vector<1x128xi1> to vector<1x128xi32>
    %565 = arith.sitofp %564 : vector<1x128xi32> to vector<1x128xf32>
    %c8 = arith.constant 8 : index
    %c0_163 = arith.constant 0 : index
    %c0_164 = arith.constant 0 : index
    %566 = vector.load %arg1[%c8, %c0_163, %c0_164] : memref<9x8x128xf32, #tpu.memory_space<vmem>>, vector<1x8x128xf32>
    %567 = vector.shape_cast %566 : vector<1x8x128xf32> to vector<8x128xf32>
    %c0_165 = arith.constant 0 : index
    %c0_166 = arith.constant 0 : index
    %568 = vector.load %arg3[%c0_165, %c0_166] : memref<32x8xf32, #tpu.memory_space<vmem>>, vector<32x8xf32>
    %569 = vector.extract_strided_slice %1 {offsets = [0, 0], sizes = [32, 1], strides = [1, 1]} : vector<32x6xf32> to vector<32x1xf32>
    %570 = vector.extract_strided_slice %1 {offsets = [0, 1], sizes = [32, 1], strides = [1, 1]} : vector<32x6xf32> to vector<32x1xf32>
    %571 = vector.extract_strided_slice %1 {offsets = [0, 2], sizes = [32, 1], strides = [1, 1]} : vector<32x6xf32> to vector<32x1xf32>
    %cst_167 = arith.constant dense<0.000000e+00> : vector<32x128xf32>
    %572 = tpu.matmul %568, %567, %cst_167 {dimension_numbers = #tpu.dot_dimension_numbers<[1], [0], [0], [1], [0, 0, 1, 1], [], []>} : vector<32x8xf32>, vector<8x128xf32>, vector<32x128xf32> -> vector<32x128xf32>
    %573 = vector.broadcast %569 : vector<32x1xf32> to vector<32x128xf32>
    %574 = arith.addf %572, %573 : vector<32x128xf32>
    %cst_168 = arith.constant dense<0.000000e+00> : vector<128xf32>
    %575 = vector.multi_reduction <add>, %574, %cst_168 [0] : vector<32x128xf32> to vector<128xf32>
    %576 = vector.shape_cast %575 : vector<128xf32> to vector<1x128xf32>
    %cst_169 = arith.constant 3.200000e+01 : f32
    %577 = vector.broadcast %cst_169 : f32 to vector<1x128xf32>
    %578 = arith.divf %576, %577 : vector<1x128xf32>
    %579 = vector.broadcast %578 : vector<1x128xf32> to vector<32x128xf32>
    %580 = arith.subf %574, %579 : vector<32x128xf32>
    %581 = arith.mulf %580, %580 : vector<32x128xf32>
    %cst_170 = arith.constant dense<0.000000e+00> : vector<128xf32>
    %582 = vector.multi_reduction <add>, %581, %cst_170 [0] : vector<32x128xf32> to vector<128xf32>
    %583 = vector.shape_cast %582 : vector<128xf32> to vector<1x128xf32>
    %cst_171 = arith.constant 3.200000e+01 : f32
    %584 = vector.broadcast %cst_171 : f32 to vector<1x128xf32>
    %585 = arith.divf %583, %584 : vector<1x128xf32>
    %586 = vector.broadcast %578 : vector<1x128xf32> to vector<32x128xf32>
    %587 = arith.subf %574, %586 : vector<32x128xf32>
    %cst_172 = arith.constant 9.99999974E-6 : f32
    %588 = vector.broadcast %cst_172 : f32 to vector<1x128xf32>
    %589 = arith.addf %585, %588 : vector<1x128xf32>
    %590 = math.rsqrt %589 : vector<1x128xf32>
    %591 = vector.broadcast %590 : vector<1x128xf32> to vector<32x128xf32>
    %592 = arith.mulf %587, %591 : vector<32x128xf32>
    %593 = vector.broadcast %570 : vector<32x1xf32> to vector<32x128xf32>
    %594 = arith.mulf %592, %593 : vector<32x128xf32>
    %595 = vector.broadcast %571 : vector<32x1xf32> to vector<32x128xf32>
    %596 = arith.addf %594, %595 : vector<32x128xf32>
    %cst_173 = arith.constant 0.000000e+00 : f32
    %597 = vector.broadcast %cst_173 : f32 to vector<32x128xf32>
    %598 = arith.maximumf %596, %597 : vector<32x128xf32>
    %c0_174 = arith.constant 0 : index
    %c0_175 = arith.constant 0 : index
    %599 = vector.load %arg4[%c0_174, %c0_175] : memref<16x32xf32, #tpu.memory_space<vmem>>, vector<16x32xf32>
    %600 = vector.extract_strided_slice %1 {offsets = [0, 3], sizes = [16, 1], strides = [1, 1]} : vector<32x6xf32> to vector<16x1xf32>
    %601 = vector.extract_strided_slice %1 {offsets = [0, 4], sizes = [16, 1], strides = [1, 1]} : vector<32x6xf32> to vector<16x1xf32>
    %602 = vector.extract_strided_slice %1 {offsets = [0, 5], sizes = [16, 1], strides = [1, 1]} : vector<32x6xf32> to vector<16x1xf32>
    %cst_176 = arith.constant dense<0.000000e+00> : vector<16x128xf32>
    %603 = tpu.matmul %599, %598, %cst_176 {dimension_numbers = #tpu.dot_dimension_numbers<[1], [0], [0], [1], [0, 0, 1, 1], [], []>} : vector<16x32xf32>, vector<32x128xf32>, vector<16x128xf32> -> vector<16x128xf32>
    %604 = vector.broadcast %600 : vector<16x1xf32> to vector<16x128xf32>
    %605 = arith.addf %603, %604 : vector<16x128xf32>
    %cst_177 = arith.constant dense<0.000000e+00> : vector<128xf32>
    %606 = vector.multi_reduction <add>, %605, %cst_177 [0] : vector<16x128xf32> to vector<128xf32>
    %607 = vector.shape_cast %606 : vector<128xf32> to vector<1x128xf32>
    %cst_178 = arith.constant 1.600000e+01 : f32
    %608 = vector.broadcast %cst_178 : f32 to vector<1x128xf32>
    %609 = arith.divf %607, %608 : vector<1x128xf32>
    %610 = vector.broadcast %609 : vector<1x128xf32> to vector<16x128xf32>
    %611 = arith.subf %605, %610 : vector<16x128xf32>
    %612 = arith.mulf %611, %611 : vector<16x128xf32>
    %cst_179 = arith.constant dense<0.000000e+00> : vector<128xf32>
    %613 = vector.multi_reduction <add>, %612, %cst_179 [0] : vector<16x128xf32> to vector<128xf32>
    %614 = vector.shape_cast %613 : vector<128xf32> to vector<1x128xf32>
    %cst_180 = arith.constant 1.600000e+01 : f32
    %615 = vector.broadcast %cst_180 : f32 to vector<1x128xf32>
    %616 = arith.divf %614, %615 : vector<1x128xf32>
    %617 = vector.broadcast %609 : vector<1x128xf32> to vector<16x128xf32>
    %618 = arith.subf %605, %617 : vector<16x128xf32>
    %cst_181 = arith.constant 9.99999974E-6 : f32
    %619 = vector.broadcast %cst_181 : f32 to vector<1x128xf32>
    %620 = arith.addf %616, %619 : vector<1x128xf32>
    %621 = math.rsqrt %620 : vector<1x128xf32>
    %622 = vector.broadcast %621 : vector<1x128xf32> to vector<16x128xf32>
    %623 = arith.mulf %618, %622 : vector<16x128xf32>
    %624 = vector.broadcast %601 : vector<16x1xf32> to vector<16x128xf32>
    %625 = arith.mulf %623, %624 : vector<16x128xf32>
    %626 = vector.broadcast %602 : vector<16x1xf32> to vector<16x128xf32>
    %627 = arith.addf %625, %626 : vector<16x128xf32>
    %cst_182 = arith.constant 0.000000e+00 : f32
    %628 = vector.broadcast %cst_182 : f32 to vector<16x128xf32>
    %629 = arith.maximumf %627, %628 : vector<16x128xf32>
    %630 = vector.broadcast %565 : vector<1x128xf32> to vector<16x128xf32>
    %631 = arith.mulf %629, %630 : vector<16x128xf32>
    %632 = arith.addf %71, %141 : vector<16x128xf32>
    %633 = arith.addf %211, %281 : vector<16x128xf32>
    %634 = arith.addf %351, %421 : vector<16x128xf32>
    %635 = arith.addf %491, %561 : vector<16x128xf32>
    %636 = arith.addf %632, %633 : vector<16x128xf32>
    %637 = arith.addf %634, %635 : vector<16x128xf32>
    %638 = arith.addf %636, %637 : vector<16x128xf32>
    %639 = arith.addf %638, %631 : vector<16x128xf32>
    %c0_183 = arith.constant 0 : index
    %c0_184 = arith.constant 0 : index
    %640 = vector.load %arg6[%c0_183, %c0_184] : memref<16x128xf32, #tpu.memory_space<vmem>>, vector<16x128xf32>
    tpu.vector_store %arg6[%c0_183, %c0_184], %639 {strides = array<i32>} : memref<16x128xf32, #tpu.memory_space<vmem>>, vector<16x128xf32>,
    return
  }
  func.func @transform_0(%arg0: i32) -> (i32, i32, i32) {
    %c0_i32 = arith.constant 0 : i32
    %c0_i32_0 = arith.constant 0 : i32
    %c0_i32_1 = arith.constant 0 : i32
    return %c0_i32, %c0_i32_0, %arg0 : i32, i32, i32
  }
  func.func @transform_1(%arg0: i32) -> (i32, i32) {
    %c0_i32 = arith.constant 0 : i32
    %c0_i32_0 = arith.constant 0 : i32
    return %c0_i32, %arg0 : i32, i32
  }
  func.func @transform_2(%arg0: i32) -> (i32, i32) {
    %c0_i32 = arith.constant 0 : i32
    %c0_i32_0 = arith.constant 0 : i32
    %c0_i32_1 = arith.constant 0 : i32
    return %c0_i32, %c0_i32_0 : i32, i32
  }
  func.func @transform_3(%arg0: i32) -> (i32, i32) {
    %c0_i32 = arith.constant 0 : i32
    %c0_i32_0 = arith.constant 0 : i32
    %c0_i32_1 = arith.constant 0 : i32
    return %c0_i32, %c0_i32_0 : i32, i32
  }
  func.func @transform_4(%arg0: i32) -> (i32, i32) {
    %c0_i32 = arith.constant 0 : i32
    %c0_i32_0 = arith.constant 0 : i32
    %c0_i32_1 = arith.constant 0 : i32
    return %c0_i32, %c0_i32_0 : i32, i32
  }
  func.func @transform_5(%arg0: i32) -> (i32, i32) {
    %c0_i32 = arith.constant 0 : i32
    %c0_i32_0 = arith.constant 0 : i32
    return %c0_i32, %arg0 : i32, i32
  }
}

</mosaic_0001>

<llo_original>
// kernel: tpu_custom_call.1
$region0: #{tpu_custom_call.1}
  #allocation0 [shape = 'u32[]', space=smem, size = 0x4, offset = 0x4, fixed_abs, tag = 'smem constant byte address 0x4 - core index']
  #allocation1 [shape = 'u32[144,128]{1,0:T(1,128)}', space=vmem, size = 0x12000, scoped, tag = 'internal scratch']
  %s0 = inlined_call_operand.vmem [shape: f32[9,8,128], index: 0, kind: input, shape index: {}]
  %s1 = inlined_call_operand.vmem [shape: s32[1,128], index: 1, kind: input, shape index: {}]
  %s2 = inlined_call_operand.vmem [shape: f32[32,8], index: 2, kind: input, shape index: {}]
  %s3 = inlined_call_operand.vmem [shape: f32[16,32], index: 3, kind: input, shape index: {}]
  %s4 = inlined_call_operand.vmem [shape: f32[32,6], index: 4, kind: input, shape index: {}]
  %s5 = inlined_call_operand.hbm [shape: f32[16,128], index: 5, kind: output, shape index: {}]
  %s6 = sld [smem:[#allocation0]]
  $region30: #{tpu_custom_call.1} parent=0
    _
  %s8 = ssub.s32 1, %s6
  %s9 = scalar_select 0, %s8, %s6
  $region1: #{tpu_custom_call.1} parent=0
    #allocation2 [shape = 'u8[8192]{0}', space=vmem, size = 0x2000, scoped, tag = 'output window, operand 0, single buffered']
    #allocation3 [shape = 's32[1]{0}', space=sflag, size = 0x4, scoped, tag = 'scoped memory for tpu_custom_call.1']
    %10 = vsyncpa [#allocation3], 0
    // Predicated region
    $region2: #{tpu_custom_call.1} parent=1 // pred_check
      _
    $region3: #{tpu_custom_call.1} parent=1 // pred_check_branch
      %12 = sbr.rel (0) target = $region5
    $region4: #{tpu_custom_call.1} parent=1 // pred_region
      _
    $region5: #{tpu_custom_call.1} parent=1 // pred_fallthru
      _
    // Predicated region
    $region6: #{tpu_custom_call.1} parent=1 // pred_check
      _
    $region7: #{tpu_custom_call.1} parent=1 // pred_check_branch
      %14 = sbr.rel (0) target = $region9
    $region8: #{tpu_custom_call.1} parent=1 // pred_region
      _
    $region9: #{tpu_custom_call.1} parent=1 // pred_fallthru
      _
    // Predicated region
    $region10: #{tpu_custom_call.1} parent=1 // pred_check
      _
    $region11: #{tpu_custom_call.1} parent=1 // pred_check_branch
      %16 = sbr.rel (0) target = $region13
    $region12: #{tpu_custom_call.1} parent=1 // pred_region
      _
    $region13: #{tpu_custom_call.1} parent=1 // pred_fallthru
      _
    // Predicated region
    $region14: #{tpu_custom_call.1} parent=1 // pred_check
      _
    $region15: #{tpu_custom_call.1} parent=1 // pred_check_branch
      %18 = sbr.rel (0) target = $region17
    $region16: #{tpu_custom_call.1} parent=1 // pred_region
      _
    $region17: #{tpu_custom_call.1} parent=1 // pred_fallthru
      _
    // Predicated region
    $region18: #{tpu_custom_call.1} parent=1 // pred_check
      _
    $region19: #{tpu_custom_call.1} parent=1 // pred_check_branch
      %20 = sbr.rel (0) target = $region21
    $region20: #{tpu_custom_call.1} parent=1 // pred_region
      _
    $region21: #{tpu_custom_call.1} parent=1 // pred_fallthru
      _
    %v21 = vld [vmem:[%s1] sm:$0x1]
    %v22 = vld [vmem:[%s4] sm:$0xff]
    %v23 = vld [vmem:[%s4 + $0x8] sm:$0xff]
    %v24 = vld [vmem:[%s4 + $0x10] sm:$0xff]
    %v25 = vld [vmem:[%s4 + $0x18] sm:$0xff]
    %vm26 = vcmp.gt.s32.totalorder %v21, 0
    %v27 = vsel %vm26, 1, 0
    %v28 = vcvt.s32.f32 %v27
    %v29 = vld [vmem:[%s0] sm:$0xff]
    %v30 = vld [vmem:[%s2] sm:$0xff]
    %v31 = vld [vmem:[%s2 + $0x8] sm:$0xff]
    %v32 = vld [vmem:[%s2 + $0x10] sm:$0xff]
    %v33 = vld [vmem:[%s2 + $0x18] sm:$0xff]
    %35 = vset.pattern.permute.xlu0 0
    %36 = vperm.xlu0 %35, %v22
    %v37 = vpop.permute.xlu0 %36
    %40 = vset.pattern.permute.xlu0 0
    %41 = vperm.xlu0 %40, %v23
    %v42 = vpop.permute.xlu0 %41
    %45 = vset.pattern.permute.xlu0 0
    %46 = vperm.xlu0 %45, %v24
    %v47 = vpop.permute.xlu0 %46
    %50 = vset.pattern.permute.xlu0 0
    %51 = vperm.xlu0 %50, %v25
    %v52 = vpop.permute.xlu0 %51
    %vm54 = vcmask 64512
    %v56 = vsel %vm54, %v30, 0
    %v59 = vsel %vm54, %v31, 0
    %v62 = vsel %vm54, %v32, 0
    %v65 = vsel %vm54, %v33, 0
    %67 = vmatprep.subr.mxu0 0.0
    %68 = vmatpush1.msra.mxu0 %v29
    %69 = vmatprep.subr.mxu0 0.0
    %70 = vmatpush1.msra.mxu0 0.0
    %71 = vmatprep.subr.mxu0 0.0
    %72 = vmatpush1.msra.mxu0 0.0
    %73 = vmatprep.subr.mxu0 0.0
    %74 = vmatpush1.msra.mxu0 0.0
    %75 = vmatprep.subr.mxu0 0.0
    %76 = vmatpush1.msra.mxu0 0.0
    %77 = vmatprep.subr.mxu0 0.0
    %78 = vmatpush1.msra.mxu0 0.0
    %79 = vmatprep.subr.mxu0 0.0
    %80 = vmatpush1.msra.mxu0 0.0
    %81 = vmatprep.subr.mxu0 0.0
    %82 = vmatpush1.msra.mxu0 0.0
    %83 = vmatprep.subr.mxu0 0.0
    %84 = vmatpush1.msra.mxu0 0.0
    %85 = vmatprep.subr.mxu0 0.0
    %86 = vmatpush1.msra.mxu0 0.0
    %87 = vmatprep.subr.mxu0 0.0
    %88 = vmatpush1.msra.mxu0 0.0
    %89 = vmatprep.subr.mxu0 0.0
    %90 = vmatpush1.msra.mxu0 0.0
    %91 = vmatprep.subr.mxu0 0.0
    %92 = vmatpush1.msra.mxu0 0.0
    %93 = vmatprep.subr.mxu0 0.0
    %94 = vmatpush1.msra.mxu0 0.0
    %95 = vmatprep.subr.mxu0 0.0
    %96 = vmatpush1.msra.mxu0 0.0
    %97 = vmatprep.subr.mxu0 0.0
    %98 = vmatpush1.msra.mxu0 0.0
    %99 = vmatprep.subr.mxu0 0.0
    %100 = vmatpush1.msra.mxu0 0.0
    %101 = vmatprep.subr.mxu0 0.0
    %102 = vmatpush1.msra.mxu0 0.0
    %103 = vmatprep.subr.mxu0 0.0
    %104 = vmatpush1.msra.mxu0 0.0
    %105 = vmatprep.subr.mxu0 0.0
    %106 = vmatpush1.msra.mxu0 0.0
    %107 = vmatprep.subr.mxu0 0.0
    %108 = vmatpush1.msra.mxu0 0.0
    %109 = vmatprep.subr.mxu0 0.0
    %110 = vmatpush1.msra.mxu0 0.0
    %111 = vmatprep.subr.mxu0 0.0
    %112 = vmatpush1.msra.mxu0 0.0
    %113 = vmatprep.subr.mxu0 0.0
    %114 = vmatpush1.msra.mxu0 0.0
    %115 = vmatprep.subr.mxu0 0.0
    %116 = vmatpush1.msra.mxu0 0.0
    %117 = vmatprep.subr.mxu0 0.0
    %118 = vmatpush1.msra.mxu0 0.0
    %119 = vmatprep.subr.mxu0 0.0
    %120 = vmatpush1.msra.mxu0 0.0
    %121 = vmatprep.subr.mxu0 0.0
    %122 = vmatpush1.msra.mxu0 0.0
    %123 = vmatprep.subr.mxu0 0.0
    %124 = vmatpush1.msra.mxu0 0.0
    %125 = vmatprep.subr.mxu0 0.0
    %126 = vmatpush1.msra.mxu0 0.0
    %127 = vmatprep.subr.mxu0 0.0
    %128 = vmatpush1.msra.mxu0 0.0
    %129 = vmatprep.subr.mxu0 0.0
    %130 = vmatpush1.msra.mxu0 0.0
    %131 = vmatprep.mubr.f32.mxu0 0.0
    %132 = vmatmul.mubr.f32.gmra.mrb[0].mxu0 %v56
    %v133 = vpop.f32.mrb[0].mxu0
    %v134 = vadd.f32 %v37, %v133
    %v135 = vpop.f32.mrb[0].mxu0
    %136 = vmatprep.mubr.f32.mxu0 0.0
    %137 = vmatmul.mubr.f32.gmra.mrb[0].mxu0 %v59
    %v138 = vpop.f32.mrb[0].mxu0
    %v139 = vadd.f32 %v42, %v138
    %v140 = vpop.f32.mrb[0].mxu0
    %141 = vmatprep.mubr.f32.mxu0 0.0
    %142 = vmatmul.mubr.f32.gmra.mrb[0].mxu0 %v62
    %v143 = vpop.f32.mrb[0].mxu0
    %v144 = vadd.f32 %v47, %v143
    %v145 = vpop.f32.mrb[0].mxu0
    %146 = vmatprep.mubr.f32.mxu0 0.0
    %147 = vmatmul.mubr.f32.gmra.mrb[0].mxu0 %v65
    %v148 = vpop.f32.mrb[0].mxu0
    %v149 = vadd.f32 %v52, %v148
    %v150 = vpop.f32.mrb[0].mxu0
    %151 = vdwg.mxu0
    %v152 = vadd.f32 %v134, %v139
    %v153 = vadd.f32 %v152, %v144
    %v154 = vadd.f32 %v153, %v149
    %v155 = vrot.slane %v154, 4
    %v156 = vadd.f32 %v154, %v155
    %v157 = vrot.slane %v156, 2
    %v158 = vadd.f32 %v156, %v157
    %v159 = vrot.slane %v158, 1
    %v160 = vadd.f32 %v158, %v159
    %v161 = vrcp.pop 32.0
    %v162 = vmul.f32 %v160, %v161
    %v163 = vsub.f32 %v134, %v162
    %v164 = vsub.f32 %v139, %v162
    %v165 = vsub.f32 %v144, %v162
    %v166 = vsub.f32 %v149, %v162
    %v167 = vmul.f32 %v163, %v163
    %v168 = vmul.f32 %v164, %v164
    %v169 = vmul.f32 %v165, %v165
    %v170 = vmul.f32 %v166, %v166
    %v171 = vadd.f32 %v167, %v168
    %v172 = vadd.f32 %v171, %v169
    %v173 = vadd.f32 %v172, %v170
    %v174 = vrot.slane %v173, 4
    %v175 = vadd.f32 %v173, %v174
    %v176 = vrot.slane %v175, 2
    %v177 = vadd.f32 %v175, %v176
    %v178 = vrot.slane %v177, 1
    %v179 = vadd.f32 %v177, %v178
    %v180 = vmul.f32 %v179, %v161
    %v181 = vadd.f32 %v180, 1e-05
    %v182 = vrsqrt.pop %v181
    %v183 = vmul.f32 %v163, %v182
    %v184 = vmul.f32 %v164, %v182
    %v185 = vmul.f32 %v165, %v182
    %v186 = vmul.f32 %v166, %v182
    %187 = vset.pattern.permute.xlu0 1
    %188 = vperm.xlu0 %187, %v22
    %v189 = vpop.permute.xlu0 %188
    %191 = vset.pattern.permute.xlu0 1
    %192 = vperm.xlu0 %191, %v23
    %v193 = vpop.permute.xlu0 %192
    %195 = vset.pattern.permute.xlu0 1
    %196 = vperm.xlu0 %195, %v24
    %v197 = vpop.permute.xlu0 %196
    %199 = vset.pattern.permute.xlu0 1
    %200 = vperm.xlu0 %199, %v25
    %v201 = vpop.permute.xlu0 %200
    %v203 = vmul.f32 %v183, %v189
    %v204 = vmul.f32 %v184, %v193
    %v205 = vmul.f32 %v185, %v197
    %v206 = vmul.f32 %v186, %v201
    %207 = vset.pattern.permute.xlu0 2
    %208 = vperm.xlu0 %207, %v22
    %v209 = vpop.permute.xlu0 %208
    %211 = vset.pattern.permute.xlu0 2
    %212 = vperm.xlu0 %211, %v23
    %v213 = vpop.permute.xlu0 %212
    %215 = vset.pattern.permute.xlu0 2
    %216 = vperm.xlu0 %215, %v24
    %v217 = vpop.permute.xlu0 %216
    %219 = vset.pattern.permute.xlu0 2
    %220 = vperm.xlu0 %219, %v25
    %v221 = vpop.permute.xlu0 %220
    %v223 = vadd.f32 %v203, %v209
    %v224 = vadd.f32 %v204, %v213
    %v225 = vadd.f32 %v205, %v217
    %v226 = vadd.f32 %v206, %v221
    %v227 = vmax.f32 %v223, 0.0
    %v228 = vmax.f32 %v224, 0.0
    %v229 = vmax.f32 %v225, 0.0
    %v230 = vmax.f32 %v226, 0.0
    %v231 = vld [vmem:[%s3] sm:$0xff]
    %v232 = vld [vmem:[%s3 + $0x8] sm:$0xff]
    %233 = vset.pattern.permute.xlu0 3
    %234 = vperm.xlu0 %233, %v22
    %v235 = vpop.permute.xlu0 %234
    %237 = vset.pattern.permute.xlu0 3
    %238 = vperm.xlu0 %237, %v23
    %v239 = vpop.permute.xlu0 %238
    %vm241 = vcmask 261120
    %v243 = vsel %vm241, %v231, 0
    %v246 = vsel %vm241, %v232, 0
    %248 = vmatprep.subr.mxu0 0.0
    %249 = vmatpush1.msra.mxu0 %v227
    %250 = vmatprep.subr.mxu0 0.0
    %251 = vmatpush1.msra.mxu0 %v228
    %252 = vmatprep.subr.mxu0 0.0
    %253 = vmatpush1.msra.mxu0 %v229
    %254 = vmatprep.subr.mxu0 0.0
    %255 = vmatpush1.msra.mxu0 %v230
    %256 = vmatprep.subr.mxu0 0.0
    %257 = vmatpush1.msra.mxu0 0.0
    %258 = vmatprep.subr.mxu0 0.0
    %259 = vmatpush1.msra.mxu0 0.0
    %260 = vmatprep.subr.mxu0 0.0
    %261 = vmatpush1.msra.mxu0 0.0
    %262 = vmatprep.subr.mxu0 0.0
    %263 = vmatpush1.msra.mxu0 0.0
    %264 = vmatprep.subr.mxu0 0.0
    %265 = vmatpush1.msra.mxu0 0.0
    %266 = vmatprep.subr.mxu0 0.0
    %267 = vmatpush1.msra.mxu0 0.0
    %268 = vmatprep.subr.mxu0 0.0
    %269 = vmatpush1.msra.mxu0 0.0
    %270 = vmatprep.subr.mxu0 0.0
    %271 = vmatpush1.msra.mxu0 0.0
    %272 = vmatprep.subr.mxu0 0.0
    %273 = vmatpush1.msra.mxu0 0.0
    %274 = vmatprep.subr.mxu0 0.0
    %275 = vmatpush1.msra.mxu0 0.0
    %276 = vmatprep.subr.mxu0 0.0
    %277 = vmatpush1.msra.mxu0 0.0
    %278 = vmatprep.subr.mxu0 0.0
    %279 = vmatpush1.msra.mxu0 0.0
    %280 = vmatprep.subr.mxu0 0.0
    %281 = vmatpush1.msra.mxu0 0.0
    %282 = vmatprep.subr.mxu0 0.0
    %283 = vmatpush1.msra.mxu0 0.0
    %284 = vmatprep.subr.mxu0 0.0
    %285 = vmatpush1.msra.mxu0 0.0
    %286 = vmatprep.subr.mxu0 0.0
    %287 = vmatpush1.msra.mxu0 0.0
    %288 = vmatprep.subr.mxu0 0.0
    %289 = vmatpush1.msra.mxu0 0.0
    %290 = vmatprep.subr.mxu0 0.0
    %291 = vmatpush1.msra.mxu0 0.0
    %292 = vmatprep.subr.mxu0 0.0
    %293 = vmatpush1.msra.mxu0 0.0
    %294 = vmatprep.subr.mxu0 0.0
    %295 = vmatpush1.msra.mxu0 0.0
    %296 = vmatprep.subr.mxu0 0.0
    %297 = vmatpush1.msra.mxu0 0.0
    %298 = vmatprep.subr.mxu0 0.0
    %299 = vmatpush1.msra.mxu0 0.0
    %300 = vmatprep.subr.mxu0 0.0
    %301 = vmatpush1.msra.mxu0 0.0
    %302 = vmatprep.subr.mxu0 0.0
    %303 = vmatpush1.msra.mxu0 0.0
    %304 = vmatprep.subr.mxu0 0.0
    %305 = vmatpush1.msra.mxu0 0.0
    %306 = vmatprep.subr.mxu0 0.0
    %307 = vmatpush1.msra.mxu0 0.0
    %308 = vmatprep.subr.mxu0 0.0
    %309 = vmatpush1.msra.mxu0 0.0
    %310 = vmatprep.subr.mxu0 0.0
    %311 = vmatpush1.msra.mxu0 0.0
    %312 = vmatprep.mubr.f32.mxu0 0.0
    %313 = vmatmul.mubr.f32.gmra.mrb[0].mxu0 %v243
    %v314 = vpop.f32.mrb[0].mxu0
    %v315 = vadd.f32 %v235, %v314
    %v316 = vpop.f32.mrb[0].mxu0
    %317 = vmatprep.mubr.f32.mxu0 0.0
    %318 = vmatmul.mubr.f32.gmra.mrb[0].mxu0 %v246
    %v319 = vpop.f32.mrb[0].mxu0
    %v320 = vadd.f32 %v239, %v319
    %v321 = vpop.f32.mrb[0].mxu0
    %322 = vdwg.mxu0
    %v323 = vadd.f32 %v315, %v320
    %v324 = vrot.slane %v323, 4
    %v325 = vadd.f32 %v323, %v324
    %v326 = vrot.slane %v325, 2
    %v327 = vadd.f32 %v325, %v326
    %v328 = vrot.slane %v327, 1
    %v329 = vadd.f32 %v327, %v328
    %v330 = vrcp.pop 16.0
    %v331 = vmul.f32 %v329, %v330
    %v332 = vsub.f32 %v315, %v331
    %v333 = vsub.f32 %v320, %v331
    %v334 = vmul.f32 %v332, %v332
    %v335 = vmul.f32 %v333, %v333
    %v336 = vadd.f32 %v334, %v335
    %v337 = vrot.slane %v336, 4
    %v338 = vadd.f32 %v336, %v337
    %v339 = vrot.slane %v338, 2
    %v340 = vadd.f32 %v338, %v339
    %v341 = vrot.slane %v340, 1
    %v342 = vadd.f32 %v340, %v341
    %v343 = vmul.f32 %v342, %v330
    %v344 = vadd.f32 %v343, 1e-05
    %v345 = vrsqrt.pop %v344
    %v346 = vmul.f32 %v332, %v345
    %v347 = vmul.f32 %v333, %v345
    %348 = vset.pattern.permute.xlu0 4
    %349 = vperm.xlu0 %348, %v22
    %v350 = vpop.permute.xlu0 %349
    %352 = vset.pattern.permute.xlu0 4
    %353 = vperm.xlu0 %352, %v23
    %v354 = vpop.permute.xlu0 %353
    %v356 = vmul.f32 %v346, %v350
    %v357 = vmul.f32 %v347, %v354
    %358 = vset.pattern.permute.xlu0 5
    %359 = vperm.xlu0 %358, %v22
    %v360 = vpop.permute.xlu0 %359
    %362 = vset.pattern.permute.xlu0 5
    %363 = vperm.xlu0 %362, %v23
    %v364 = vpop.permute.xlu0 %363
    %v366 = vadd.f32 %v356, %v360
    %v367 = vadd.f32 %v357, %v364
    %v368 = vmax.f32 %v366, 0.0
    %v369 = vmax.f32 %v367, 0.0
    %v371 = vlaneseq
    %v372 = vshrl.u32 %v371, 7
    %v373 = vsub.s32 0, %v372
    %v374 = vrot.slane %v28, %v373
    %v376 = vmul.f32 %v368, %v374
    %v377 = vmul.f32 %v369, %v374
    %vm378 = vcmp.gt.s32.totalorder %v21, 1
    %v379 = vsel %vm378, 1, 0
    %v380 = vcvt.s32.f32 %v379
    %s381 = scalar_lea.vmem %s0, 8
    %v382 = vld [vmem:[%s381] sm:$0xff]
    %383 = vmatprep.subr.mxu0 0.0
    %384 = vmatpush1.msra.mxu0 %v382
    %385 = vmatprep.subr.mxu0 0.0
    %386 = vmatpush1.msra.mxu0 0.0
    %387 = vmatprep.subr.mxu0 0.0
    %388 = vmatpush1.msra.mxu0 0.0
    %389 = vmatprep.subr.mxu0 0.0
    %390 = vmatpush1.msra.mxu0 0.0
    %391 = vmatprep.subr.mxu0 0.0
    %392 = vmatpush1.msra.mxu0 0.0
    %393 = vmatprep.subr.mxu0 0.0
    %394 = vmatpush1.msra.mxu0 0.0
    %395 = vmatprep.subr.mxu0 0.0
    %396 = vmatpush1.msra.mxu0 0.0
    %397 = vmatprep.subr.mxu0 0.0
    %398 = vmatpush1.msra.mxu0 0.0
    %399 = vmatprep.subr.mxu0 0.0
    %400 = vmatpush1.msra.mxu0 0.0
    %401 = vmatprep.subr.mxu0 0.0
    %402 = vmatpush1.msra.mxu0 0.0
    %403 = vmatprep.subr.mxu0 0.0
    %404 = vmatpush1.msra.mxu0 0.0
    %405 = vmatprep.subr.mxu0 0.0
    %406 = vmatpush1.msra.mxu0 0.0
    %407 = vmatprep.subr.mxu0 0.0
    %408 = vmatpush1.msra.mxu0 0.0
    %409 = vmatprep.subr.mxu0 0.0
    %410 = vmatpush1.msra.mxu0 0.0
    %411 = vmatprep.subr.mxu0 0.0
    %412 = vmatpush1.msra.mxu0 0.0
    %413 = vmatprep.subr.mxu0 0.0
    %414 = vmatpush1.msra.mxu0 0.0
    %415 = vmatprep.subr.mxu0 0.0
    %416 = vmatpush1.msra.mxu0 0.0
    %417 = vmatprep.subr.mxu0 0.0
    %418 = vmatpush1.msra.mxu0 0.0
    %419 = vmatprep.subr.mxu0 0.0
    %420 = vmatpush1.msra.mxu0 0.0
    %421 = vmatprep.subr.mxu0 0.0
    %422 = vmatpush1.msra.mxu0 0.0
    %423 = vmatprep.subr.mxu0 0.0
    %424 = vmatpush1.msra.mxu0 0.0
    %425 = vmatprep.subr.mxu0 0.0
    %426 = vmatpush1.msra.mxu0 0.0
    %427 = vmatprep.subr.mxu0 0.0
    %428 = vmatpush1.msra.mxu0 0.0
    %429 = vmatprep.subr.mxu0 0.0
    %430 = vmatpush1.msra.mxu0 0.0
    %431 = vmatprep.subr.mxu0 0.0
    %432 = vmatpush1.msra.mxu0 0.0
    %433 = vmatprep.subr.mxu0 0.0
    %434 = vmatpush1.msra.mxu0 0.0
    %435 = vmatprep.subr.mxu0 0.0
    %436 = vmatpush1.msra.mxu0 0.0
    %437 = vmatprep.subr.mxu0 0.0
    %438 = vmatpush1.msra.mxu0 0.0
    %439 = vmatprep.subr.mxu0 0.0
    %440 = vmatpush1.msra.mxu0 0.0
    %441 = vmatprep.subr.mxu0 0.0
    %442 = vmatpush1.msra.mxu0 0.0
    %443 = vmatprep.subr.mxu0 0.0
    %444 = vmatpush1.msra.mxu0 0.0
    %445 = vmatprep.subr.mxu0 0.0
    %446 = vmatpush1.msra.mxu0 0.0
    %447 = vmatprep.mubr.f32.mxu0 0.0
    %448 = vmatmul.mubr.f32.gmra.mrb[0].mxu0 %v56
    %v449 = vpop.f32.mrb[0].mxu0
    %v450 = vadd.f32 %v37, %v449
    %v451 = vpop.f32.mrb[0].mxu0
    %452 = vmatprep.mubr.f32.mxu0 0.0
    %453 = vmatmul.mubr.f32.gmra.mrb[0].mxu0 %v59
    %v454 = vpop.f32.mrb[0].mxu0
    %v455 = vadd.f32 %v42, %v454
    %v456 = vpop.f32.mrb[0].mxu0
    %457 = vmatprep.mubr.f32.mxu0 0.0
    %458 = vmatmul.mubr.f32.gmra.mrb[0].mxu0 %v62
    %v459 = vpop.f32.mrb[0].mxu0
    %v460 = vadd.f32 %v47, %v459
    %v461 = vpop.f32.mrb[0].mxu0
    %462 = vmatprep.mubr.f32.mxu0 0.0
    %463 = vmatmul.mubr.f32.gmra.mrb[0].mxu0 %v65
    %v464 = vpop.f32.mrb[0].mxu0
    %v465 = vadd.f32 %v52, %v464
    %v466 = vpop.f32.mrb[0].mxu0
    %467 = vdwg.mxu0
    %v468 = vadd.f32 %v450, %v455
    %v469 = vadd.f32 %v468, %v460
    %v470 = vadd.f32 %v469, %v465
    %v471 = vrot.slane %v470, 4
    %v472 = vadd.f32 %v470, %v471
    %v473 = vrot.slane %v472, 2
    %v474 = vadd.f32 %v472, %v473
    %v475 = vrot.slane %v474, 1
    %v476 = vadd.f32 %v474, %v475
    %v477 = vmul.f32 %v476, %v161
    %v478 = vsub.f32 %v450, %v477
    %v479 = vsub.f32 %v455, %v477
    %v480 = vsub.f32 %v460, %v477
    %v481 = vsub.f32 %v465, %v477
    %v482 = vmul.f32 %v478, %v478
    %v483 = vmul.f32 %v479, %v479
    %v484 = vmul.f32 %v480, %v480
    %v485 = vmul.f32 %v481, %v481
    %v486 = vadd.f32 %v482, %v483
    %v487 = vadd.f32 %v486, %v484
    %v488 = vadd.f32 %v487, %v485
    %v489 = vrot.slane %v488, 4
    %v490 = vadd.f32 %v488, %v489
    %v491 = vrot.slane %v490, 2
    %v492 = vadd.f32 %v490, %v491
    %v493 = vrot.slane %v492, 1
    %v494 = vadd.f32 %v492, %v493
    %v495 = vmul.f32 %v494, %v161
    %v496 = vadd.f32 %v495, 1e-05
    %v497 = vrsqrt.pop %v496
    %v498 = vmul.f32 %v478, %v497
    %v499 = vmul.f32 %v479, %v497
    %v500 = vmul.f32 %v480, %v497
    %v501 = vmul.f32 %v481, %v497
    %v502 = vmul.f32 %v498, %v189
    %v503 = vmul.f32 %v499, %v193
    %v504 = vmul.f32 %v500, %v197
    %v505 = vmul.f32 %v501, %v201
    %v506 = vadd.f32 %v502, %v209
    %v507 = vadd.f32 %v503, %v213
    %v508 = vadd.f32 %v504, %v217
    %v509 = vadd.f32 %v505, %v221
    %v510 = vmax.f32 %v506, 0.0
    %v511 = vmax.f32 %v507, 0.0
    %v512 = vmax.f32 %v508, 0.0
    %v513 = vmax.f32 %v509, 0.0
    %514 = vmatprep.subr.mxu0 0.0
    %515 = vmatpush1.msra.mxu0 %v510
    %516 = vmatprep.subr.mxu0 0.0
    %517 = vmatpush1.msra.mxu0 %v511
    %518 = vmatprep.subr.mxu0 0.0
    %519 = vmatpush1.msra.mxu0 %v512
    %520 = vmatprep.subr.mxu0 0.0
    %521 = vmatpush1.msra.mxu0 %v513
    %522 = vmatprep.subr.mxu0 0.0
    %523 = vmatpush1.msra.mxu0 0.0
    %524 = vmatprep.subr.mxu0 0.0
    %525 = vmatpush1.msra.mxu0 0.0
    %526 = vmatprep.subr.mxu0 0.0
    %527 = vmatpush1.msra.mxu0 0.0
    %528 = vmatprep.subr.mxu0 0.0
    %529 = vmatpush1.msra.mxu0 0.0
    %530 = vmatprep.subr.mxu0 0.0
    %531 = vmatpush1.msra.mxu0 0.0
    %532 = vmatprep.subr.mxu0 0.0
    %533 = vmatpush1.msra.mxu0 0.0
    %534 = vmatprep.subr.mxu0 0.0
    %535 = vmatpush1.msra.mxu0 0.0
    %536 = vmatprep.subr.mxu0 0.0
    %537 = vmatpush1.msra.mxu0 0.0
    %538 = vmatprep.subr.mxu0 0.0
    %539 = vmatpush1.msra.mxu0 0.0
    %540 = vmatprep.subr.mxu0 0.0
    %541 = vmatpush1.msra.mxu0 0.0
    %542 = vmatprep.subr.mxu0 0.0
    %543 = vmatpush1.msra.mxu0 0.0
    %544 = vmatprep.subr.mxu0 0.0
    %545 = vmatpush1.msra.mxu0 0.0
    %546 = vmatprep.subr.mxu0 0.0
    %547 = vmatpush1.msra.mxu0 0.0
    %548 = vmatprep.subr.mxu0 0.0
    %549 = vmatpush1.msra.mxu0 0.0
    %550 = vmatprep.subr.mxu0 0.0
    %551 = vmatpush1.msra.mxu0 0.0
    %552 = vmatprep.subr.mxu0 0.0
    %553 = vmatpush1.msra.mxu0 0.0
    %554 = vmatprep.subr.mxu0 0.0
    %555 = vmatpush1.msra.mxu0 0.0
    %556 = vmatprep.subr.mxu0 0.0
    %557 = vmatpush1.msra.mxu0 0.0
    %558 = vmatprep.subr.mxu0 0.0
    %559 = vmatpush1.msra.mxu0 0.0
    %560 = vmatprep.subr.mxu0 0.0
    %561 = vmatpush1.msra.mxu0 0.0
    %562 = vmatprep.subr.mxu0 0.0
    %563 = vmatpush1.msra.mxu0 0.0
    %564 = vmatprep.subr.mxu0 0.0
    %565 = vmatpush1.msra.mxu0 0.0
    %566 = vmatprep.subr.mxu0 0.0
    %567 = vmatpush1.msra.mxu0 0.0
    %568 = vmatprep.subr.mxu0 0.0
    %569 = vmatpush1.msra.mxu0 0.0
    %570 = vmatprep.subr.mxu0 0.0
    %571 = vmatpush1.msra.mxu0 0.0
    %572 = vmatprep.subr.mxu0 0.0
    %573 = vmatpush1.msra.mxu0 0.0
    %574 = vmatprep.subr.mxu0 0.0
    %575 = vmatpush1.msra.mxu0 0.0
    %576 = vmatprep.subr.mxu0 0.0
    %577 = vmatpush1.msra.mxu0 0.0
    %578 = vmatprep.mubr.f32.mxu0 0.0
    %579 = vmatmul.mubr.f32.gmra.mrb[0].mxu0 %v243
    %v580 = vpop.f32.mrb[0].mxu0
    %v581 = vadd.f32 %v235, %v580
    %v582 = vpop.f32.mrb[0].mxu0
    %583 = vmatprep.mubr.f32.mxu0 0.0
    %584 = vmatmul.mubr.f32.gmra.mrb[0].mxu0 %v246
    %v585 = vpop.f32.mrb[0].mxu0
    %v586 = vadd.f32 %v239, %v585
    %v587 = vpop.f32.mrb[0].mxu0
    %588 = vdwg.mxu0
    %v589 = vadd.f32 %v581, %v586
    %v590 = vrot.slane %v589, 4
    %v591 = vadd.f32 %v589, %v590
    %v592 = vrot.slane %v591, 2
    %v593 = vadd.f32 %v591, %v592
    %v594 = vrot.slane %v593, 1
    %v595 = vadd.f32 %v593, %v594
    %v596 = vmul.f32 %v595, %v330
    %v597 = vsub.f32 %v581, %v596
    %v598 = vsub.f32 %v586, %v596
    %v599 = vmul.f32 %v597, %v597
    %v600 = vmul.f32 %v598, %v598
    %v601 = vadd.f32 %v599, %v600
    %v602 = vrot.slane %v601, 4
    %v603 = vadd.f32 %v601, %v602
    %v604 = vrot.slane %v603, 2
    %v605 = vadd.f32 %v603, %v604
    %v606 = vrot.slane %v605, 1
    %v607 = vadd.f32 %v605, %v606
    %v608 = vmul.f32 %v607, %v330
    %v609 = vadd.f32 %v608, 1e-05
    %v610 = vrsqrt.pop %v609
    %v611 = vmul.f32 %v597, %v610
    %v612 = vmul.f32 %v598, %v610
    %v613 = vmul.f32 %v611, %v350
    %v614 = vmul.f32 %v612, %v354
    %v615 = vadd.f32 %v613, %v360
    %v616 = vadd.f32 %v614, %v364
    %v617 = vmax.f32 %v615, 0.0
    %v618 = vmax.f32 %v616, 0.0
    %v620 = vlaneseq
    %v621 = vshrl.u32 %v620, 7
    %v622 = vsub.s32 0, %v621
    %v623 = vrot.slane %v380, %v622
    %v625 = vmul.f32 %v617, %v623
    %v626 = vmul.f32 %v618, %v623
    %vm627 = vcmp.gt.s32.totalorder %v21, 2
    %v628 = vsel %vm627, 1, 0
    %v629 = vcvt.s32.f32 %v628
    %s630 = scalar_lea.vmem %s0, 16
    %v631 = vld [vmem:[%s630] sm:$0xff]
    %632 = vmatprep.subr.mxu0 0.0
    %633 = vmatpush1.msra.mxu0 %v631
    %634 = vmatprep.subr.mxu0 0.0
    %635 = vmatpush1.msra.mxu0 0.0
    %636 = vmatprep.subr.mxu0 0.0
    %637 = vmatpush1.msra.mxu0 0.0
    %638 = vmatprep.subr.mxu0 0.0
    %639 = vmatpush1.msra.mxu0 0.0
    %640 = vmatprep.subr.mxu0 0.0
    %641 = vmatpush1.msra.mxu0 0.0
    %642 = vmatprep.subr.mxu0 0.0
    %643 = vmatpush1.msra.mxu0 0.0
    %644 = vmatprep.subr.mxu0 0.0
    %645 = vmatpush1.msra.mxu0 0.0
    %646 = vmatprep.subr.mxu0 0.0
    %647 = vmatpush1.msra.mxu0 0.0
    %648 = vmatprep.subr.mxu0 0.0
    %649 = vmatpush1.msra.mxu0 0.0
    %650 = vmatprep.subr.mxu0 0.0
    %651 = vmatpush1.msra.mxu0 0.0
    %652 = vmatprep.subr.mxu0 0.0
    %653 = vmatpush1.msra.mxu0 0.0
    %654 = vmatprep.subr.mxu0 0.0
    %655 = vmatpush1.msra.mxu0 0.0
    %656 = vmatprep.subr.mxu0 0.0
    %657 = vmatpush1.msra.mxu0 0.0
    %658 = vmatprep.subr.mxu0 0.0
    %659 = vmatpush1.msra.mxu0 0.0
    %660 = vmatprep.subr.mxu0 0.0
    %661 = vmatpush1.msra.mxu0 0.0
    %662 = vmatprep.subr.mxu0 0.0
    %663 = vmatpush1.msra.mxu0 0.0
    %664 = vmatprep.subr.mxu0 0.0
    %665 = vmatpush1.msra.mxu0 0.0
    %666 = vmatprep.subr.mxu0 0.0
    %667 = vmatpush1.msra.mxu0 0.0
    %668 = vmatprep.subr.mxu0 0.0
    %669 = vmatpush1.msra.mxu0 0.0
    %670 = vmatprep.subr.mxu0 0.0
    %671 = vmatpush1.msra.mxu0 0.0
    %672 = vmatprep.subr.mxu0 0.0
    %673 = vmatpush1.msra.mxu0 0.0
    %674 = vmatprep.subr.mxu0 0.0
    %675 = vmatpush1.msra.mxu0 0.0
    %676 = vmatprep.subr.mxu0 0.0
    %677 = vmatpush1.msra.mxu0 0.0
    %678 = vmatprep.subr.mxu0 0.0
    %679 = vmatpush1.msra.mxu0 0.0
    %680 = vmatprep.subr.mxu0 0.0
    %681 = vmatpush1.msra.mxu0 0.0
    %682 = vmatprep.subr.mxu0 0.0
    %683 = vmatpush1.msra.mxu0 0.0
    %684 = vmatprep.subr.mxu0 0.0
    %685 = vmatpush1.msra.mxu0 0.0
    %686 = vmatprep.subr.mxu0 0.0
    %687 = vmatpush1.msra.mxu0 0.0
    %688 = vmatprep.subr.mxu0 0.0
    %689 = vmatpush1.msra.mxu0 0.0
    %690 = vmatprep.subr.mxu0 0.0
    %691 = vmatpush1.msra.mxu0 0.0
    %692 = vmatprep.subr.mxu0 0.0
    %693 = vmatpush1.msra.mxu0 0.0
    %694 = vmatprep.subr.mxu0 0.0
    %695 = vmatpush1.msra.mxu0 0.0
    %696 = vmatprep.mubr.f32.mxu0 0.0
    %697 = vmatmul.mubr.f32.gmra.mrb[0].mxu0 %v56
    %v698 = vpop.f32.mrb[0].mxu0
    %v699 = vadd.f32 %v37, %v698
    %v700 = vpop.f32.mrb[0].mxu0
    %701 = vmatprep.mubr.f32.mxu0 0.0
    %702 = vmatmul.mubr.f32.gmra.mrb[0].mxu0 %v59
    %v703 = vpop.f32.mrb[0].mxu0
    %v704 = vadd.f32 %v42, %v703
    %v705 = vpop.f32.mrb[0].mxu0
    %706 = vmatprep.mubr.f32.mxu0 0.0
    %707 = vmatmul.mubr.f32.gmra.mrb[0].mxu0 %v62
    %v708 = vpop.f32.mrb[0].mxu0
    %v709 = vadd.f32 %v47, %v708
    %v710 = vpop.f32.mrb[0].mxu0
    %711 = vmatprep.mubr.f32.mxu0 0.0
    %712 = vmatmul.mubr.f32.gmra.mrb[0].mxu0 %v65
    %v713 = vpop.f32.mrb[0].mxu0
    %v714 = vadd.f32 %v52, %v713
    %v715 = vpop.f32.mrb[0].mxu0
    %716 = vdwg.mxu0
    %v717 = vadd.f32 %v699, %v704
    %v718 = vadd.f32 %v717, %v709
    %v719 = vadd.f32 %v718, %v714
    %v720 = vrot.slane %v719, 4
    %v721 = vadd.f32 %v719, %v720
    %v722 = vrot.slane %v721, 2
    %v723 = vadd.f32 %v721, %v722
    %v724 = vrot.slane %v723, 1
    %v725 = vadd.f32 %v723, %v724
    %v726 = vmul.f32 %v725, %v161
    %v727 = vsub.f32 %v699, %v726
    %v728 = vsub.f32 %v704, %v726
    %v729 = vsub.f32 %v709, %v726
    %v730 = vsub.f32 %v714, %v726
    %v731 = vmul.f32 %v727, %v727
    %v732 = vmul.f32 %v728, %v728
    %v733 = vmul.f32 %v729, %v729
    %v734 = vmul.f32 %v730, %v730
    %v735 = vadd.f32 %v731, %v732
    %v736 = vadd.f32 %v735, %v733
    %v737 = vadd.f32 %v736, %v734
    %v738 = vrot.slane %v737, 4
    %v739 = vadd.f32 %v737, %v738
    %v740 = vrot.slane %v739, 2
    %v741 = vadd.f32 %v739, %v740
    %v742 = vrot.slane %v741, 1
    %v743 = vadd.f32 %v741, %v742
    %v744 = vmul.f32 %v743, %v161
    %v745 = vadd.f32 %v744, 1e-05
    %v746 = vrsqrt.pop %v745
    %v747 = vmul.f32 %v727, %v746
    %v748 = vmul.f32 %v728, %v746
    %v749 = vmul.f32 %v729, %v746
    %v750 = vmul.f32 %v730, %v746
    %v751 = vmul.f32 %v747, %v189
    %v752 = vmul.f32 %v748, %v193
    %v753 = vmul.f32 %v749, %v197
    %v754 = vmul.f32 %v750, %v201
    %v755 = vadd.f32 %v751, %v209
    %v756 = vadd.f32 %v752, %v213
    %v757 = vadd.f32 %v753, %v217
    %v758 = vadd.f32 %v754, %v221
    %v759 = vmax.f32 %v755, 0.0
    %v760 = vmax.f32 %v756, 0.0
    %v761 = vmax.f32 %v757, 0.0
    %v762 = vmax.f32 %v758, 0.0
    %763 = vmatprep.subr.mxu0 0.0
    %764 = vmatpush1.msra.mxu0 %v759
    %765 = vmatprep.subr.mxu0 0.0
    %766 = vmatpush1.msra.mxu0 %v760
    %767 = vmatprep.subr.mxu0 0.0
    %768 = vmatpush1.msra.mxu0 %v761
    %769 = vmatprep.subr.mxu0 0.0
    %770 = vmatpush1.msra.mxu0 %v762
    %771 = vmatprep.subr.mxu0 0.0
    %772 = vmatpush1.msra.mxu0 0.0
    %773 = vmatprep.subr.mxu0 0.0
    %774 = vmatpush1.msra.mxu0 0.0
    %775 = vmatprep.subr.mxu0 0.0
    %776 = vmatpush1.msra.mxu0 0.0
    %777 = vmatprep.subr.mxu0 0.0
    %778 = vmatpush1.msra.mxu0 0.0
    %779 = vmatprep.subr.mxu0 0.0
    %780 = vmatpush1.msra.mxu0 0.0
    %781 = vmatprep.subr.mxu0 0.0
    %782 = vmatpush1.msra.mxu0 0.0
    %783 = vmatprep.subr.mxu0 0.0
    %784 = vmatpush1.msra.mxu0 0.0
    %785 = vmatprep.subr.mxu0 0.0
    %786 = vmatpush1.msra.mxu0 0.0
    %787 = vmatprep.subr.mxu0 0.0
    %788 = vmatpush1.msra.mxu0 0.0
    %789 = vmatprep.subr.mxu0 0.0
    %790 = vmatpush1.msra.mxu0 0.0
    %791 = vmatprep.subr.mxu0 0.0
    %792 = vmatpush1.msra.mxu0 0.0
    %793 = vmatprep.subr.mxu0 0.0
    %794 = vmatpush1.msra.mxu0 0.0
    %795 = vmatprep.subr.mxu0 0.0
    %796 = vmatpush1.msra.mxu0 0.0
    %797 = vmatprep.subr.mxu0 0.0
    %798 = vmatpush1.msra.mxu0 0.0
    %799 = vmatprep.subr.mxu0 0.0
    %800 = vmatpush1.msra.mxu0 0.0
    %801 = vmatprep.subr.mxu0 0.0
    %802 = vmatpush1.msra.mxu0 0.0
    %803 = vmatprep.subr.mxu0 0.0
    %804 = vmatpush1.msra.mxu0 0.0
    %805 = vmatprep.subr.mxu0 0.0
    %806 = vmatpush1.msra.mxu0 0.0
    %807 = vmatprep.subr.mxu0 0.0
    %808 = vmatpush1.msra.mxu0 0.0
    %809 = vmatprep.subr.mxu0 0.0
    %810 = vmatpush1.msra.mxu0 0.0
    %811 = vmatprep.subr.mxu0 0.0
    %812 = vmatpush1.msra.mxu0 0.0
    %813 = vmatprep.subr.mxu0 0.0
    %814 = vmatpush1.msra.mxu0 0.0
    %815 = vmatprep.subr.mxu0 0.0
    %816 = vmatpush1.msra.mxu0 0.0
    %817 = vmatprep.subr.mxu0 0.0
    %818 = vmatpush1.msra.mxu0 0.0
    %819 = vmatprep.subr.mxu0 0.0
    %820 = vmatpush1.msra.mxu0 0.0
    %821 = vmatprep.subr.mxu0 0.0
    %822 = vmatpush1.msra.mxu0 0.0
    %823 = vmatprep.subr.mxu0 0.0
    %824 = vmatpush1.msra.mxu0 0.0
    %825 = vmatprep.subr.mxu0 0.0
    %826 = vmatpush1.msra.mxu0 0.0
    %827 = vmatprep.mubr.f32.mxu0 0.0
    %828 = vmatmul.mubr.f32.gmra.mrb[0].mxu0 %v243
    %v829 = vpop.f32.mrb[0].mxu0
    %v830 = vadd.f32 %v235, %v829
    %v831 = vpop.f32.mrb[0].mxu0
    %832 = vmatprep.mubr.f32.mxu0 0.0
    %833 = vmatmul.mubr.f32.gmra.mrb[0].mxu0 %v246
    %v834 = vpop.f32.mrb[0].mxu0
    %v835 = vadd.f32 %v239, %v834
    %v836 = vpop.f32.mrb[0].mxu0
    %837 = vdwg.mxu0
    %v838 = vadd.f32 %v830, %v835
    %v839 = vrot.slane %v838, 4
    %v840 = vadd.f32 %v838, %v839
    %v841 = vrot.slane %v840, 2
    %v842 = vadd.f32 %v840, %v841
    %v843 = vrot.slane %v842, 1
    %v844 = vadd.f32 %v842, %v843
    %v845 = vmul.f32 %v844, %v330
    %v846 = vsub.f32 %v830, %v845
    %v847 = vsub.f32 %v835, %v845
    %v848 = vmul.f32 %v846, %v846
    %v849 = vmul.f32 %v847, %v847
    %v850 = vadd.f32 %v848, %v849
    %v851 = vrot.slane %v850, 4
    %v852 = vadd.f32 %v850, %v851
    %v853 = vrot.slane %v852, 2
    %v854 = vadd.f32 %v852, %v853
    %v855 = vrot.slane %v854, 1
    %v856 = vadd.f32 %v854, %v855
    %v857 = vmul.f32 %v856, %v330
    %v858 = vadd.f32 %v857, 1e-05
    %v859 = vrsqrt.pop %v858
    %v860 = vmul.f32 %v846, %v859
    %v861 = vmul.f32 %v847, %v859
    %v862 = vmul.f32 %v860, %v350
    %v863 = vmul.f32 %v861, %v354
    %v864 = vadd.f32 %v862, %v360
    %v865 = vadd.f32 %v863, %v364
    %v866 = vmax.f32 %v864, 0.0
    %v867 = vmax.f32 %v865, 0.0
    %v869 = vlaneseq
    %v870 = vshrl.u32 %v869, 7
    %v871 = vsub.s32 0, %v870
    %v872 = vrot.slane %v629, %v871
    %v874 = vmul.f32 %v866, %v872
    %v875 = vmul.f32 %v867, %v872
    %vm876 = vcmp.gt.s32.totalorder %v21, 3
    %v877 = vsel %vm876, 1, 0
    %v878 = vcvt.s32.f32 %v877
    %s879 = scalar_lea.vmem %s0, 24
    %v880 = vld [vmem:[%s879] sm:$0xff]
    %881 = vmatprep.subr.mxu0 0.0
    %882 = vmatpush1.msra.mxu0 %v880
    %883 = vmatprep.subr.mxu0 0.0
    %884 = vmatpush1.msra.mxu0 0.0
    %885 = vmatprep.subr.mxu0 0.0
    %886 = vmatpush1.msra.mxu0 0.0
    %887 = vmatprep.subr.mxu0 0.0
    %888 = vmatpush1.msra.mxu0 0.0
    %889 = vmatprep.subr.mxu0 0.0
    %890 = vmatpush1.msra.mxu0 0.0
    %891 = vmatprep.subr.mxu0 0.0
    %892 = vmatpush1.msra.mxu0 0.0
    %893 = vmatprep.subr.mxu0 0.0
    %894 = vmatpush1.msra.mxu0 0.0
    %895 = vmatprep.subr.mxu0 0.0
    %896 = vmatpush1.msra.mxu0 0.0
    %897 = vmatprep.subr.mxu0 0.0
    %898 = vmatpush1.msra.mxu0 0.0
    %899 = vmatprep.subr.mxu0 0.0
    %900 = vmatpush1.msra.mxu0 0.0
    %901 = vmatprep.subr.mxu0 0.0
    %902 = vmatpush1.msra.mxu0 0.0
    %903 = vmatprep.subr.mxu0 0.0
    %904 = vmatpush1.msra.mxu0 0.0
    %905 = vmatprep.subr.mxu0 0.0
    %906 = vmatpush1.msra.mxu0 0.0
    %907 = vmatprep.subr.mxu0 0.0
    %908 = vmatpush1.msra.mxu0 0.0
    %909 = vmatprep.subr.mxu0 0.0
    %910 = vmatpush1.msra.mxu0 0.0
    %911 = vmatprep.subr.mxu0 0.0
    %912 = vmatpush1.msra.mxu0 0.0
    %913 = vmatprep.subr.mxu0 0.0
    %914 = vmatpush1.msra.mxu0 0.0
    %915 = vmatprep.subr.mxu0 0.0
    %916 = vmatpush1.msra.mxu0 0.0
    %917 = vmatprep.subr.mxu0 0.0
    %918 = vmatpush1.msra.mxu0 0.0
    %919 = vmatprep.subr.mxu0 0.0
    %920 = vmatpush1.msra.mxu0 0.0
    %921 = vmatprep.subr.mxu0 0.0
    %922 = vmatpush1.msra.mxu0 0.0
    %923 = vmatprep.subr.mxu0 0.0
    %924 = vmatpush1.msra.mxu0 0.0
    %925 = vmatprep.subr.mxu0 0.0
    %926 = vmatpush1.msra.mxu0 0.0
    %927 = vmatprep.subr.mxu0 0.0
    %928 = vmatpush1.msra.mxu0 0.0
    %929 = vmatprep.subr.mxu0 0.0
    %930 = vmatpush1.msra.mxu0 0.0
    %931 = vmatprep.subr.mxu0 0.0
    %932 = vmatpush1.msra.mxu0 0.0
    %933 = vmatprep.subr.mxu0 0.0
    %934 = vmatpush1.msra.mxu0 0.0
    %935 = vmatprep.subr.mxu0 0.0
    %936 = vmatpush1.msra.mxu0 0.0
    %937 = vmatprep.subr.mxu0 0.0
    %938 = vmatpush1.msra.mxu0 0.0
    %939 = vmatprep.subr.mxu0 0.0
    %940 = vmatpush1.msra.mxu0 0.0
    %941 = vmatprep.subr.mxu0 0.0
    %942 = vmatpush1.msra.mxu0 0.0
    %943 = vmatprep.subr.mxu0 0.0
    %944 = vmatpush1.msra.mxu0 0.0
    %945 = vmatprep.mubr.f32.mxu0 0.0
    %946 = vmatmul.mubr.f32.gmra.mrb[0].mxu0 %v56
    %v947 = vpop.f32.mrb[0].mxu0
    %v948 = vadd.f32 %v37, %v947
    %v949 = vpop.f32.mrb[0].mxu0
    %950 = vmatprep.mubr.f32.mxu0 0.0
    %951 = vmatmul.mubr.f32.gmra.mrb[0].mxu0 %v59
    %v952 = vpop.f32.mrb[0].mxu0
    %v953 = vadd.f32 %v42, %v952
    %v954 = vpop.f32.mrb[0].mxu0
    %955 = vmatprep.mubr.f32.mxu0 0.0
    %956 = vmatmul.mubr.f32.gmra.mrb[0].mxu0 %v62
    %v957 = vpop.f32.mrb[0].mxu0
    %v958 = vadd.f32 %v47, %v957
    %v959 = vpop.f32.mrb[0].mxu0
    %960 = vmatprep.mubr.f32.mxu0 0.0
    %961 = vmatmul.mubr.f32.gmra.mrb[0].mxu0 %v65
    %v962 = vpop.f32.mrb[0].mxu0
    %v963 = vadd.f32 %v52, %v962
    %v964 = vpop.f32.mrb[0].mxu0
    %965 = vdwg.mxu0
    %v966 = vadd.f32 %v948, %v953
    %v967 = vadd.f32 %v966, %v958
    %v968 = vadd.f32 %v967, %v963
    %v969 = vrot.slane %v968, 4
    %v970 = vadd.f32 %v968, %v969
    %v971 = vrot.slane %v970, 2
    %v972 = vadd.f32 %v970, %v971
    %v973 = vrot.slane %v972, 1
    %v974 = vadd.f32 %v972, %v973
    %v975 = vmul.f32 %v974, %v161
    %v976 = vsub.f32 %v948, %v975
    %v977 = vsub.f32 %v953, %v975
    %v978 = vsub.f32 %v958, %v975
    %v979 = vsub.f32 %v963, %v975
    %v980 = vmul.f32 %v976, %v976
    %v981 = vmul.f32 %v977, %v977
    %v982 = vmul.f32 %v978, %v978
    %v983 = vmul.f32 %v979, %v979
    %v984 = vadd.f32 %v980, %v981
    %v985 = vadd.f32 %v984, %v982
    %v986 = vadd.f32 %v985, %v983
    %v987 = vrot.slane %v986, 4
    %v988 = vadd.f32 %v986, %v987
    %v989 = vrot.slane %v988, 2
    %v990 = vadd.f32 %v988, %v989
    %v991 = vrot.slane %v990, 1
    %v992 = vadd.f32 %v990, %v991
    %v993 = vmul.f32 %v992, %v161
    %v994 = vadd.f32 %v993, 1e-05
    %v995 = vrsqrt.pop %v994
    %v996 = vmul.f32 %v976, %v995
    %v997 = vmul.f32 %v977, %v995
    %v998 = vmul.f32 %v978, %v995
    %v999 = vmul.f32 %v979, %v995
    %v1000 = vmul.f32 %v996, %v189
    %v1001 = vmul.f32 %v997, %v193
    %v1002 = vmul.f32 %v998, %v197
    %v1003 = vmul.f32 %v999, %v201
    %v1004 = vadd.f32 %v1000, %v209
    %v1005 = vadd.f32 %v1001, %v213
    %v1006 = vadd.f32 %v1002, %v217
    %v1007 = vadd.f32 %v1003, %v221
    %v1008 = vmax.f32 %v1004, 0.0
    %v1009 = vmax.f32 %v1005, 0.0
    %v1010 = vmax.f32 %v1006, 0.0
    %v1011 = vmax.f32 %v1007, 0.0
    %1012 = vmatprep.subr.mxu0 0.0
    %1013 = vmatpush1.msra.mxu0 %v1008
    %1014 = vmatprep.subr.mxu0 0.0
    %1015 = vmatpush1.msra.mxu0 %v1009
    %1016 = vmatprep.subr.mxu0 0.0
    %1017 = vmatpush1.msra.mxu0 %v1010
    %1018 = vmatprep.subr.mxu0 0.0
    %1019 = vmatpush1.msra.mxu0 %v1011
    %1020 = vmatprep.subr.mxu0 0.0
    %1021 = vmatpush1.msra.mxu0 0.0
    %1022 = vmatprep.subr.mxu0 0.0
    %1023 = vmatpush1.msra.mxu0 0.0
    %1024 = vmatprep.subr.mxu0 0.0
    %1025 = vmatpush1.msra.mxu0 0.0
    %1026 = vmatprep.subr.mxu0 0.0
    %1027 = vmatpush1.msra.mxu0 0.0
    %1028 = vmatprep.subr.mxu0 0.0
    %1029 = vmatpush1.msra.mxu0 0.0
    %1030 = vmatprep.subr.mxu0 0.0
    %1031 = vmatpush1.msra.mxu0 0.0
    %1032 = vmatprep.subr.mxu0 0.0
    %1033 = vmatpush1.msra.mxu0 0.0
    %1034 = vmatprep.subr.mxu0 0.0
    %1035 = vmatpush1.msra.mxu0 0.0
    %1036 = vmatprep.subr.mxu0 0.0
    %1037 = vmatpush1.msra.mxu0 0.0
    %1038 = vmatprep.subr.mxu0 0.0
    %1039 = vmatpush1.msra.mxu0 0.0
    %1040 = vmatprep.subr.mxu0 0.0
    %1041 = vmatpush1.msra.mxu0 0.0
    %1042 = vmatprep.subr.mxu0 0.0
    %1043 = vmatpush1.msra.mxu0 0.0
    %1044 = vmatprep.subr.mxu0 0.0
    %1045 = vmatpush1.msra.mxu0 0.0
    %1046 = vmatprep.subr.mxu0 0.0
    %1047 = vmatpush1.msra.mxu0 0.0
    %1048 = vmatprep.subr.mxu0 0.0
    %1049 = vmatpush1.msra.mxu0 0.0
    %1050 = vmatprep.subr.mxu0 0.0
    %1051 = vmatpush1.msra.mxu0 0.0
    %1052 = vmatprep.subr.mxu0 0.0
    %1053 = vmatpush1.msra.mxu0 0.0
    %1054 = vmatprep.subr.mxu0 0.0
    %1055 = vmatpush1.msra.mxu0 0.0
    %1056 = vmatprep.subr.mxu0 0.0
    %1057 = vmatpush1.msra.mxu0 0.0
    %1058 = vmatprep.subr.mxu0 0.0
    %1059 = vmatpush1.msra.mxu0 0.0
    %1060 = vmatprep.subr.mxu0 0.0
    %1061 = vmatpush1.msra.mxu0 0.0
    %1062 = vmatprep.subr.mxu0 0.0
    %1063 = vmatpush1.msra.mxu0 0.0
    %1064 = vmatprep.subr.mxu0 0.0
    %1065 = vmatpush1.msra.mxu0 0.0
    %1066 = vmatprep.subr.mxu0 0.0
    %1067 = vmatpush1.msra.mxu0 0.0
    %1068 = vmatprep.subr.mxu0 0.0
    %1069 = vmatpush1.msra.mxu0 0.0
    %1070 = vmatprep.subr.mxu0 0.0
    %1071 = vmatpush1.msra.mxu0 0.0
    %1072 = vmatprep.subr.mxu0 0.0
    %1073 = vmatpush1.msra.mxu0 0.0
    %1074 = vmatprep.subr.mxu0 0.0
    %1075 = vmatpush1.msra.mxu0 0.0
    %1076 = vmatprep.mubr.f32.mxu0 0.0
    %1077 = vmatmul.mubr.f32.gmra.mrb[0].mxu0 %v243
    %v1078 = vpop.f32.mrb[0].mxu0
    %v1079 = vadd.f32 %v235, %v1078
    %v1080 = vpop.f32.mrb[0].mxu0
    %1081 = vmatprep.mubr.f32.mxu0 0.0
    %1082 = vmatmul.mubr.f32.gmra.mrb[0].mxu0 %v246
    %v1083 = vpop.f32.mrb[0].mxu0
    %v1084 = vadd.f32 %v239, %v1083
    %v1085 = vpop.f32.mrb[0].mxu0
    %1086 = vdwg.mxu0
    %v1087 = vadd.f32 %v1079, %v1084
    %v1088 = vrot.slane %v1087, 4
    %v1089 = vadd.f32 %v1087, %v1088
    %v1090 = vrot.slane %v1089, 2
    %v1091 = vadd.f32 %v1089, %v1090
    %v1092 = vrot.slane %v1091, 1
    %v1093 = vadd.f32 %v1091, %v1092
    %v1094 = vmul.f32 %v1093, %v330
    %v1095 = vsub.f32 %v1079, %v1094
    %v1096 = vsub.f32 %v1084, %v1094
    %v1097 = vmul.f32 %v1095, %v1095
    %v1098 = vmul.f32 %v1096, %v1096
    %v1099 = vadd.f32 %v1097, %v1098
    %v1100 = vrot.slane %v1099, 4
    %v1101 = vadd.f32 %v1099, %v1100
    %v1102 = vrot.slane %v1101, 2
    %v1103 = vadd.f32 %v1101, %v1102
    %v1104 = vrot.slane %v1103, 1
    %v1105 = vadd.f32 %v1103, %v1104
    %v1106 = vmul.f32 %v1105, %v330
    %v1107 = vadd.f32 %v1106, 1e-05
    %v1108 = vrsqrt.pop %v1107
    %v1109 = vmul.f32 %v1095, %v1108
    %v1110 = vmul.f32 %v1096, %v1108
    %v1111 = vmul.f32 %v1109, %v350
    %v1112 = vmul.f32 %v1110, %v354
    %v1113 = vadd.f32 %v1111, %v360
    %v1114 = vadd.f32 %v1112, %v364
    %v1115 = vmax.f32 %v1113, 0.0
    %v1116 = vmax.f32 %v1114, 0.0
    %v1118 = vlaneseq
    %v1119 = vshrl.u32 %v1118, 7
    %v1120 = vsub.s32 0, %v1119
    %v1121 = vrot.slane %v878, %v1120
    %v1123 = vmul.f32 %v1115, %v1121
    %v1124 = vmul.f32 %v1116, %v1121
    %vm1125 = vcmp.gt.s32.totalorder %v21, 4
    %v1126 = vsel %vm1125, 1, 0
    %v1127 = vcvt.s32.f32 %v1126
    %s1128 = scalar_lea.vmem %s0, 32
    %v1129 = vld [vmem:[%s1128] sm:$0xff]
    %1130 = vmatprep.subr.mxu0 0.0
    %1131 = vmatpush1.msra.mxu0 %v1129
    %1132 = vmatprep.subr.mxu0 0.0
    %1133 = vmatpush1.msra.mxu0 0.0
    %1134 = vmatprep.subr.mxu0 0.0
    %1135 = vmatpush1.msra.mxu0 0.0
    %1136 = vmatprep.subr.mxu0 0.0
    %1137 = vmatpush1.msra.mxu0 0.0
    %1138 = vmatprep.subr.mxu0 0.0
    %1139 = vmatpush1.msra.mxu0 0.0
    %1140 = vmatprep.subr.mxu0 0.0
    %1141 = vmatpush1.msra.mxu0 0.0
    %1142 = vmatprep.subr.mxu0 0.0
    %1143 = vmatpush1.msra.mxu0 0.0
    %1144 = vmatprep.subr.mxu0 0.0
    %1145 = vmatpush1.msra.mxu0 0.0
    %1146 = vmatprep.subr.mxu0 0.0
    %1147 = vmatpush1.msra.mxu0 0.0
    %1148 = vmatprep.subr.mxu0 0.0
    %1149 = vmatpush1.msra.mxu0 0.0
    %1150 = vmatprep.subr.mxu0 0.0
    %1151 = vmatpush1.msra.mxu0 0.0
    %1152 = vmatprep.subr.mxu0 0.0
    %1153 = vmatpush1.msra.mxu0 0.0
    %1154 = vmatprep.subr.mxu0 0.0
    %1155 = vmatpush1.msra.mxu0 0.0
    %1156 = vmatprep.subr.mxu0 0.0
    %1157 = vmatpush1.msra.mxu0 0.0
    %1158 = vmatprep.subr.mxu0 0.0
    %1159 = vmatpush1.msra.mxu0 0.0
    %1160 = vmatprep.subr.mxu0 0.0
    %1161 = vmatpush1.msra.mxu0 0.0
    %1162 = vmatprep.subr.mxu0 0.0
    %1163 = vmatpush1.msra.mxu0 0.0
    %1164 = vmatprep.subr.mxu0 0.0
    %1165 = vmatpush1.msra.mxu0 0.0
    %1166 = vmatprep.subr.mxu0 0.0
    %1167 = vmatpush1.msra.mxu0 0.0
    %1168 = vmatprep.subr.mxu0 0.0
    %1169 = vmatpush1.msra.mxu0 0.0
    %1170 = vmatprep.subr.mxu0 0.0
    %1171 = vmatpush1.msra.mxu0 0.0
    %1172 = vmatprep.subr.mxu0 0.0
    %1173 = vmatpush1.msra.mxu0 0.0
    %1174 = vmatprep.subr.mxu0 0.0
    %1175 = vmatpush1.msra.mxu0 0.0
    %1176 = vmatprep.subr.mxu0 0.0
    %1177 = vmatpush1.msra.mxu0 0.0
    %1178 = vmatprep.subr.mxu0 0.0
    %1179 = vmatpush1.msra.mxu0 0.0
    %1180 = vmatprep.subr.mxu0 0.0
    %1181 = vmatpush1.msra.mxu0 0.0
    %1182 = vmatprep.subr.mxu0 0.0
    %1183 = vmatpush1.msra.mxu0 0.0
    %1184 = vmatprep.subr.mxu0 0.0
    %1185 = vmatpush1.msra.mxu0 0.0
    %1186 = vmatprep.subr.mxu0 0.0
    %1187 = vmatpush1.msra.mxu0 0.0
    %1188 = vmatprep.subr.mxu0 0.0
    %1189 = vmatpush1.msra.mxu0 0.0
    %1190 = vmatprep.subr.mxu0 0.0
    %1191 = vmatpush1.msra.mxu0 0.0
    %1192 = vmatprep.subr.mxu0 0.0
    %1193 = vmatpush1.msra.mxu0 0.0
    %1194 = vmatprep.mubr.f32.mxu0 0.0
    %1195 = vmatmul.mubr.f32.gmra.mrb[0].mxu0 %v56
    %v1196 = vpop.f32.mrb[0].mxu0
    %v1197 = vadd.f32 %v37, %v1196
    %v1198 = vpop.f32.mrb[0].mxu0
    %1199 = vmatprep.mubr.f32.mxu0 0.0
    %1200 = vmatmul.mubr.f32.gmra.mrb[0].mxu0 %v59
    %v1201 = vpop.f32.mrb[0].mxu0
    %v1202 = vadd.f32 %v42, %v1201
    %v1203 = vpop.f32.mrb[0].mxu0
    %1204 = vmatprep.mubr.f32.mxu0 0.0
    %1205 = vmatmul.mubr.f32.gmra.mrb[0].mxu0 %v62
    %v1206 = vpop.f32.mrb[0].mxu0
    %v1207 = vadd.f32 %v47, %v1206
    %v1208 = vpop.f32.mrb[0].mxu0
    %1209 = vmatprep.mubr.f32.mxu0 0.0
    %1210 = vmatmul.mubr.f32.gmra.mrb[0].mxu0 %v65
    %v1211 = vpop.f32.mrb[0].mxu0
    %v1212 = vadd.f32 %v52, %v1211
    %v1213 = vpop.f32.mrb[0].mxu0
    %1214 = vdwg.mxu0
    %v1215 = vadd.f32 %v1197, %v1202
    %v1216 = vadd.f32 %v1215, %v1207
    %v1217 = vadd.f32 %v1216, %v1212
    %v1218 = vrot.slane %v1217, 4
    %v1219 = vadd.f32 %v1217, %v1218
    %v1220 = vrot.slane %v1219, 2
    %v1221 = vadd.f32 %v1219, %v1220
    %v1222 = vrot.slane %v1221, 1
    %v1223 = vadd.f32 %v1221, %v1222
    %v1224 = vmul.f32 %v1223, %v161
    %v1225 = vsub.f32 %v1197, %v1224
    %v1226 = vsub.f32 %v1202, %v1224
    %v1227 = vsub.f32 %v1207, %v1224
    %v1228 = vsub.f32 %v1212, %v1224
    %v1229 = vmul.f32 %v1225, %v1225
    %v1230 = vmul.f32 %v1226, %v1226
    %v1231 = vmul.f32 %v1227, %v1227
    %v1232 = vmul.f32 %v1228, %v1228
    %v1233 = vadd.f32 %v1229, %v1230
    %v1234 = vadd.f32 %v1233, %v1231
    %v1235 = vadd.f32 %v1234, %v1232
    %v1236 = vrot.slane %v1235, 4
    %v1237 = vadd.f32 %v1235, %v1236
    %v1238 = vrot.slane %v1237, 2
    %v1239 = vadd.f32 %v1237, %v1238
    %v1240 = vrot.slane %v1239, 1
    %v1241 = vadd.f32 %v1239, %v1240
    %v1242 = vmul.f32 %v1241, %v161
    %v1243 = vadd.f32 %v1242, 1e-05
    %v1244 = vrsqrt.pop %v1243
    %v1245 = vmul.f32 %v1225, %v1244
    %v1246 = vmul.f32 %v1226, %v1244
    %v1247 = vmul.f32 %v1227, %v1244
    %v1248 = vmul.f32 %v1228, %v1244
    %v1249 = vmul.f32 %v1245, %v189
    %v1250 = vmul.f32 %v1246, %v193
    %v1251 = vmul.f32 %v1247, %v197
    %v1252 = vmul.f32 %v1248, %v201
    %v1253 = vadd.f32 %v1249, %v209
    %v1254 = vadd.f32 %v1250, %v213
    %v1255 = vadd.f32 %v1251, %v217
    %v1256 = vadd.f32 %v1252, %v221
    %v1257 = vmax.f32 %v1253, 0.0
    %v1258 = vmax.f32 %v1254, 0.0
    %v1259 = vmax.f32 %v1255, 0.0
    %v1260 = vmax.f32 %v1256, 0.0
    %1261 = vmatprep.subr.mxu0 0.0
    %1262 = vmatpush1.msra.mxu0 %v1257
    %1263 = vmatprep.subr.mxu0 0.0
    %1264 = vmatpush1.msra.mxu0 %v1258
    %1265 = vmatprep.subr.mxu0 0.0
    %1266 = vmatpush1.msra.mxu0 %v1259
    %1267 = vmatprep.subr.mxu0 0.0
    %1268 = vmatpush1.msra.mxu0 %v1260
    %1269 = vmatprep.subr.mxu0 0.0
    %1270 = vmatpush1.msra.mxu0 0.0
    %1271 = vmatprep.subr.mxu0 0.0
    %1272 = vmatpush1.msra.mxu0 0.0
    %1273 = vmatprep.subr.mxu0 0.0
    %1274 = vmatpush1.msra.mxu0 0.0
    %1275 = vmatprep.subr.mxu0 0.0
    %1276 = vmatpush1.msra.mxu0 0.0
    %1277 = vmatprep.subr.mxu0 0.0
    %1278 = vmatpush1.msra.mxu0 0.0
    %1279 = vmatprep.subr.mxu0 0.0
    %1280 = vmatpush1.msra.mxu0 0.0
    %1281 = vmatprep.subr.mxu0 0.0
    %1282 = vmatpush1.msra.mxu0 0.0
    %1283 = vmatprep.subr.mxu0 0.0
    %1284 = vmatpush1.msra.mxu0 0.0
    %1285 = vmatprep.subr.mxu0 0.0
    %1286 = vmatpush1.msra.mxu0 0.0
    %1287 = vmatprep.subr.mxu0 0.0
    %1288 = vmatpush1.msra.mxu0 0.0
    %1289 = vmatprep.subr.mxu0 0.0
    %1290 = vmatpush1.msra.mxu0 0.0
    %1291 = vmatprep.subr.mxu0 0.0
    %1292 = vmatpush1.msra.mxu0 0.0
    %1293 = vmatprep.subr.mxu0 0.0
    %1294 = vmatpush1.msra.mxu0 0.0
    %1295 = vmatprep.subr.mxu0 0.0
    %1296 = vmatpush1.msra.mxu0 0.0
    %1297 = vmatprep.subr.mxu0 0.0
    %1298 = vmatpush1.msra.mxu0 0.0
    %1299 = vmatprep.subr.mxu0 0.0
    %1300 = vmatpush1.msra.mxu0 0.0
    %1301 = vmatprep.subr.mxu0 0.0
    %1302 = vmatpush1.msra.mxu0 0.0
    %1303 = vmatprep.subr.mxu0 0.0
    %1304 = vmatpush1.msra.mxu0 0.0
    %1305 = vmatprep.subr.mxu0 0.0
    %1306 = vmatpush1.msra.mxu0 0.0
    %1307 = vmatprep.subr.mxu0 0.0
    %1308 = vmatpush1.msra.mxu0 0.0
    %1309 = vmatprep.subr.mxu0 0.0
    %1310 = vmatpush1.msra.mxu0 0.0
    %1311 = vmatprep.subr.mxu0 0.0
    %1312 = vmatpush1.msra.mxu0 0.0
    %1313 = vmatprep.subr.mxu0 0.0
    %1314 = vmatpush1.msra.mxu0 0.0
    %1315 = vmatprep.subr.mxu0 0.0
    %1316 = vmatpush1.msra.mxu0 0.0
    %1317 = vmatprep.subr.mxu0 0.0
    %1318 = vmatpush1.msra.mxu0 0.0
    %1319 = vmatprep.subr.mxu0 0.0
    %1320 = vmatpush1.msra.mxu0 0.0
    %1321 = vmatprep.subr.mxu0 0.0
    %1322 = vmatpush1.msra.mxu0 0.0
    %1323 = vmatprep.subr.mxu0 0.0
    %1324 = vmatpush1.msra.mxu0 0.0
    %1325 = vmatprep.mubr.f32.mxu0 0.0
    %1326 = vmatmul.mubr.f32.gmra.mrb[0].mxu0 %v243
    %v1327 = vpop.f32.mrb[0].mxu0
    %v1328 = vadd.f32 %v235, %v1327
    %v1329 = vpop.f32.mrb[0].mxu0
    %1330 = vmatprep.mubr.f32.mxu0 0.0
    %1331 = vmatmul.mubr.f32.gmra.mrb[0].mxu0 %v246
    %v1332 = vpop.f32.mrb[0].mxu0
    %v1333 = vadd.f32 %v239, %v1332
    %v1334 = vpop.f32.mrb[0].mxu0
    %1335 = vdwg.mxu0
    %v1336 = vadd.f32 %v1328, %v1333
    %v1337 = vrot.slane %v1336, 4
    %v1338 = vadd.f32 %v1336, %v1337
    %v1339 = vrot.slane %v1338, 2
    %v1340 = vadd.f32 %v1338, %v1339
    %v1341 = vrot.slane %v1340, 1
    %v1342 = vadd.f32 %v1340, %v1341
    %v1343 = vmul.f32 %v1342, %v330
    %v1344 = vsub.f32 %v1328, %v1343
    %v1345 = vsub.f32 %v1333, %v1343
    %v1346 = vmul.f32 %v1344, %v1344
    %v1347 = vmul.f32 %v1345, %v1345
    %v1348 = vadd.f32 %v1346, %v1347
    %v1349 = vrot.slane %v1348, 4
    %v1350 = vadd.f32 %v1348, %v1349
    %v1351 = vrot.slane %v1350, 2
    %v1352 = vadd.f32 %v1350, %v1351
    %v1353 = vrot.slane %v1352, 1
    %v1354 = vadd.f32 %v1352, %v1353
    %v1355 = vmul.f32 %v1354, %v330
    %v1356 = vadd.f32 %v1355, 1e-05
    %v1357 = vrsqrt.pop %v1356
    %v1358 = vmul.f32 %v1344, %v1357
    %v1359 = vmul.f32 %v1345, %v1357
    %v1360 = vmul.f32 %v1358, %v350
    %v1361 = vmul.f32 %v1359, %v354
    %v1362 = vadd.f32 %v1360, %v360
    %v1363 = vadd.f32 %v1361, %v364
    %v1364 = vmax.f32 %v1362, 0.0
    %v1365 = vmax.f32 %v1363, 0.0
    %v1367 = vlaneseq
    %v1368 = vshrl.u32 %v1367, 7
    %v1369 = vsub.s32 0, %v1368
    %v1370 = vrot.slane %v1127, %v1369
    %v1372 = vmul.f32 %v1364, %v1370
    %v1373 = vmul.f32 %v1365, %v1370
    %vm1374 = vcmp.gt.s32.totalorder %v21, 5
    %v1375 = vsel %vm1374, 1, 0
    %v1376 = vcvt.s32.f32 %v1375
    %s1377 = scalar_lea.vmem %s0, 40
    %v1378 = vld [vmem:[%s1377] sm:$0xff]
    %1379 = vmatprep.subr.mxu0 0.0
    %1380 = vmatpush1.msra.mxu0 %v1378
    %1381 = vmatprep.subr.mxu0 0.0
    %1382 = vmatpush1.msra.mxu0 0.0
    %1383 = vmatprep.subr.mxu0 0.0
    %1384 = vmatpush1.msra.mxu0 0.0
    %1385 = vmatprep.subr.mxu0 0.0
    %1386 = vmatpush1.msra.mxu0 0.0
    %1387 = vmatprep.subr.mxu0 0.0
    %1388 = vmatpush1.msra.mxu0 0.0
    %1389 = vmatprep.subr.mxu0 0.0
    %1390 = vmatpush1.msra.mxu0 0.0
    %1391 = vmatprep.subr.mxu0 0.0
    %1392 = vmatpush1.msra.mxu0 0.0
    %1393 = vmatprep.subr.mxu0 0.0
    %1394 = vmatpush1.msra.mxu0 0.0
    %1395 = vmatprep.subr.mxu0 0.0
    %1396 = vmatpush1.msra.mxu0 0.0
    %1397 = vmatprep.subr.mxu0 0.0
    %1398 = vmatpush1.msra.mxu0 0.0
    %1399 = vmatprep.subr.mxu0 0.0
    %1400 = vmatpush1.msra.mxu0 0.0
    %1401 = vmatprep.subr.mxu0 0.0
    %1402 = vmatpush1.msra.mxu0 0.0
    %1403 = vmatprep.subr.mxu0 0.0
    %1404 = vmatpush1.msra.mxu0 0.0
    %1405 = vmatprep.subr.mxu0 0.0
    %1406 = vmatpush1.msra.mxu0 0.0
    %1407 = vmatprep.subr.mxu0 0.0
    %1408 = vmatpush1.msra.mxu0 0.0
    %1409 = vmatprep.subr.mxu0 0.0
    %1410 = vmatpush1.msra.mxu0 0.0
    %1411 = vmatprep.subr.mxu0 0.0
    %1412 = vmatpush1.msra.mxu0 0.0
    %1413 = vmatprep.subr.mxu0 0.0
    %1414 = vmatpush1.msra.mxu0 0.0
    %1415 = vmatprep.subr.mxu0 0.0
    %1416 = vmatpush1.msra.mxu0 0.0
    %1417 = vmatprep.subr.mxu0 0.0
    %1418 = vmatpush1.msra.mxu0 0.0
    %1419 = vmatprep.subr.mxu0 0.0
    %1420 = vmatpush1.msra.mxu0 0.0
    %1421 = vmatprep.subr.mxu0 0.0
    %1422 = vmatpush1.msra.mxu0 0.0
    %1423 = vmatprep.subr.mxu0 0.0
    %1424 = vmatpush1.msra.mxu0 0.0
    %1425 = vmatprep.subr.mxu0 0.0
    %1426 = vmatpush1.msra.mxu0 0.0
    %1427 = vmatprep.subr.mxu0 0.0
    %1428 = vmatpush1.msra.mxu0 0.0
    %1429 = vmatprep.subr.mxu0 0.0
    %1430 = vmatpush1.msra.mxu0 0.0
    %1431 = vmatprep.subr.mxu0 0.0
    %1432 = vmatpush1.msra.mxu0 0.0
    %1433 = vmatprep.subr.mxu0 0.0
    %1434 = vmatpush1.msra.mxu0 0.0
    %1435 = vmatprep.subr.mxu0 0.0
    %1436 = vmatpush1.msra.mxu0 0.0
    %1437 = vmatprep.subr.mxu0 0.0
    %1438 = vmatpush1.msra.mxu0 0.0
    %1439 = vmatprep.subr.mxu0 0.0
    %1440 = vmatpush1.msra.mxu0 0.0
    %1441 = vmatprep.subr.mxu0 0.0
    %1442 = vmatpush1.msra.mxu0 0.0
    %1443 = vmatprep.mubr.f32.mxu0 0.0
    %1444 = vmatmul.mubr.f32.gmra.mrb[0].mxu0 %v56
    %v1445 = vpop.f32.mrb[0].mxu0
    %v1446 = vadd.f32 %v37, %v1445
    %v1447 = vpop.f32.mrb[0].mxu0
    %1448 = vmatprep.mubr.f32.mxu0 0.0
    %1449 = vmatmul.mubr.f32.gmra.mrb[0].mxu0 %v59
    %v1450 = vpop.f32.mrb[0].mxu0
    %v1451 = vadd.f32 %v42, %v1450
    %v1452 = vpop.f32.mrb[0].mxu0
    %1453 = vmatprep.mubr.f32.mxu0 0.0
    %1454 = vmatmul.mubr.f32.gmra.mrb[0].mxu0 %v62
    %v1455 = vpop.f32.mrb[0].mxu0
    %v1456 = vadd.f32 %v47, %v1455
    %v1457 = vpop.f32.mrb[0].mxu0
    %1458 = vmatprep.mubr.f32.mxu0 0.0
    %1459 = vmatmul.mubr.f32.gmra.mrb[0].mxu0 %v65
    %v1460 = vpop.f32.mrb[0].mxu0
    %v1461 = vadd.f32 %v52, %v1460
    %v1462 = vpop.f32.mrb[0].mxu0
    %1463 = vdwg.mxu0
    %v1464 = vadd.f32 %v1446, %v1451
    %v1465 = vadd.f32 %v1464, %v1456
    %v1466 = vadd.f32 %v1465, %v1461
    %v1467 = vrot.slane %v1466, 4
    %v1468 = vadd.f32 %v1466, %v1467
    %v1469 = vrot.slane %v1468, 2
    %v1470 = vadd.f32 %v1468, %v1469
    %v1471 = vrot.slane %v1470, 1
    %v1472 = vadd.f32 %v1470, %v1471
    %v1473 = vmul.f32 %v1472, %v161
    %v1474 = vsub.f32 %v1446, %v1473
    %v1475 = vsub.f32 %v1451, %v1473
    %v1476 = vsub.f32 %v1456, %v1473
    %v1477 = vsub.f32 %v1461, %v1473
    %v1478 = vmul.f32 %v1474, %v1474
    %v1479 = vmul.f32 %v1475, %v1475
    %v1480 = vmul.f32 %v1476, %v1476
    %v1481 = vmul.f32 %v1477, %v1477
    %v1482 = vadd.f32 %v1478, %v1479
    %v1483 = vadd.f32 %v1482, %v1480
    %v1484 = vadd.f32 %v1483, %v1481
    %v1485 = vrot.slane %v1484, 4
    %v1486 = vadd.f32 %v1484, %v1485
    %v1487 = vrot.slane %v1486, 2
    %v1488 = vadd.f32 %v1486, %v1487
    %v1489 = vrot.slane %v1488, 1
    %v1490 = vadd.f32 %v1488, %v1489
    %v1491 = vmul.f32 %v1490, %v161
    %v1492 = vadd.f32 %v1491, 1e-05
    %v1493 = vrsqrt.pop %v1492
    %v1494 = vmul.f32 %v1474, %v1493
    %v1495 = vmul.f32 %v1475, %v1493
    %v1496 = vmul.f32 %v1476, %v1493
    %v1497 = vmul.f32 %v1477, %v1493
    %v1498 = vmul.f32 %v1494, %v189
    %v1499 = vmul.f32 %v1495, %v193
    %v1500 = vmul.f32 %v1496, %v197
    %v1501 = vmul.f32 %v1497, %v201
    %v1502 = vadd.f32 %v1498, %v209
    %v1503 = vadd.f32 %v1499, %v213
    %v1504 = vadd.f32 %v1500, %v217
    %v1505 = vadd.f32 %v1501, %v221
    %v1506 = vmax.f32 %v1502, 0.0
    %v1507 = vmax.f32 %v1503, 0.0
    %v1508 = vmax.f32 %v1504, 0.0
    %v1509 = vmax.f32 %v1505, 0.0
    %1510 = vmatprep.subr.mxu0 0.0
    %1511 = vmatpush1.msra.mxu0 %v1506
    %1512 = vmatprep.subr.mxu0 0.0
    %1513 = vmatpush1.msra.mxu0 %v1507
    %1514 = vmatprep.subr.mxu0 0.0
    %1515 = vmatpush1.msra.mxu0 %v1508
    %1516 = vmatprep.subr.mxu0 0.0
    %1517 = vmatpush1.msra.mxu0 %v1509
    %1518 = vmatprep.subr.mxu0 0.0
    %1519 = vmatpush1.msra.mxu0 0.0
    %1520 = vmatprep.subr.mxu0 0.0
    %1521 = vmatpush1.msra.mxu0 0.0
    %1522 = vmatprep.subr.mxu0 0.0
    %1523 = vmatpush1.msra.mxu0 0.0
    %1524 = vmatprep.subr.mxu0 0.0
    %1525 = vmatpush1.msra.mxu0 0.0
    %1526 = vmatprep.subr.mxu0 0.0
    %1527 = vmatpush1.msra.mxu0 0.0
    %1528 = vmatprep.subr.mxu0 0.0
    %1529 = vmatpush1.msra.mxu0 0.0
    %1530 = vmatprep.subr.mxu0 0.0
    %1531 = vmatpush1.msra.mxu0 0.0
    %1532 = vmatprep.subr.mxu0 0.0
    %1533 = vmatpush1.msra.mxu0 0.0
    %1534 = vmatprep.subr.mxu0 0.0
    %1535 = vmatpush1.msra.mxu0 0.0
    %1536 = vmatprep.subr.mxu0 0.0
    %1537 = vmatpush1.msra.mxu0 0.0
    %1538 = vmatprep.subr.mxu0 0.0
    %1539 = vmatpush1.msra.mxu0 0.0
    %1540 = vmatprep.subr.mxu0 0.0
    %1541 = vmatpush1.msra.mxu0 0.0
    %1542 = vmatprep.subr.mxu0 0.0
    %1543 = vmatpush1.msra.mxu0 0.0
    %1544 = vmatprep.subr.mxu0 0.0
    %1545 = vmatpush1.msra.mxu0 0.0
    %1546 = vmatprep.subr.mxu0 0.0
    %1547 = vmatpush1.msra.mxu0 0.0
    %1548 = vmatprep.subr.mxu0 0.0
    %1549 = vmatpush1.msra.mxu0 0.0
    %1550 = vmatprep.subr.mxu0 0.0
    %1551 = vmatpush1.msra.mxu0 0.0
    %1552 = vmatprep.subr.mxu0 0.0
    %1553 = vmatpush1.msra.mxu0 0.0
    %1554 = vmatprep.subr.mxu0 0.0
    %1555 = vmatpush1.msra.mxu0 0.0
    %1556 = vmatprep.subr.mxu0 0.0
    %1557 = vmatpush1.msra.mxu0 0.0
    %1558 = vmatprep.subr.mxu0 0.0
    %1559 = vmatpush1.msra.mxu0 0.0
    %1560 = vmatprep.subr.mxu0 0.0
    %1561 = vmatpush1.msra.mxu0 0.0
    %1562 = vmatprep.subr.mxu0 0.0
    %1563 = vmatpush1.msra.mxu0 0.0
    %1564 = vmatprep.subr.mxu0 0.0
    %1565 = vmatpush1.msra.mxu0 0.0
    %1566 = vmatprep.subr.mxu0 0.0
    %1567 = vmatpush1.msra.mxu0 0.0
    %1568 = vmatprep.subr.mxu0 0.0
    %1569 = vmatpush1.msra.mxu0 0.0
    %1570 = vmatprep.subr.mxu0 0.0
    %1571 = vmatpush1.msra.mxu0 0.0
    %1572 = vmatprep.subr.mxu0 0.0
    %1573 = vmatpush1.msra.mxu0 0.0
    %1574 = vmatprep.mubr.f32.mxu0 0.0
    %1575 = vmatmul.mubr.f32.gmra.mrb[0].mxu0 %v243
    %v1576 = vpop.f32.mrb[0].mxu0
    %v1577 = vadd.f32 %v235, %v1576
    %v1578 = vpop.f32.mrb[0].mxu0
    %1579 = vmatprep.mubr.f32.mxu0 0.0
    %1580 = vmatmul.mubr.f32.gmra.mrb[0].mxu0 %v246
    %v1581 = vpop.f32.mrb[0].mxu0
    %v1582 = vadd.f32 %v239, %v1581
    %v1583 = vpop.f32.mrb[0].mxu0
    %1584 = vdwg.mxu0
    %v1585 = vadd.f32 %v1577, %v1582
    %v1586 = vrot.slane %v1585, 4
    %v1587 = vadd.f32 %v1585, %v1586
    %v1588 = vrot.slane %v1587, 2
    %v1589 = vadd.f32 %v1587, %v1588
    %v1590 = vrot.slane %v1589, 1
    %v1591 = vadd.f32 %v1589, %v1590
    %v1592 = vmul.f32 %v1591, %v330
    %v1593 = vsub.f32 %v1577, %v1592
    %v1594 = vsub.f32 %v1582, %v1592
    %v1595 = vmul.f32 %v1593, %v1593
    %v1596 = vmul.f32 %v1594, %v1594
    %v1597 = vadd.f32 %v1595, %v1596
    %v1598 = vrot.slane %v1597, 4
    %v1599 = vadd.f32 %v1597, %v1598
    %v1600 = vrot.slane %v1599, 2
    %v1601 = vadd.f32 %v1599, %v1600
    %v1602 = vrot.slane %v1601, 1
    %v1603 = vadd.f32 %v1601, %v1602
    %v1604 = vmul.f32 %v1603, %v330
    %v1605 = vadd.f32 %v1604, 1e-05
    %v1606 = vrsqrt.pop %v1605
    %v1607 = vmul.f32 %v1593, %v1606
    %v1608 = vmul.f32 %v1594, %v1606
    %v1609 = vmul.f32 %v1607, %v350
    %v1610 = vmul.f32 %v1608, %v354
    %v1611 = vadd.f32 %v1609, %v360
    %v1612 = vadd.f32 %v1610, %v364
    %v1613 = vmax.f32 %v1611, 0.0
    %v1614 = vmax.f32 %v1612, 0.0
    %v1616 = vlaneseq
    %v1617 = vshrl.u32 %v1616, 7
    %v1618 = vsub.s32 0, %v1617
    %v1619 = vrot.slane %v1376, %v1618
    %v1621 = vmul.f32 %v1613, %v1619
    %v1622 = vmul.f32 %v1614, %v1619
    %vm1623 = vcmp.gt.s32.totalorder %v21, 6
    %v1624 = vsel %vm1623, 1, 0
    %v1625 = vcvt.s32.f32 %v1624
    %s1626 = scalar_lea.vmem %s0, 48
    %v1627 = vld [vmem:[%s1626] sm:$0xff]
    %1628 = vmatprep.subr.mxu0 0.0
    %1629 = vmatpush1.msra.mxu0 %v1627
    %1630 = vmatprep.subr.mxu0 0.0
    %1631 = vmatpush1.msra.mxu0 0.0
    %1632 = vmatprep.subr.mxu0 0.0
    %1633 = vmatpush1.msra.mxu0 0.0
    %1634 = vmatprep.subr.mxu0 0.0
    %1635 = vmatpush1.msra.mxu0 0.0
    %1636 = vmatprep.subr.mxu0 0.0
    %1637 = vmatpush1.msra.mxu0 0.0
    %1638 = vmatprep.subr.mxu0 0.0
    %1639 = vmatpush1.msra.mxu0 0.0
    %1640 = vmatprep.subr.mxu0 0.0
    %1641 = vmatpush1.msra.mxu0 0.0
    %1642 = vmatprep.subr.mxu0 0.0
    %1643 = vmatpush1.msra.mxu0 0.0
    %1644 = vmatprep.subr.mxu0 0.0
    %1645 = vmatpush1.msra.mxu0 0.0
    %1646 = vmatprep.subr.mxu0 0.0
    %1647 = vmatpush1.msra.mxu0 0.0
    %1648 = vmatprep.subr.mxu0 0.0
    %1649 = vmatpush1.msra.mxu0 0.0
    %1650 = vmatprep.subr.mxu0 0.0
    %1651 = vmatpush1.msra.mxu0 0.0
    %1652 = vmatprep.subr.mxu0 0.0
    %1653 = vmatpush1.msra.mxu0 0.0
    %1654 = vmatprep.subr.mxu0 0.0
    %1655 = vmatpush1.msra.mxu0 0.0
    %1656 = vmatprep.subr.mxu0 0.0
    %1657 = vmatpush1.msra.mxu0 0.0
    %1658 = vmatprep.subr.mxu0 0.0
    %1659 = vmatpush1.msra.mxu0 0.0
    %1660 = vmatprep.subr.mxu0 0.0
    %1661 = vmatpush1.msra.mxu0 0.0
    %1662 = vmatprep.subr.mxu0 0.0
    %1663 = vmatpush1.msra.mxu0 0.0
    %1664 = vmatprep.subr.mxu0 0.0
    %1665 = vmatpush1.msra.mxu0 0.0
    %1666 = vmatprep.subr.mxu0 0.0
    %1667 = vmatpush1.msra.mxu0 0.0
    %1668 = vmatprep.subr.mxu0 0.0
    %1669 = vmatpush1.msra.mxu0 0.0
    %1670 = vmatprep.subr.mxu0 0.0
    %1671 = vmatpush1.msra.mxu0 0.0
    %1672 = vmatprep.subr.mxu0 0.0
    %1673 = vmatpush1.msra.mxu0 0.0
    %1674 = vmatprep.subr.mxu0 0.0
    %1675 = vmatpush1.msra.mxu0 0.0
    %1676 = vmatprep.subr.mxu0 0.0
    %1677 = vmatpush1.msra.mxu0 0.0
    %1678 = vmatprep.subr.mxu0 0.0
    %1679 = vmatpush1.msra.mxu0 0.0
    %1680 = vmatprep.subr.mxu0 0.0
    %1681 = vmatpush1.msra.mxu0 0.0
    %1682 = vmatprep.subr.mxu0 0.0
    %1683 = vmatpush1.msra.mxu0 0.0
    %1684 = vmatprep.subr.mxu0 0.0
    %1685 = vmatpush1.msra.mxu0 0.0
    %1686 = vmatprep.subr.mxu0 0.0
    %1687 = vmatpush1.msra.mxu0 0.0
    %1688 = vmatprep.subr.mxu0 0.0
    %1689 = vmatpush1.msra.mxu0 0.0
    %1690 = vmatprep.subr.mxu0 0.0
    %1691 = vmatpush1.msra.mxu0 0.0
    %1692 = vmatprep.mubr.f32.mxu0 0.0
    %1693 = vmatmul.mubr.f32.gmra.mrb[0].mxu0 %v56
    %v1694 = vpop.f32.mrb[0].mxu0
    %v1695 = vadd.f32 %v37, %v1694
    %v1696 = vpop.f32.mrb[0].mxu0
    %1697 = vmatprep.mubr.f32.mxu0 0.0
    %1698 = vmatmul.mubr.f32.gmra.mrb[0].mxu0 %v59
    %v1699 = vpop.f32.mrb[0].mxu0
    %v1700 = vadd.f32 %v42, %v1699
    %v1701 = vpop.f32.mrb[0].mxu0
    %1702 = vmatprep.mubr.f32.mxu0 0.0
    %1703 = vmatmul.mubr.f32.gmra.mrb[0].mxu0 %v62
    %v1704 = vpop.f32.mrb[0].mxu0
    %v1705 = vadd.f32 %v47, %v1704
    %v1706 = vpop.f32.mrb[0].mxu0
    %1707 = vmatprep.mubr.f32.mxu0 0.0
    %1708 = vmatmul.mubr.f32.gmra.mrb[0].mxu0 %v65
    %v1709 = vpop.f32.mrb[0].mxu0
    %v1710 = vadd.f32 %v52, %v1709
    %v1711 = vpop.f32.mrb[0].mxu0
    %1712 = vdwg.mxu0
    %v1713 = vadd.f32 %v1695, %v1700
    %v1714 = vadd.f32 %v1713, %v1705
    %v1715 = vadd.f32 %v1714, %v1710
    %v1716 = vrot.slane %v1715, 4
    %v1717 = vadd.f32 %v1715, %v1716
    %v1718 = vrot.slane %v1717, 2
    %v1719 = vadd.f32 %v1717, %v1718
    %v1720 = vrot.slane %v1719, 1
    %v1721 = vadd.f32 %v1719, %v1720
    %v1722 = vmul.f32 %v1721, %v161
    %v1723 = vsub.f32 %v1695, %v1722
    %v1724 = vsub.f32 %v1700, %v1722
    %v1725 = vsub.f32 %v1705, %v1722
    %v1726 = vsub.f32 %v1710, %v1722
    %v1727 = vmul.f32 %v1723, %v1723
    %v1728 = vmul.f32 %v1724, %v1724
    %v1729 = vmul.f32 %v1725, %v1725
    %v1730 = vmul.f32 %v1726, %v1726
    %v1731 = vadd.f32 %v1727, %v1728
    %v1732 = vadd.f32 %v1731, %v1729
    %v1733 = vadd.f32 %v1732, %v1730
    %v1734 = vrot.slane %v1733, 4
    %v1735 = vadd.f32 %v1733, %v1734
    %v1736 = vrot.slane %v1735, 2
    %v1737 = vadd.f32 %v1735, %v1736
    %v1738 = vrot.slane %v1737, 1
    %v1739 = vadd.f32 %v1737, %v1738
    %v1740 = vmul.f32 %v1739, %v161
    %v1741 = vadd.f32 %v1740, 1e-05
    %v1742 = vrsqrt.pop %v1741
    %v1743 = vmul.f32 %v1723, %v1742
    %v1744 = vmul.f32 %v1724, %v1742
    %v1745 = vmul.f32 %v1725, %v1742
    %v1746 = vmul.f32 %v1726, %v1742
    %v1747 = vmul.f32 %v1743, %v189
    %v1748 = vmul.f32 %v1744, %v193
    %v1749 = vmul.f32 %v1745, %v197
    %v1750 = vmul.f32 %v1746, %v201
    %v1751 = vadd.f32 %v1747, %v209
    %v1752 = vadd.f32 %v1748, %v213
    %v1753 = vadd.f32 %v1749, %v217
    %v1754 = vadd.f32 %v1750, %v221
    %v1755 = vmax.f32 %v1751, 0.0
    %v1756 = vmax.f32 %v1752, 0.0
    %v1757 = vmax.f32 %v1753, 0.0
    %v1758 = vmax.f32 %v1754, 0.0
    %1759 = vmatprep.subr.mxu0 0.0
    %1760 = vmatpush1.msra.mxu0 %v1755
    %1761 = vmatprep.subr.mxu0 0.0
    %1762 = vmatpush1.msra.mxu0 %v1756
    %1763 = vmatprep.subr.mxu0 0.0
    %1764 = vmatpush1.msra.mxu0 %v1757
    %1765 = vmatprep.subr.mxu0 0.0
    %1766 = vmatpush1.msra.mxu0 %v1758
    %1767 = vmatprep.subr.mxu0 0.0
    %1768 = vmatpush1.msra.mxu0 0.0
    %1769 = vmatprep.subr.mxu0 0.0
    %1770 = vmatpush1.msra.mxu0 0.0
    %1771 = vmatprep.subr.mxu0 0.0
    %1772 = vmatpush1.msra.mxu0 0.0
    %1773 = vmatprep.subr.mxu0 0.0
    %1774 = vmatpush1.msra.mxu0 0.0
    %1775 = vmatprep.subr.mxu0 0.0
    %1776 = vmatpush1.msra.mxu0 0.0
    %1777 = vmatprep.subr.mxu0 0.0
    %1778 = vmatpush1.msra.mxu0 0.0
    %1779 = vmatprep.subr.mxu0 0.0
    %1780 = vmatpush1.msra.mxu0 0.0
    %1781 = vmatprep.subr.mxu0 0.0
    %1782 = vmatpush1.msra.mxu0 0.0
    %1783 = vmatprep.subr.mxu0 0.0
    %1784 = vmatpush1.msra.mxu0 0.0
    %1785 = vmatprep.subr.mxu0 0.0
    %1786 = vmatpush1.msra.mxu0 0.0
    %1787 = vmatprep.subr.mxu0 0.0
    %1788 = vmatpush1.msra.mxu0 0.0
    %1789 = vmatprep.subr.mxu0 0.0
    %1790 = vmatpush1.msra.mxu0 0.0
    %1791 = vmatprep.subr.mxu0 0.0
    %1792 = vmatpush1.msra.mxu0 0.0
    %1793 = vmatprep.subr.mxu0 0.0
    %1794 = vmatpush1.msra.mxu0 0.0
    %1795 = vmatprep.subr.mxu0 0.0
    %1796 = vmatpush1.msra.mxu0 0.0
    %1797 = vmatprep.subr.mxu0 0.0
    %1798 = vmatpush1.msra.mxu0 0.0
    %1799 = vmatprep.subr.mxu0 0.0
    %1800 = vmatpush1.msra.mxu0 0.0
    %1801 = vmatprep.subr.mxu0 0.0
    %1802 = vmatpush1.msra.mxu0 0.0
    %1803 = vmatprep.subr.mxu0 0.0
    %1804 = vmatpush1.msra.mxu0 0.0
    %1805 = vmatprep.subr.mxu0 0.0
    %1806 = vmatpush1.msra.mxu0 0.0
    %1807 = vmatprep.subr.mxu0 0.0
    %1808 = vmatpush1.msra.mxu0 0.0
    %1809 = vmatprep.subr.mxu0 0.0
    %1810 = vmatpush1.msra.mxu0 0.0
    %1811 = vmatprep.subr.mxu0 0.0
    %1812 = vmatpush1.msra.mxu0 0.0
    %1813 = vmatprep.subr.mxu0 0.0
    %1814 = vmatpush1.msra.mxu0 0.0
    %1815 = vmatprep.subr.mxu0 0.0
    %1816 = vmatpush1.msra.mxu0 0.0
    %1817 = vmatprep.subr.mxu0 0.0
    %1818 = vmatpush1.msra.mxu0 0.0
    %1819 = vmatprep.subr.mxu0 0.0
    %1820 = vmatpush1.msra.mxu0 0.0
    %1821 = vmatprep.subr.mxu0 0.0
    %1822 = vmatpush1.msra.mxu0 0.0
    %1823 = vmatprep.mubr.f32.mxu0 0.0
    %1824 = vmatmul.mubr.f32.gmra.mrb[0].mxu0 %v243
    %v1825 = vpop.f32.mrb[0].mxu0
    %v1826 = vadd.f32 %v235, %v1825
    %v1827 = vpop.f32.mrb[0].mxu0
    %1828 = vmatprep.mubr.f32.mxu0 0.0
    %1829 = vmatmul.mubr.f32.gmra.mrb[0].mxu0 %v246
    %v1830 = vpop.f32.mrb[0].mxu0
    %v1831 = vadd.f32 %v239, %v1830
    %v1832 = vpop.f32.mrb[0].mxu0
    %1833 = vdwg.mxu0
    %v1834 = vadd.f32 %v1826, %v1831
    %v1835 = vrot.slane %v1834, 4
    %v1836 = vadd.f32 %v1834, %v1835
    %v1837 = vrot.slane %v1836, 2
    %v1838 = vadd.f32 %v1836, %v1837
    %v1839 = vrot.slane %v1838, 1
    %v1840 = vadd.f32 %v1838, %v1839
    %v1841 = vmul.f32 %v1840, %v330
    %v1842 = vsub.f32 %v1826, %v1841
    %v1843 = vsub.f32 %v1831, %v1841
    %v1844 = vmul.f32 %v1842, %v1842
    %v1845 = vmul.f32 %v1843, %v1843
    %v1846 = vadd.f32 %v1844, %v1845
    %v1847 = vrot.slane %v1846, 4
    %v1848 = vadd.f32 %v1846, %v1847
    %v1849 = vrot.slane %v1848, 2
    %v1850 = vadd.f32 %v1848, %v1849
    %v1851 = vrot.slane %v1850, 1
    %v1852 = vadd.f32 %v1850, %v1851
    %v1853 = vmul.f32 %v1852, %v330
    %v1854 = vadd.f32 %v1853, 1e-05
    %v1855 = vrsqrt.pop %v1854
    %v1856 = vmul.f32 %v1842, %v1855
    %v1857 = vmul.f32 %v1843, %v1855
    %v1858 = vmul.f32 %v1856, %v350
    %v1859 = vmul.f32 %v1857, %v354
    %v1860 = vadd.f32 %v1858, %v360
    %v1861 = vadd.f32 %v1859, %v364
    %v1862 = vmax.f32 %v1860, 0.0
    %v1863 = vmax.f32 %v1861, 0.0
    %v1865 = vlaneseq
    %v1866 = vshrl.u32 %v1865, 7
    %v1867 = vsub.s32 0, %v1866
    %v1868 = vrot.slane %v1625, %v1867
    %v1870 = vmul.f32 %v1862, %v1868
    %v1871 = vmul.f32 %v1863, %v1868
    %vm1872 = vcmp.gt.s32.totalorder %v21, 7
    %v1873 = vsel %vm1872, 1, 0
    %v1874 = vcvt.s32.f32 %v1873
    %s1875 = scalar_lea.vmem %s0, 56
    %v1876 = vld [vmem:[%s1875] sm:$0xff]
    %1877 = vmatprep.subr.mxu0 0.0
    %1878 = vmatpush1.msra.mxu0 %v1876
    %1879 = vmatprep.subr.mxu0 0.0
    %1880 = vmatpush1.msra.mxu0 0.0
    %1881 = vmatprep.subr.mxu0 0.0
    %1882 = vmatpush1.msra.mxu0 0.0
    %1883 = vmatprep.subr.mxu0 0.0
    %1884 = vmatpush1.msra.mxu0 0.0
    %1885 = vmatprep.subr.mxu0 0.0
    %1886 = vmatpush1.msra.mxu0 0.0
    %1887 = vmatprep.subr.mxu0 0.0
    %1888 = vmatpush1.msra.mxu0 0.0
    %1889 = vmatprep.subr.mxu0 0.0
    %1890 = vmatpush1.msra.mxu0 0.0
    %1891 = vmatprep.subr.mxu0 0.0
    %1892 = vmatpush1.msra.mxu0 0.0
    %1893 = vmatprep.subr.mxu0 0.0
    %1894 = vmatpush1.msra.mxu0 0.0
    %1895 = vmatprep.subr.mxu0 0.0
    %1896 = vmatpush1.msra.mxu0 0.0
    %1897 = vmatprep.subr.mxu0 0.0
    %1898 = vmatpush1.msra.mxu0 0.0
    %1899 = vmatprep.subr.mxu0 0.0
    %1900 = vmatpush1.msra.mxu0 0.0
    %1901 = vmatprep.subr.mxu0 0.0
    %1902 = vmatpush1.msra.mxu0 0.0
    %1903 = vmatprep.subr.mxu0 0.0
    %1904 = vmatpush1.msra.mxu0 0.0
    %1905 = vmatprep.subr.mxu0 0.0
    %1906 = vmatpush1.msra.mxu0 0.0
    %1907 = vmatprep.subr.mxu0 0.0
    %1908 = vmatpush1.msra.mxu0 0.0
    %1909 = vmatprep.subr.mxu0 0.0
    %1910 = vmatpush1.msra.mxu0 0.0
    %1911 = vmatprep.subr.mxu0 0.0
    %1912 = vmatpush1.msra.mxu0 0.0
    %1913 = vmatprep.subr.mxu0 0.0
    %1914 = vmatpush1.msra.mxu0 0.0
    %1915 = vmatprep.subr.mxu0 0.0
    %1916 = vmatpush1.msra.mxu0 0.0
    %1917 = vmatprep.subr.mxu0 0.0
    %1918 = vmatpush1.msra.mxu0 0.0
    %1919 = vmatprep.subr.mxu0 0.0
    %1920 = vmatpush1.msra.mxu0 0.0
    %1921 = vmatprep.subr.mxu0 0.0
    %1922 = vmatpush1.msra.mxu0 0.0
    %1923 = vmatprep.subr.mxu0 0.0
    %1924 = vmatpush1.msra.mxu0 0.0
    %1925 = vmatprep.subr.mxu0 0.0
    %1926 = vmatpush1.msra.mxu0 0.0
    %1927 = vmatprep.subr.mxu0 0.0
    %1928 = vmatpush1.msra.mxu0 0.0
    %1929 = vmatprep.subr.mxu0 0.0
    %1930 = vmatpush1.msra.mxu0 0.0
    %1931 = vmatprep.subr.mxu0 0.0
    %1932 = vmatpush1.msra.mxu0 0.0
    %1933 = vmatprep.subr.mxu0 0.0
    %1934 = vmatpush1.msra.mxu0 0.0
    %1935 = vmatprep.subr.mxu0 0.0
    %1936 = vmatpush1.msra.mxu0 0.0
    %1937 = vmatprep.subr.mxu0 0.0
    %1938 = vmatpush1.msra.mxu0 0.0
    %1939 = vmatprep.subr.mxu0 0.0
    %1940 = vmatpush1.msra.mxu0 0.0
    %1941 = vmatprep.mubr.f32.mxu0 0.0
    %1942 = vmatmul.mubr.f32.gmra.mrb[0].mxu0 %v56
    %v1943 = vpop.f32.mrb[0].mxu0
    %v1944 = vadd.f32 %v37, %v1943
    %v1945 = vpop.f32.mrb[0].mxu0
    %1946 = vmatprep.mubr.f32.mxu0 0.0
    %1947 = vmatmul.mubr.f32.gmra.mrb[0].mxu0 %v59
    %v1948 = vpop.f32.mrb[0].mxu0
    %v1949 = vadd.f32 %v42, %v1948
    %v1950 = vpop.f32.mrb[0].mxu0
    %1951 = vmatprep.mubr.f32.mxu0 0.0
    %1952 = vmatmul.mubr.f32.gmra.mrb[0].mxu0 %v62
    %v1953 = vpop.f32.mrb[0].mxu0
    %v1954 = vadd.f32 %v47, %v1953
    %v1955 = vpop.f32.mrb[0].mxu0
    %1956 = vmatprep.mubr.f32.mxu0 0.0
    %1957 = vmatmul.mubr.f32.gmra.mrb[0].mxu0 %v65
    %v1958 = vpop.f32.mrb[0].mxu0
    %v1959 = vadd.f32 %v52, %v1958
    %v1960 = vpop.f32.mrb[0].mxu0
    %1961 = vdwg.mxu0
    %v1962 = vadd.f32 %v1944, %v1949
    %v1963 = vadd.f32 %v1962, %v1954
    %v1964 = vadd.f32 %v1963, %v1959
    %v1965 = vrot.slane %v1964, 4
    %v1966 = vadd.f32 %v1964, %v1965
    %v1967 = vrot.slane %v1966, 2
    %v1968 = vadd.f32 %v1966, %v1967
    %v1969 = vrot.slane %v1968, 1
    %v1970 = vadd.f32 %v1968, %v1969
    %v1971 = vmul.f32 %v1970, %v161
    %v1972 = vsub.f32 %v1944, %v1971
    %v1973 = vsub.f32 %v1949, %v1971
    %v1974 = vsub.f32 %v1954, %v1971
    %v1975 = vsub.f32 %v1959, %v1971
    %v1976 = vmul.f32 %v1972, %v1972
    %v1977 = vmul.f32 %v1973, %v1973
    %v1978 = vmul.f32 %v1974, %v1974
    %v1979 = vmul.f32 %v1975, %v1975
    %v1980 = vadd.f32 %v1976, %v1977
    %v1981 = vadd.f32 %v1980, %v1978
    %v1982 = vadd.f32 %v1981, %v1979
    %v1983 = vrot.slane %v1982, 4
    %v1984 = vadd.f32 %v1982, %v1983
    %v1985 = vrot.slane %v1984, 2
    %v1986 = vadd.f32 %v1984, %v1985
    %v1987 = vrot.slane %v1986, 1
    %v1988 = vadd.f32 %v1986, %v1987
    %v1989 = vmul.f32 %v1988, %v161
    %v1990 = vadd.f32 %v1989, 1e-05
    %v1991 = vrsqrt.pop %v1990
    %v1992 = vmul.f32 %v1972, %v1991
    %v1993 = vmul.f32 %v1973, %v1991
    %v1994 = vmul.f32 %v1974, %v1991
    %v1995 = vmul.f32 %v1975, %v1991
    %v1996 = vmul.f32 %v1992, %v189
    %v1997 = vmul.f32 %v1993, %v193
    %v1998 = vmul.f32 %v1994, %v197
    %v1999 = vmul.f32 %v1995, %v201
    %v2000 = vadd.f32 %v1996, %v209
    %v2001 = vadd.f32 %v1997, %v213
    %v2002 = vadd.f32 %v1998, %v217
    %v2003 = vadd.f32 %v1999, %v221
    %v2004 = vmax.f32 %v2000, 0.0
    %v2005 = vmax.f32 %v2001, 0.0
    %v2006 = vmax.f32 %v2002, 0.0
    %v2007 = vmax.f32 %v2003, 0.0
    %2008 = vmatprep.subr.mxu0 0.0
    %2009 = vmatpush1.msra.mxu0 %v2004
    %2010 = vmatprep.subr.mxu0 0.0
    %2011 = vmatpush1.msra.mxu0 %v2005
    %2012 = vmatprep.subr.mxu0 0.0
    %2013 = vmatpush1.msra.mxu0 %v2006
    %2014 = vmatprep.subr.mxu0 0.0
    %2015 = vmatpush1.msra.mxu0 %v2007
    %2016 = vmatprep.subr.mxu0 0.0
    %2017 = vmatpush1.msra.mxu0 0.0
    %2018 = vmatprep.subr.mxu0 0.0
    %2019 = vmatpush1.msra.mxu0 0.0
    %2020 = vmatprep.subr.mxu0 0.0
    %2021 = vmatpush1.msra.mxu0 0.0
    %2022 = vmatprep.subr.mxu0 0.0
    %2023 = vmatpush1.msra.mxu0 0.0
    %2024 = vmatprep.subr.mxu0 0.0
    %2025 = vmatpush1.msra.mxu0 0.0
    %2026 = vmatprep.subr.mxu0 0.0
    %2027 = vmatpush1.msra.mxu0 0.0
    %2028 = vmatprep.subr.mxu0 0.0
    %2029 = vmatpush1.msra.mxu0 0.0
    %2030 = vmatprep.subr.mxu0 0.0
    %2031 = vmatpush1.msra.mxu0 0.0
    %2032 = vmatprep.subr.mxu0 0.0
    %2033 = vmatpush1.msra.mxu0 0.0
    %2034 = vmatprep.subr.mxu0 0.0
    %2035 = vmatpush1.msra.mxu0 0.0
    %2036 = vmatprep.subr.mxu0 0.0
    %2037 = vmatpush1.msra.mxu0 0.0
    %2038 = vmatprep.subr.mxu0 0.0
    %2039 = vmatpush1.msra.mxu0 0.0
    %2040 = vmatprep.subr.mxu0 0.0
    %2041 = vmatpush1.msra.mxu0 0.0
    %2042 = vmatprep.subr.mxu0 0.0
    %2043 = vmatpush1.msra.mxu0 0.0
    %2044 = vmatprep.subr.mxu0 0.0
    %2045 = vmatpush1.msra.mxu0 0.0
    %2046 = vmatprep.subr.mxu0 0.0
    %2047 = vmatpush1.msra.mxu0 0.0
    %2048 = vmatprep.subr.mxu0 0.0
    %2049 = vmatpush1.msra.mxu0 0.0
    %2050 = vmatprep.subr.mxu0 0.0
    %2051 = vmatpush1.msra.mxu0 0.0
    %2052 = vmatprep.subr.mxu0 0.0
    %2053 = vmatpush1.msra.mxu0 0.0
    %2054 = vmatprep.subr.mxu0 0.0
    %2055 = vmatpush1.msra.mxu0 0.0
    %2056 = vmatprep.subr.mxu0 0.0
    %2057 = vmatpush1.msra.mxu0 0.0
    %2058 = vmatprep.subr.mxu0 0.0
    %2059 = vmatpush1.msra.mxu0 0.0
    %2060 = vmatprep.subr.mxu0 0.0
    %2061 = vmatpush1.msra.mxu0 0.0
    %2062 = vmatprep.subr.mxu0 0.0
    %2063 = vmatpush1.msra.mxu0 0.0
    %2064 = vmatprep.subr.mxu0 0.0
    %2065 = vmatpush1.msra.mxu0 0.0
    %2066 = vmatprep.subr.mxu0 0.0
    %2067 = vmatpush1.msra.mxu0 0.0
    %2068 = vmatprep.subr.mxu0 0.0
    %2069 = vmatpush1.msra.mxu0 0.0
    %2070 = vmatprep.subr.mxu0 0.0
    %2071 = vmatpush1.msra.mxu0 0.0
    %2072 = vmatprep.mubr.f32.mxu0 0.0
    %2073 = vmatmul.mubr.f32.gmra.mrb[0].mxu0 %v243
    %v2074 = vpop.f32.mrb[0].mxu0
    %v2075 = vadd.f32 %v235, %v2074
    %v2076 = vpop.f32.mrb[0].mxu0
    %2077 = vmatprep.mubr.f32.mxu0 0.0
    %2078 = vmatmul.mubr.f32.gmra.mrb[0].mxu0 %v246
    %v2079 = vpop.f32.mrb[0].mxu0
    %v2080 = vadd.f32 %v239, %v2079
    %v2081 = vpop.f32.mrb[0].mxu0
    %2082 = vdwg.mxu0
    %v2083 = vadd.f32 %v2075, %v2080
    %v2084 = vrot.slane %v2083, 4
    %v2085 = vadd.f32 %v2083, %v2084
    %v2086 = vrot.slane %v2085, 2
    %v2087 = vadd.f32 %v2085, %v2086
    %v2088 = vrot.slane %v2087, 1
    %v2089 = vadd.f32 %v2087, %v2088
    %v2090 = vmul.f32 %v2089, %v330
    %v2091 = vsub.f32 %v2075, %v2090
    %v2092 = vsub.f32 %v2080, %v2090
    %v2093 = vmul.f32 %v2091, %v2091
    %v2094 = vmul.f32 %v2092, %v2092
    %v2095 = vadd.f32 %v2093, %v2094
    %v2096 = vrot.slane %v2095, 4
    %v2097 = vadd.f32 %v2095, %v2096
    %v2098 = vrot.slane %v2097, 2
    %v2099 = vadd.f32 %v2097, %v2098
    %v2100 = vrot.slane %v2099, 1
    %v2101 = vadd.f32 %v2099, %v2100
    %v2102 = vmul.f32 %v2101, %v330
    %v2103 = vadd.f32 %v2102, 1e-05
    %v2104 = vrsqrt.pop %v2103
    %v2105 = vmul.f32 %v2091, %v2104
    %v2106 = vmul.f32 %v2092, %v2104
    %v2107 = vmul.f32 %v2105, %v350
    %v2108 = vmul.f32 %v2106, %v354
    %v2109 = vadd.f32 %v2107, %v360
    %v2110 = vadd.f32 %v2108, %v364
    %v2111 = vmax.f32 %v2109, 0.0
    %v2112 = vmax.f32 %v2110, 0.0
    %v2114 = vlaneseq
    %v2115 = vshrl.u32 %v2114, 7
    %v2116 = vsub.s32 0, %v2115
    %v2117 = vrot.slane %v1874, %v2116
    %v2119 = vmul.f32 %v2111, %v2117
    %v2120 = vmul.f32 %v2112, %v2117
    %vm2121 = vcmp.gt.s32.totalorder %v21, 8
    %v2122 = vsel %vm2121, 1, 0
    %v2123 = vcvt.s32.f32 %v2122
    %s2124 = scalar_lea.vmem %s0, 64
    %v2125 = vld [vmem:[%s2124] sm:$0xff]
    %2126 = vmatprep.subr.mxu0 0.0
    %2127 = vmatpush1.msra.mxu0 %v2125
    %2128 = vmatprep.subr.mxu0 0.0
    %2129 = vmatpush1.msra.mxu0 0.0
    %2130 = vmatprep.subr.mxu0 0.0
    %2131 = vmatpush1.msra.mxu0 0.0
    %2132 = vmatprep.subr.mxu0 0.0
    %2133 = vmatpush1.msra.mxu0 0.0
    %2134 = vmatprep.subr.mxu0 0.0
    %2135 = vmatpush1.msra.mxu0 0.0
    %2136 = vmatprep.subr.mxu0 0.0
    %2137 = vmatpush1.msra.mxu0 0.0
    %2138 = vmatprep.subr.mxu0 0.0
    %2139 = vmatpush1.msra.mxu0 0.0
    %2140 = vmatprep.subr.mxu0 0.0
    %2141 = vmatpush1.msra.mxu0 0.0
    %2142 = vmatprep.subr.mxu0 0.0
    %2143 = vmatpush1.msra.mxu0 0.0
    %2144 = vmatprep.subr.mxu0 0.0
    %2145 = vmatpush1.msra.mxu0 0.0
    %2146 = vmatprep.subr.mxu0 0.0
    %2147 = vmatpush1.msra.mxu0 0.0
    %2148 = vmatprep.subr.mxu0 0.0
    %2149 = vmatpush1.msra.mxu0 0.0
    %2150 = vmatprep.subr.mxu0 0.0
    %2151 = vmatpush1.msra.mxu0 0.0
    %2152 = vmatprep.subr.mxu0 0.0
    %2153 = vmatpush1.msra.mxu0 0.0
    %2154 = vmatprep.subr.mxu0 0.0
    %2155 = vmatpush1.msra.mxu0 0.0
    %2156 = vmatprep.subr.mxu0 0.0
    %2157 = vmatpush1.msra.mxu0 0.0
    %2158 = vmatprep.subr.mxu0 0.0
    %2159 = vmatpush1.msra.mxu0 0.0
    %2160 = vmatprep.subr.mxu0 0.0
    %2161 = vmatpush1.msra.mxu0 0.0
    %2162 = vmatprep.subr.mxu0 0.0
    %2163 = vmatpush1.msra.mxu0 0.0
    %2164 = vmatprep.subr.mxu0 0.0
    %2165 = vmatpush1.msra.mxu0 0.0
    %2166 = vmatprep.subr.mxu0 0.0
    %2167 = vmatpush1.msra.mxu0 0.0
    %2168 = vmatprep.subr.mxu0 0.0
    %2169 = vmatpush1.msra.mxu0 0.0
    %2170 = vmatprep.subr.mxu0 0.0
    %2171 = vmatpush1.msra.mxu0 0.0
    %2172 = vmatprep.subr.mxu0 0.0
    %2173 = vmatpush1.msra.mxu0 0.0
    %2174 = vmatprep.subr.mxu0 0.0
    %2175 = vmatpush1.msra.mxu0 0.0
    %2176 = vmatprep.subr.mxu0 0.0
    %2177 = vmatpush1.msra.mxu0 0.0
    %2178 = vmatprep.subr.mxu0 0.0
    %2179 = vmatpush1.msra.mxu0 0.0
    %2180 = vmatprep.subr.mxu0 0.0
    %2181 = vmatpush1.msra.mxu0 0.0
    %2182 = vmatprep.subr.mxu0 0.0
    %2183 = vmatpush1.msra.mxu0 0.0
    %2184 = vmatprep.subr.mxu0 0.0
    %2185 = vmatpush1.msra.mxu0 0.0
    %2186 = vmatprep.subr.mxu0 0.0
    %2187 = vmatpush1.msra.mxu0 0.0
    %2188 = vmatprep.subr.mxu0 0.0
    %2189 = vmatpush1.msra.mxu0 0.0
    %2190 = vmatprep.mubr.f32.mxu0 0.0
    %2191 = vmatmul.mubr.f32.gmra.mrb[0].mxu0 %v56
    %v2192 = vpop.f32.mrb[0].mxu0
    %v2193 = vadd.f32 %v37, %v2192
    %v2194 = vpop.f32.mrb[0].mxu0
    %2195 = vmatprep.mubr.f32.mxu0 0.0
    %2196 = vmatmul.mubr.f32.gmra.mrb[0].mxu0 %v59
    %v2197 = vpop.f32.mrb[0].mxu0
    %v2198 = vadd.f32 %v42, %v2197
    %v2199 = vpop.f32.mrb[0].mxu0
    %2200 = vmatprep.mubr.f32.mxu0 0.0
    %2201 = vmatmul.mubr.f32.gmra.mrb[0].mxu0 %v62
    %v2202 = vpop.f32.mrb[0].mxu0
    %v2203 = vadd.f32 %v47, %v2202
    %v2204 = vpop.f32.mrb[0].mxu0
    %2205 = vmatprep.mubr.f32.mxu0 0.0
    %2206 = vmatmul.mubr.f32.gmra.mrb[0].mxu0 %v65
    %v2207 = vpop.f32.mrb[0].mxu0
    %v2208 = vadd.f32 %v52, %v2207
    %v2209 = vpop.f32.mrb[0].mxu0
    %2210 = vdwg.mxu0
    %v2211 = vadd.f32 %v2193, %v2198
    %v2212 = vadd.f32 %v2211, %v2203
    %v2213 = vadd.f32 %v2212, %v2208
    %v2214 = vrot.slane %v2213, 4
    %v2215 = vadd.f32 %v2213, %v2214
    %v2216 = vrot.slane %v2215, 2
    %v2217 = vadd.f32 %v2215, %v2216
    %v2218 = vrot.slane %v2217, 1
    %v2219 = vadd.f32 %v2217, %v2218
    %v2220 = vmul.f32 %v2219, %v161
    %v2221 = vsub.f32 %v2193, %v2220
    %v2222 = vsub.f32 %v2198, %v2220
    %v2223 = vsub.f32 %v2203, %v2220
    %v2224 = vsub.f32 %v2208, %v2220
    %v2225 = vmul.f32 %v2221, %v2221
    %v2226 = vmul.f32 %v2222, %v2222
    %v2227 = vmul.f32 %v2223, %v2223
    %v2228 = vmul.f32 %v2224, %v2224
    %v2229 = vadd.f32 %v2225, %v2226
    %v2230 = vadd.f32 %v2229, %v2227
    %v2231 = vadd.f32 %v2230, %v2228
    %v2232 = vrot.slane %v2231, 4
    %v2233 = vadd.f32 %v2231, %v2232
    %v2234 = vrot.slane %v2233, 2
    %v2235 = vadd.f32 %v2233, %v2234
    %v2236 = vrot.slane %v2235, 1
    %v2237 = vadd.f32 %v2235, %v2236
    %v2238 = vmul.f32 %v2237, %v161
    %v2239 = vadd.f32 %v2238, 1e-05
    %v2240 = vrsqrt.pop %v2239
    %v2241 = vmul.f32 %v2221, %v2240
    %v2242 = vmul.f32 %v2222, %v2240
    %v2243 = vmul.f32 %v2223, %v2240
    %v2244 = vmul.f32 %v2224, %v2240
    %v2245 = vmul.f32 %v2241, %v189
    %v2246 = vmul.f32 %v2242, %v193
    %v2247 = vmul.f32 %v2243, %v197
    %v2248 = vmul.f32 %v2244, %v201
    %v2249 = vadd.f32 %v2245, %v209
    %v2250 = vadd.f32 %v2246, %v213
    %v2251 = vadd.f32 %v2247, %v217
    %v2252 = vadd.f32 %v2248, %v221
    %v2253 = vmax.f32 %v2249, 0.0
    %v2254 = vmax.f32 %v2250, 0.0
    %v2255 = vmax.f32 %v2251, 0.0
    %v2256 = vmax.f32 %v2252, 0.0
    %2257 = vmatprep.subr.mxu0 0.0
    %2258 = vmatpush1.msra.mxu0 %v2253
    %2259 = vmatprep.subr.mxu0 0.0
    %2260 = vmatpush1.msra.mxu0 %v2254
    %2261 = vmatprep.subr.mxu0 0.0
    %2262 = vmatpush1.msra.mxu0 %v2255
    %2263 = vmatprep.subr.mxu0 0.0
    %2264 = vmatpush1.msra.mxu0 %v2256
    %2265 = vmatprep.subr.mxu0 0.0
    %2266 = vmatpush1.msra.mxu0 0.0
    %2267 = vmatprep.subr.mxu0 0.0
    %2268 = vmatpush1.msra.mxu0 0.0
    %2269 = vmatprep.subr.mxu0 0.0
    %2270 = vmatpush1.msra.mxu0 0.0
    %2271 = vmatprep.subr.mxu0 0.0
    %2272 = vmatpush1.msra.mxu0 0.0
    %2273 = vmatprep.subr.mxu0 0.0
    %2274 = vmatpush1.msra.mxu0 0.0
    %2275 = vmatprep.subr.mxu0 0.0
    %2276 = vmatpush1.msra.mxu0 0.0
    %2277 = vmatprep.subr.mxu0 0.0
    %2278 = vmatpush1.msra.mxu0 0.0
    %2279 = vmatprep.subr.mxu0 0.0
    %2280 = vmatpush1.msra.mxu0 0.0
    %2281 = vmatprep.subr.mxu0 0.0
    %2282 = vmatpush1.msra.mxu0 0.0
    %2283 = vmatprep.subr.mxu0 0.0
    %2284 = vmatpush1.msra.mxu0 0.0
    %2285 = vmatprep.subr.mxu0 0.0
    %2286 = vmatpush1.msra.mxu0 0.0
    %2287 = vmatprep.subr.mxu0 0.0
    %2288 = vmatpush1.msra.mxu0 0.0
    %2289 = vmatprep.subr.mxu0 0.0
    %2290 = vmatpush1.msra.mxu0 0.0
    %2291 = vmatprep.subr.mxu0 0.0
    %2292 = vmatpush1.msra.mxu0 0.0
    %2293 = vmatprep.subr.mxu0 0.0
    %2294 = vmatpush1.msra.mxu0 0.0
    %2295 = vmatprep.subr.mxu0 0.0
    %2296 = vmatpush1.msra.mxu0 0.0
    %2297 = vmatprep.subr.mxu0 0.0
    %2298 = vmatpush1.msra.mxu0 0.0
    %2299 = vmatprep.subr.mxu0 0.0
    %2300 = vmatpush1.msra.mxu0 0.0
    %2301 = vmatprep.subr.mxu0 0.0
    %2302 = vmatpush1.msra.mxu0 0.0
    %2303 = vmatprep.subr.mxu0 0.0
    %2304 = vmatpush1.msra.mxu0 0.0
    %2305 = vmatprep.subr.mxu0 0.0
    %2306 = vmatpush1.msra.mxu0 0.0
    %2307 = vmatprep.subr.mxu0 0.0
    %2308 = vmatpush1.msra.mxu0 0.0
    %2309 = vmatprep.subr.mxu0 0.0
    %2310 = vmatpush1.msra.mxu0 0.0
    %2311 = vmatprep.subr.mxu0 0.0
    %2312 = vmatpush1.msra.mxu0 0.0
    %2313 = vmatprep.subr.mxu0 0.0
    %2314 = vmatpush1.msra.mxu0 0.0
    %2315 = vmatprep.subr.mxu0 0.0
    %2316 = vmatpush1.msra.mxu0 0.0
    %2317 = vmatprep.subr.mxu0 0.0
    %2318 = vmatpush1.msra.mxu0 0.0
    %2319 = vmatprep.subr.mxu0 0.0
    %2320 = vmatpush1.msra.mxu0 0.0
    %2321 = vmatprep.mubr.f32.mxu0 0.0
    %2322 = vmatmul.mubr.f32.gmra.mrb[0].mxu0 %v243
    %v2323 = vpop.f32.mrb[0].mxu0
    %v2324 = vadd.f32 %v235, %v2323
    %v2325 = vpop.f32.mrb[0].mxu0
    %2326 = vmatprep.mubr.f32.mxu0 0.0
    %2327 = vmatmul.mubr.f32.gmra.mrb[0].mxu0 %v246
    %v2328 = vpop.f32.mrb[0].mxu0
    %v2329 = vadd.f32 %v239, %v2328
    %v2330 = vpop.f32.mrb[0].mxu0
    %2331 = vdwg.mxu0
    %v2332 = vadd.f32 %v2324, %v2329
    %v2333 = vrot.slane %v2332, 4
    %v2334 = vadd.f32 %v2332, %v2333
    %v2335 = vrot.slane %v2334, 2
    %v2336 = vadd.f32 %v2334, %v2335
    %v2337 = vrot.slane %v2336, 1
    %v2338 = vadd.f32 %v2336, %v2337
    %v2339 = vmul.f32 %v2338, %v330
    %v2340 = vsub.f32 %v2324, %v2339
    %v2341 = vsub.f32 %v2329, %v2339
    %v2342 = vmul.f32 %v2340, %v2340
    %v2343 = vmul.f32 %v2341, %v2341
    %v2344 = vadd.f32 %v2342, %v2343
    %v2345 = vrot.slane %v2344, 4
    %v2346 = vadd.f32 %v2344, %v2345
    %v2347 = vrot.slane %v2346, 2
    %v2348 = vadd.f32 %v2346, %v2347
    %v2349 = vrot.slane %v2348, 1
    %v2350 = vadd.f32 %v2348, %v2349
    %v2351 = vmul.f32 %v2350, %v330
    %v2352 = vadd.f32 %v2351, 1e-05
    %v2353 = vrsqrt.pop %v2352
    %v2354 = vmul.f32 %v2340, %v2353
    %v2355 = vmul.f32 %v2341, %v2353
    %v2356 = vmul.f32 %v2354, %v350
    %v2357 = vmul.f32 %v2355, %v354
    %v2358 = vadd.f32 %v2356, %v360
    %v2359 = vadd.f32 %v2357, %v364
    %v2360 = vmax.f32 %v2358, 0.0
    %v2361 = vmax.f32 %v2359, 0.0
    %v2363 = vlaneseq
    %v2364 = vshrl.u32 %v2363, 7
    %v2365 = vsub.s32 0, %v2364
    %v2366 = vrot.slane %v2123, %v2365
    %v2368 = vmul.f32 %v2360, %v2366
    %v2369 = vmul.f32 %v2361, %v2366
    %v2370 = vadd.f32 %v376, %v625
    %v2371 = vadd.f32 %v377, %v626
    %v2372 = vadd.f32 %v874, %v1123
    %v2373 = vadd.f32 %v875, %v1124
    %v2374 = vadd.f32 %v1372, %v1621
    %v2375 = vadd.f32 %v1373, %v1622
    %v2376 = vadd.f32 %v1870, %v2119
    %v2377 = vadd.f32 %v1871, %v2120
    %v2378 = vadd.f32 %v2370, %v2372
    %v2379 = vadd.f32 %v2371, %v2373
    %v2380 = vadd.f32 %v2374, %v2376
    %v2381 = vadd.f32 %v2375, %v2377
    %v2382 = vadd.f32 %v2378, %v2380
    %v2383 = vadd.f32 %v2379, %v2381
    %v2384 = vadd.f32 %v2382, %v2368
    %v2385 = vadd.f32 %v2383, %v2369
    %2386 = vst [vmem:[#allocation2] sm:$0xff] %v2384
    %2387 = vst [vmem:[#allocation2 + $0x8] sm:$0xff] %v2385
    // Predicated region
    $region22: #{tpu_custom_call.1} parent=1 // pred_check
      _
    $region23: #{tpu_custom_call.1} parent=1 // pred_check_branch
      %2389 = sbr.rel (0) target = $region25
    $region24: #{tpu_custom_call.1} parent=1 // pred_region
      %s2391 = ssub.s32 256, 256
      %2392 = vsyncadd [#allocation3], %s2391
      %s2393 = sshll.u32 [#allocation2], 4
      %s2394 = int_to_ptr.vmem [resolvable:$true] %s2393
      %2399 = dma.vmem_to_hbm [thread:$0]  %s2394, 256, %s5, [#allocation3], 128, 128, 8
    $region25: #{tpu_custom_call.1} parent=1 // pred_fallthru
      _
    // Predicated region
    $region26: #{tpu_custom_call.1} parent=1 // pred_check
      _
    $region27: #{tpu_custom_call.1} parent=1 // pred_check_branch
      %2401 = sbr.rel (0) target = $region29
    $region28: #{tpu_custom_call.1} parent=1 // pred_region
      %2402 = dma.done [#allocation3], 256
    $region29: #{tpu_custom_call.1} parent=1 // pred_fallthru
      _
    %2403 = vsyncpa [#allocation3], 1

</llo_original>
